<compile_context>
chip_gen: v7x
topology: tpu7x:2x2x1
jax: 0.10.0
libtpu: 0.0.40
codegen_flags: <defaults>
</compile_context>

<pallas_src>
import math
import jax
import jax.numpy as jnp
from jax import lax
from jax.experimental import pallas as pl
from jax.experimental.pallas import tpu as pltpu


def _round_up(a: int, m: int) -> int:
    return (a + m - 1) // m * m


def build_encoder_kernel(n_fc, P, std):
    """Kernel factory.

    Refs:
      fused_ref : [tb, P]          lane-dense [noise | x | c | 0 ... | 1]
      wx_ref    : [P, L*P]         per-layer x/c/bias rows (zero elsewhere)
      wr_ref    : [n_fc, P, P]     per-layer res rows (fc layers 1.. and mu head)
      out_ref   : [tb, 2*P]        [ z_full | mu_full ]
    Zero-padded weight rows/columns guarantee that padded lanes of `res` and of
    the outputs are exactly zero, so no masking is ever needed.
    """
    hi = lax.Precision.HIGHEST

    def kernel(fused_ref, wx_ref, wr_ref, out_ref):
        fused = fused_ref[...]

        # One wide matmul: x-part (+ layer-0 c-part + biases) of ALL layers.
        xb = jnp.dot(fused, wx_ref[...],
                     preferred_element_type=jnp.float32, precision=hi)

        # Layer 0: everything was folded into the fused matmul.
        res = jnp.maximum(xb[:, 0:P], 0.0)

        # Layers 1..n_fc-1: pre = xb-block + res @ Wres ; res stays in vregs.
        for l in range(1, n_fc):
            pre = xb[:, l * P:(l + 1) * P] + jnp.dot(
                res, wr_ref[l - 1],
                preferred_element_type=jnp.float32, precision=hi)
            res = jnp.maximum(pre, 0.0)

        # mu head (last slab entry).
        mu_full = xb[:, n_fc * P:(n_fc + 1) * P] + jnp.dot(
            res, wr_ref[n_fc - 1],
            preferred_element_type=jnp.float32, precision=hi)

        # Reparameterize: noise sits in lanes [0, output_size) of `fused`, which
        # align with the mu lanes; lanes beyond output_size are finite junk and
        # are sliced off in the wrapper.
        z_full = mu_full + fused * std

        # Lane-dense, unmasked stores (two full 128-lane tiles).
        out_ref[:, 0:P] = z_full.astype(out_ref.dtype)
        out_ref[:, P:2 * P] = mu_full.astype(out_ref.dtype)

    return kernel


def init_linear(key, fan_in, fan_out):
    """PyTorch-style (kaiming-uniform) Linear init, stored as (in, out)."""
    kw, kb = jax.random.split(key)
    bound = 1.0 / math.sqrt(fan_in)
    w = jax.random.uniform(kw, (fan_in, fan_out), jnp.float32, -bound, bound)
    b = jax.random.uniform(kb, (1, fan_out), jnp.float32, -bound, bound)
    return w, b


def make_params(key, input_size, condition_size, hidden_size, output_size,
                hidden_layer_num):
    """Per-layer (W[in,out], b[1,out]) matching ConditionalEncoder.__init__.
    Last entry is the mu head."""
    keys = jax.random.split(key, hidden_layer_num + 2)
    layers = [init_linear(keys[0], input_size + condition_size, hidden_size)]
    for i in range(hidden_layer_num):
        layers.append(init_linear(keys[1 + i], input_size + hidden_size,
                                  hidden_size))
    layers.append(init_linear(keys[-1], input_size + hidden_size, output_size))
    return layers


def pack_params(layers, input_size, condition_size, P, x_off, c_off, bias_lane):
    """Split every Linear into its x-part (hoisted, + bias, + layer-0 c-part)
    and its res-part, zero-padded to full 128-lane tiles."""
    L = len(layers)
    # Fused-input slab: [P, L*P].
    wx = jnp.zeros((P, L * P), jnp.float32)
    for l, (w, b) in enumerate(layers):
        n_out = w.shape[1]
        col = l * P
        wx = wx.at[x_off:x_off + input_size, col:col + n_out].set(w[:input_size])
        wx = wx.at[bias_lane, col:col + n_out].set(b[0])
        if l == 0:
            # Layer 0's res input is c -> fold it into the fused matmul too.
            wx = wx.at[c_off:c_off + condition_size, col:col + n_out].set(
                w[input_size:])
    # res-part slab for fc layers 1.. and the mu head: [L-1, P, P].
    wrs = []
    for l in range(1, L):
        w, _ = layers[l]
        k_res = w.shape[0] - input_size      # hidden_size
        n_out = w.shape[1]
        wr = jnp.zeros((P, P), jnp.float32).at[:k_res, :n_out].set(w[input_size:])
        wrs.append(wr)
    return wx, jnp.stack(wrs)


def conditional_encoder_forward(x, c, noise, layers, var, tb=None):
    B, input_size = x.shape
    _, condition_size = c.shape
    _, output_size = noise.shape
    L = len(layers)          # fc layers + mu head
    n_fc = L - 1
    hidden_size = layers[0][0].shape[1]

    # Single lane-dense width for inputs, hidden activations and outputs.
    P = _round_up(max(input_size + condition_size + output_size + 1,
                      hidden_size, output_size), 128)
    noise_off = 0
    x_off = output_size
    c_off = output_size + input_size
    bias_lane = P - 1

    wx_slab, wr_slab = pack_params(layers, input_size, condition_size, P,
                                   x_off, c_off, bias_lane)

    # Batch tile: big tiles amortize the ~0.35us/step overhead; keep >=2 grid
    # steps for moderate batches so v7x's two TensorCores both get work.
    if tb is None:
        if B > 512:
            tb = 512
        elif B >= 64:
            tb = _round_up(-(-B // 2), 8)
        else:
            tb = _round_up(max(B, 1), 8)
    tb = _round_up(tb, 8)
    B_pad = _round_up(B, tb)
    grid = (B_pad // tb,)

    # Fused, lane-dense input stream: [ noise | x | c | 0 ... | 1(bias) ].
    fused = jnp.zeros((B_pad, P), jnp.float32)
    fused = fused.at[:B, noise_off:noise_off + output_size].set(
        noise.astype(jnp.float32))
    fused = fused.at[:B, x_off:x_off + input_size].set(x.astype(jnp.float32))
    fused = fused.at[:B, c_off:c_off + condition_size].set(c.astype(jnp.float32))
    fused = fused.at[:, bias_lane].set(1.0)

    kernel = build_encoder_kernel(n_fc, P, std=float(var))

    # Advisory cost estimate for the XLA scheduler.
    flops = 2 * B_pad * P * (L * P) + 2 * B_pad * n_fc * P * P + 4 * B_pad * P
    bytes_accessed = 4 * (B_pad * P + B_pad * 2 * P + P * L * P + n_fc * P * P)
    cost = pl.CostEstimate(flops=flops, transcendentals=0,
                           bytes_accessed=bytes_accessed)

    # Explicit VMEM budget: double-buffered I/O tiles + (double-buffered)
    # grid-invariant weight slabs + in-kernel temporaries, with headroom,
    # clamped well under v7x's 32 MiB default-scoped / 64 MiB physical VMEM.
    io_bytes = 2 * tb * (P + 2 * P) * 4
    w_bytes = 2 * (P * L * P + n_fc * P * P) * 4
    tmp_bytes = tb * (L + 3) * P * 4
    vmem_limit = min(max(8 << 20, 4 * (io_bytes + w_bytes + tmp_bytes)), 32 << 20)

    out = pl.pallas_call(
        kernel,
        grid=grid,
        in_specs=[
            pl.BlockSpec((tb, P), lambda i: (i, 0)),
            pl.BlockSpec((P, L * P), lambda i: (0, 0)),
            pl.BlockSpec((n_fc, P, P), lambda i: (0, 0, 0)),
        ],
        out_specs=pl.BlockSpec((tb, 2 * P), lambda i: (i, 0)),
        out_shape=jax.ShapeDtypeStruct((B_pad, 2 * P), jnp.float32),
        compiler_params=pltpu.CompilerParams(
            dimension_semantics=("parallel",),
            vmem_limit_bytes=int(vmem_limit),
        ),
        cost_estimate=cost,
    )(fused, wx_slab, wr_slab)

    z = out[:B, :output_size]
    mu = out[:B, P:P + output_size]
    return z, mu


def reference_forward(x, c, noise, layers, var):
    """Pure-JAX reference mirroring the PyTorch module."""
    hi = lax.Precision.HIGHEST
    res = c
    for (w, b) in layers[:-1]:
        res = jnp.maximum(
            jnp.dot(jnp.concatenate([x, res], axis=-1), w, precision=hi) + b,
            0.0)
    w, b = layers[-1]
    mu = jnp.dot(jnp.concatenate([x, res], axis=-1), w, precision=hi) + b
    std = math.exp(0.5 * (2.0 * math.log(var)))
    z = mu + noise * std
    return z, mu


if __name__ == "__main__":
    # Hyper-parameters implied by the module's __init__.
    input_size = 16
    condition_size = 8
    hidden_size = 32
    output_size = 16
    hidden_layer_num = 2
    var = 0.3
    B = 16

    key = jax.random.PRNGKey(0)
    k_x, k_c, k_noise, k_params = jax.random.split(key, 4)
    x = jax.random.normal(k_x, (B, input_size), jnp.float32)
    c = jax.random.normal(k_c, (B, condition_size), jnp.float32)
    # TODO(synk): torch.randn_like reparameterization noise is drawn host-side
    # (jax.random) and passed into the kernel rather than sampled in-kernel.
    noise = jax.random.normal(k_noise, (B, output_size), jnp.float32)

    layers = make_params(k_params, input_size, condition_size, hidden_size,
                         output_size, hidden_layer_num)

    z, mu = conditional_encoder_forward(x, c, noise, layers, var)
    z, mu = jax.block_until_ready(z), jax.block_until_ready(mu)

    z_ref, mu_ref = reference_forward(x, c, noise, layers, var)
    assert jnp.allclose(z, z_ref, atol=1e-4, rtol=1e-4)
    assert jnp.allclose(mu, mu_ref, atol=1e-4, rtol=1e-4)

    print("KERNEL_OK")
</pallas_src>

<mosaic_0001>
module attributes {stable_mosaic.version = 11 : i64} {
  func.func @kernel(%arg0: i32, %arg1: memref<16x128xf32, #tpu.memory_space<vmem>>, %arg2: memref<128x512xf32, #tpu.memory_space<vmem>>, %arg3: memref<3x128x128xf32, #tpu.memory_space<vmem>>, %arg4: memref<16x256xf32, #tpu.memory_space<vmem>>) attributes {dimension_semantics = [#tpu.dimension_semantics<parallel>], iteration_bounds = array<i64: 1>, scalar_prefetch = 0 : i64, scratch_operands = 0 : i64, tpu.core_type = #tpu.core_type<tc>, window_params = [{transform_indices = @transform_0, window_bounds = array<i64: 16, 128>}, {pipeline_mode = #tpu.pipeline_mode<synchronous>, transform_indices = @transform_1, window_bounds = array<i64: 128, 512>}, {pipeline_mode = #tpu.pipeline_mode<synchronous>, transform_indices = @transform_2, window_bounds = array<i64: 3, 128, 128>}, {transform_indices = @transform_3, window_bounds = array<i64: 16, 256>}]} {
    %c0 = arith.constant 0 : index
    %c0_0 = arith.constant 0 : index
    %0 = vector.load %arg1[%c0, %c0_0] : memref<16x128xf32, #tpu.memory_space<vmem>>, vector<16x128xf32>
    %c0_1 = arith.constant 0 : index
    %c0_2 = arith.constant 0 : index
    %1 = vector.load %arg2[%c0_1, %c0_2] : memref<128x512xf32, #tpu.memory_space<vmem>>, vector<128x512xf32>
    %cst = arith.constant dense<0.000000e+00> : vector<16x512xf32>
    %2 = tpu.matmul %0, %1, %cst {dimension_numbers = #tpu.dot_dimension_numbers<[1], [0], [0], [1], [0, 0, 1, 1], [], []>, precision = #tpu.contract_precision<fp32>} : vector<16x128xf32>, vector<128x512xf32>, vector<16x512xf32> -> vector<16x512xf32>
    %3 = vector.extract_strided_slice %2 {offsets = [0, 0], sizes = [16, 128], strides = [1, 1]} : vector<16x512xf32> to vector<16x128xf32>
    %cst_3 = arith.constant 0.000000e+00 : f32
    %4 = vector.broadcast %cst_3 : f32 to vector<16x128xf32>
    %5 = arith.maximumf %3, %4 : vector<16x128xf32>
    %6 = vector.extract_strided_slice %2 {offsets = [0, 128], sizes = [16, 128], strides = [1, 1]} : vector<16x512xf32> to vector<16x128xf32>
    %c0_4 = arith.constant 0 : index
    %c0_5 = arith.constant 0 : index
    %c0_6 = arith.constant 0 : index
    %7 = vector.load %arg3[%c0_4, %c0_5, %c0_6] : memref<3x128x128xf32, #tpu.memory_space<vmem>>, vector<1x128x128xf32>
    %8 = vector.shape_cast %7 : vector<1x128x128xf32> to vector<128x128xf32>
    %cst_7 = arith.constant dense<0.000000e+00> : vector<16x128xf32>
    %9 = tpu.matmul %5, %8, %cst_7 {dimension_numbers = #tpu.dot_dimension_numbers<[1], [0], [0], [1], [0, 0, 1, 1], [], []>, precision = #tpu.contract_precision<fp32>} : vector<16x128xf32>, vector<128x128xf32>, vector<16x128xf32> -> vector<16x128xf32>
    %10 = arith.addf %6, %9 : vector<16x128xf32>
    %cst_8 = arith.constant 0.000000e+00 : f32
    %11 = vector.broadcast %cst_8 : f32 to vector<16x128xf32>
    %12 = arith.maximumf %10, %11 : vector<16x128xf32>
    %13 = vector.extract_strided_slice %2 {offsets = [0, 256], sizes = [16, 128], strides = [1, 1]} : vector<16x512xf32> to vector<16x128xf32>
    %c1 = arith.constant 1 : index
    %c0_9 = arith.constant 0 : index
    %c0_10 = arith.constant 0 : index
    %14 = vector.load %arg3[%c1, %c0_9, %c0_10] : memref<3x128x128xf32, #tpu.memory_space<vmem>>, vector<1x128x128xf32>
    %15 = vector.shape_cast %14 : vector<1x128x128xf32> to vector<128x128xf32>
    %cst_11 = arith.constant dense<0.000000e+00> : vector<16x128xf32>
    %16 = tpu.matmul %12, %15, %cst_11 {dimension_numbers = #tpu.dot_dimension_numbers<[1], [0], [0], [1], [0, 0, 1, 1], [], []>, precision = #tpu.contract_precision<fp32>} : vector<16x128xf32>, vector<128x128xf32>, vector<16x128xf32> -> vector<16x128xf32>
    %17 = arith.addf %13, %16 : vector<16x128xf32>
    %cst_12 = arith.constant 0.000000e+00 : f32
    %18 = vector.broadcast %cst_12 : f32 to vector<16x128xf32>
    %19 = arith.maximumf %17, %18 : vector<16x128xf32>
    %20 = vector.extract_strided_slice %2 {offsets = [0, 384], sizes = [16, 128], strides = [1, 1]} : vector<16x512xf32> to vector<16x128xf32>
    %c2 = arith.constant 2 : index
    %c0_13 = arith.constant 0 : index
    %c0_14 = arith.constant 0 : index
    %21 = vector.load %arg3[%c2, %c0_13, %c0_14] : memref<3x128x128xf32, #tpu.memory_space<vmem>>, vector<1x128x128xf32>
    %22 = vector.shape_cast %21 : vector<1x128x128xf32> to vector<128x128xf32>
    %cst_15 = arith.constant dense<0.000000e+00> : vector<16x128xf32>
    %23 = tpu.matmul %19, %22, %cst_15 {dimension_numbers = #tpu.dot_dimension_numbers<[1], [0], [0], [1], [0, 0, 1, 1], [], []>, precision = #tpu.contract_precision<fp32>} : vector<16x128xf32>, vector<128x128xf32>, vector<16x128xf32> -> vector<16x128xf32>
    %24 = arith.addf %20, %23 : vector<16x128xf32>
    %cst_16 = arith.constant 3.000000e-01 : f32
    %25 = vector.broadcast %cst_16 : f32 to vector<16x128xf32>
    %26 = arith.mulf %0, %25 : vector<16x128xf32>
    %27 = arith.addf %24, %26 : vector<16x128xf32>
    %c0_17 = arith.constant 0 : index
    %c0_18 = arith.constant 0 : index
    %28 = vector.load %arg4[%c0_17, %c0_18] : memref<16x256xf32, #tpu.memory_space<vmem>>, vector<16x128xf32>
    tpu.vector_store %arg4[%c0_17, %c0_18], %27 {strides = array<i32>} : memref<16x256xf32, #tpu.memory_space<vmem>>, vector<16x128xf32>,
    %c0_19 = arith.constant 0 : index
    %c128 = arith.constant 128 : index
    %29 = vector.load %arg4[%c0_19, %c128] : memref<16x256xf32, #tpu.memory_space<vmem>>, vector<16x128xf32>
    tpu.vector_store %arg4[%c0_19, %c128], %24 {strides = array<i32>} : memref<16x256xf32, #tpu.memory_space<vmem>>, vector<16x128xf32>,
    return
  }
  func.func @transform_0(%arg0: i32) -> (i32, i32) {
    %c0_i32 = arith.constant 0 : i32
    %c0_i32_0 = arith.constant 0 : i32
    return %arg0, %c0_i32 : i32, i32
  }
  func.func @transform_1(%arg0: i32) -> (i32, i32) {
    %c0_i32 = arith.constant 0 : i32
    %c0_i32_0 = arith.constant 0 : i32
    %c0_i32_1 = arith.constant 0 : i32
    return %c0_i32, %c0_i32_0 : i32, i32
  }
  func.func @transform_2(%arg0: i32) -> (i32, i32, i32) {
    %c0_i32 = arith.constant 0 : i32
    %c0_i32_0 = arith.constant 0 : i32
    %c0_i32_1 = arith.constant 0 : i32
    %c0_i32_2 = arith.constant 0 : i32
    return %c0_i32, %c0_i32_0, %c0_i32_1 : i32, i32, i32
  }
  func.func @transform_3(%arg0: i32) -> (i32, i32) {
    %c0_i32 = arith.constant 0 : i32
    %c0_i32_0 = arith.constant 0 : i32
    return %arg0, %c0_i32 : i32, i32
  }
}

</mosaic_0001>

<llo_original>
// kernel: tpu_custom_call.1
$region0: #{tpu_custom_call.1}
  #allocation0 [shape = 'u32[]', space=smem, size = 0x4, offset = 0x4, fixed_abs, tag = 'smem constant byte address 0x4 - core index']
  #allocation1 [shape = 'u32[144,128]{1,0:T(1,128)}', space=vmem, size = 0x12000, scoped, tag = 'internal scratch']
  %s0 = inlined_call_operand.hbm [shape: f32[16,128], index: 0, kind: input, shape index: {}]
  %s1 = inlined_call_operand.hbm [shape: f32[128,512], index: 1, kind: input, shape index: {}]
  %s2 = inlined_call_operand.hbm [shape: f32[3,128,128], index: 2, kind: input, shape index: {}]
  %s3 = inlined_call_operand.hbm [shape: f32[16,256], index: 3, kind: output, shape index: {}]
  %s4 = sld [smem:[#allocation0]]
  $region34: #{tpu_custom_call.1} parent=0
    _
  %s6 = ssub.s32 1, %s4
  %s7 = scalar_select 0, %s6, %s4
  $region1: #{tpu_custom_call.1} parent=0
    #allocation2 [shape = 'u8[8192]{0}', space=vmem, size = 0x2000, scoped, tag = 'input window, operand 0, single buffered']
    #allocation3 [shape = 's32[1]{0}', space=sflag, size = 0x4, scoped, tag = 'scoped memory for tpu_custom_call.1']
    #allocation4 [shape = 's32[1]{0}', space=sflag, size = 0x4, scoped, tag = 'scoped memory for tpu_custom_call.1']
    #allocation5 [shape = 'u8[262144]{0}', space=vmem, size = 0x40000, scoped, tag = 'input window, operand 1, single buffered']
    #allocation6 [shape = 's32[1]{0}', space=sflag, size = 0x4, scoped, tag = 'scoped memory for tpu_custom_call.1']
    #allocation7 [shape = 'u8[196608]{0}', space=vmem, size = 0x30000, scoped, tag = 'input window, operand 2, single buffered']
    #allocation8 [shape = 'u8[16384]{0}', space=vmem, size = 0x4000, scoped, tag = 'output window, operand 0, single buffered']
    %8 = vsyncpa [#allocation3], 0
    %9 = vsyncpa [#allocation6], 0
    %10 = vsyncpa [#allocation4], 0
    // Predicated region
    $region2: #{tpu_custom_call.1} parent=1 // pred_check
      _
    $region3: #{tpu_custom_call.1} parent=1 // pred_check_branch
      %12 = sbr.rel (0) target = $region5
    $region4: #{tpu_custom_call.1} parent=1 // pred_region
      %s14 = ssub.s32 256, 256
      %15 = vsyncadd [#allocation3], %s14
      %s16 = sshll.u32 [#allocation2], 4
      %s17 = int_to_ptr.vmem [resolvable:$true] %s16
      %22 = dma.hbm_to_vmem [thread:$0]  %s0, 256, %s17, [#allocation3], 128, 128, 8
    $region5: #{tpu_custom_call.1} parent=1 // pred_fallthru
      _
    // Predicated region
    $region6: #{tpu_custom_call.1} parent=1 // pred_check
      _
    $region7: #{tpu_custom_call.1} parent=1 // pred_check_branch
      %24 = sbr.rel (0) target = $region9
    $region8: #{tpu_custom_call.1} parent=1 // pred_region
      %s26 = ssub.s32 8192, 8192
      %27 = vsyncadd [#allocation6], %s26
      %s28 = sshll.u32 [#allocation5], 4
      %s29 = int_to_ptr.vmem [resolvable:$true] %s28
      %34 = dma.hbm_to_vmem [thread:$0]  %s1, 8192, %s29, [#allocation6], 512, 512, 32
    $region9: #{tpu_custom_call.1} parent=1 // pred_fallthru
      _
    // Predicated region
    $region10: #{tpu_custom_call.1} parent=1 // pred_check
      _
    $region11: #{tpu_custom_call.1} parent=1 // pred_check_branch
      %36 = sbr.rel (0) target = $region13
    $region12: #{tpu_custom_call.1} parent=1 // pred_region
      %s38 = ssub.s32 6144, 6144
      %39 = vsyncadd [#allocation6], %s38
      %s40 = sshll.u32 [#allocation7], 4
      %s41 = int_to_ptr.vmem [resolvable:$true] %s40
      %46 = dma.hbm_to_vmem [thread:$0]  %s2, 6144, %s41, [#allocation6], 128, 128, 8
    $region13: #{tpu_custom_call.1} parent=1 // pred_fallthru
      _
    // Predicated region
    $region14: #{tpu_custom_call.1} parent=1 // pred_check
      _
    $region15: #{tpu_custom_call.1} parent=1 // pred_check_branch
      %48 = sbr.rel (0) target = $region17
    $region16: #{tpu_custom_call.1} parent=1 // pred_region
      %49 = dma.done [#allocation3], 256
    $region17: #{tpu_custom_call.1} parent=1 // pred_fallthru
      _
    // Predicated region
    $region18: #{tpu_custom_call.1} parent=1 // pred_check
      _
    $region19: #{tpu_custom_call.1} parent=1 // pred_check_branch
      %51 = sbr.rel (0) target = $region21
    $region20: #{tpu_custom_call.1} parent=1 // pred_region
      %52 = dma.done [#allocation6], 8192
    $region21: #{tpu_custom_call.1} parent=1 // pred_fallthru
      _
    // Predicated region
    $region22: #{tpu_custom_call.1} parent=1 // pred_check
      _
    $region23: #{tpu_custom_call.1} parent=1 // pred_check_branch
      %54 = sbr.rel (0) target = $region25
    $region24: #{tpu_custom_call.1} parent=1 // pred_region
      %55 = dma.done [#allocation6], 6144
    $region25: #{tpu_custom_call.1} parent=1 // pred_fallthru
      _
    %v56 = vld [vmem:[#allocation2] sm:$0xff]
    %v57 = vld [vmem:[#allocation2 + $0x8] sm:$0xff]
    %v58 = vld [vmem:[#allocation5] sm:$0xff]
    %v59 = vld [vmem:[#allocation5 + $0x8] sm:$0xff]
    %v60 = vld [vmem:[#allocation5 + $0x10] sm:$0xff]
    %v61 = vld [vmem:[#allocation5 + $0x18] sm:$0xff]
    %v62 = vld [vmem:[#allocation5 + $0x20] sm:$0xff]
    %v63 = vld [vmem:[#allocation5 + $0x28] sm:$0xff]
    %v64 = vld [vmem:[#allocation5 + $0x30] sm:$0xff]
    %v65 = vld [vmem:[#allocation5 + $0x38] sm:$0xff]
    %v66 = vld [vmem:[#allocation5 + $0x40] sm:$0xff]
    %v67 = vld [vmem:[#allocation5 + $0x48] sm:$0xff]
    %v68 = vld [vmem:[#allocation5 + $0x50] sm:$0xff]
    %v69 = vld [vmem:[#allocation5 + $0x58] sm:$0xff]
    %v70 = vld [vmem:[#allocation5 + $0x60] sm:$0xff]
    %v71 = vld [vmem:[#allocation5 + $0x68] sm:$0xff]
    %v72 = vld [vmem:[#allocation5 + $0x70] sm:$0xff]
    %v73 = vld [vmem:[#allocation5 + $0x78] sm:$0xff]
    %v74 = vld [vmem:[#allocation5 + $0x80] sm:$0xff]
    %v75 = vld [vmem:[#allocation5 + $0x88] sm:$0xff]
    %v76 = vld [vmem:[#allocation5 + $0x90] sm:$0xff]
    %v77 = vld [vmem:[#allocation5 + $0x98] sm:$0xff]
    %v78 = vld [vmem:[#allocation5 + $0xa0] sm:$0xff]
    %v79 = vld [vmem:[#allocation5 + $0xa8] sm:$0xff]
    %v80 = vld [vmem:[#allocation5 + $0xb0] sm:$0xff]
    %v81 = vld [vmem:[#allocation5 + $0xb8] sm:$0xff]
    %v82 = vld [vmem:[#allocation5 + $0xc0] sm:$0xff]
    %v83 = vld [vmem:[#allocation5 + $0xc8] sm:$0xff]
    %v84 = vld [vmem:[#allocation5 + $0xd0] sm:$0xff]
    %v85 = vld [vmem:[#allocation5 + $0xd8] sm:$0xff]
    %v86 = vld [vmem:[#allocation5 + $0xe0] sm:$0xff]
    %v87 = vld [vmem:[#allocation5 + $0xe8] sm:$0xff]
    %v88 = vld [vmem:[#allocation5 + $0xf0] sm:$0xff]
    %v89 = vld [vmem:[#allocation5 + $0xf8] sm:$0xff]
    %v90 = vld [vmem:[#allocation5 + $0x100] sm:$0xff]
    %v91 = vld [vmem:[#allocation5 + $0x108] sm:$0xff]
    %v92 = vld [vmem:[#allocation5 + $0x110] sm:$0xff]
    %v93 = vld [vmem:[#allocation5 + $0x118] sm:$0xff]
    %v94 = vld [vmem:[#allocation5 + $0x120] sm:$0xff]
    %v95 = vld [vmem:[#allocation5 + $0x128] sm:$0xff]
    %v96 = vld [vmem:[#allocation5 + $0x130] sm:$0xff]
    %v97 = vld [vmem:[#allocation5 + $0x138] sm:$0xff]
    %v98 = vld [vmem:[#allocation5 + $0x140] sm:$0xff]
    %v99 = vld [vmem:[#allocation5 + $0x148] sm:$0xff]
    %v100 = vld [vmem:[#allocation5 + $0x150] sm:$0xff]
    %v101 = vld [vmem:[#allocation5 + $0x158] sm:$0xff]
    %v102 = vld [vmem:[#allocation5 + $0x160] sm:$0xff]
    %v103 = vld [vmem:[#allocation5 + $0x168] sm:$0xff]
    %v104 = vld [vmem:[#allocation5 + $0x170] sm:$0xff]
    %v105 = vld [vmem:[#allocation5 + $0x178] sm:$0xff]
    %v106 = vld [vmem:[#allocation5 + $0x180] sm:$0xff]
    %v107 = vld [vmem:[#allocation5 + $0x188] sm:$0xff]
    %v108 = vld [vmem:[#allocation5 + $0x190] sm:$0xff]
    %v109 = vld [vmem:[#allocation5 + $0x198] sm:$0xff]
    %v110 = vld [vmem:[#allocation5 + $0x1a0] sm:$0xff]
    %v111 = vld [vmem:[#allocation5 + $0x1a8] sm:$0xff]
    %v112 = vld [vmem:[#allocation5 + $0x1b0] sm:$0xff]
    %v113 = vld [vmem:[#allocation5 + $0x1b8] sm:$0xff]
    %v114 = vld [vmem:[#allocation5 + $0x1c0] sm:$0xff]
    %v115 = vld [vmem:[#allocation5 + $0x1c8] sm:$0xff]
    %v116 = vld [vmem:[#allocation5 + $0x1d0] sm:$0xff]
    %v117 = vld [vmem:[#allocation5 + $0x1d8] sm:$0xff]
    %v118 = vld [vmem:[#allocation5 + $0x1e0] sm:$0xff]
    %v119 = vld [vmem:[#allocation5 + $0x1e8] sm:$0xff]
    %v120 = vld [vmem:[#allocation5 + $0x1f0] sm:$0xff]
    %v121 = vld [vmem:[#allocation5 + $0x1f8] sm:$0xff]
    %v122 = vand.u32 %v59, 4294901760
    %123 = vmatprep.subr.mxu0 %v122
    %v124 = vand.u32 %v58, 4294901760
    %125 = vmatpush1.msra.mxu0 %v124
    %v126 = vand.u32 %v63, 4294901760
    %127 = vmatprep.subr.mxu0 %v126
    %v128 = vand.u32 %v62, 4294901760
    %129 = vmatpush1.msra.mxu0 %v128
    %v130 = vand.u32 %v67, 4294901760
    %131 = vmatprep.subr.mxu0 %v130
    %v132 = vand.u32 %v66, 4294901760
    %133 = vmatpush1.msra.mxu0 %v132
    %v134 = vand.u32 %v71, 4294901760
    %135 = vmatprep.subr.mxu0 %v134
    %v136 = vand.u32 %v70, 4294901760
    %137 = vmatpush1.msra.mxu0 %v136
    %v138 = vand.u32 %v75, 4294901760
    %139 = vmatprep.subr.mxu0 %v138
    %v140 = vand.u32 %v74, 4294901760
    %141 = vmatpush1.msra.mxu0 %v140
    %v142 = vand.u32 %v79, 4294901760
    %143 = vmatprep.subr.mxu0 %v142
    %v144 = vand.u32 %v78, 4294901760
    %145 = vmatpush1.msra.mxu0 %v144
    %v146 = vand.u32 %v83, 4294901760
    %147 = vmatprep.subr.mxu0 %v146
    %v148 = vand.u32 %v82, 4294901760
    %149 = vmatpush1.msra.mxu0 %v148
    %v150 = vand.u32 %v87, 4294901760
    %151 = vmatprep.subr.mxu0 %v150
    %v152 = vand.u32 %v86, 4294901760
    %153 = vmatpush1.msra.mxu0 %v152
    %v154 = vand.u32 %v91, 4294901760
    %155 = vmatprep.subr.mxu0 %v154
    %v156 = vand.u32 %v90, 4294901760
    %157 = vmatpush1.msra.mxu0 %v156
    %v158 = vand.u32 %v95, 4294901760
    %159 = vmatprep.subr.mxu0 %v158
    %v160 = vand.u32 %v94, 4294901760
    %161 = vmatpush1.msra.mxu0 %v160
    %v162 = vand.u32 %v99, 4294901760
    %163 = vmatprep.subr.mxu0 %v162
    %v164 = vand.u32 %v98, 4294901760
    %165 = vmatpush1.msra.mxu0 %v164
    %v166 = vand.u32 %v103, 4294901760
    %167 = vmatprep.subr.mxu0 %v166
    %v168 = vand.u32 %v102, 4294901760
    %169 = vmatpush1.msra.mxu0 %v168
    %v170 = vand.u32 %v107, 4294901760
    %171 = vmatprep.subr.mxu0 %v170
    %v172 = vand.u32 %v106, 4294901760
    %173 = vmatpush1.msra.mxu0 %v172
    %v174 = vand.u32 %v111, 4294901760
    %175 = vmatprep.subr.mxu0 %v174
    %v176 = vand.u32 %v110, 4294901760
    %177 = vmatpush1.msra.mxu0 %v176
    %v178 = vand.u32 %v115, 4294901760
    %179 = vmatprep.subr.mxu0 %v178
    %v180 = vand.u32 %v114, 4294901760
    %181 = vmatpush1.msra.mxu0 %v180
    %v182 = vand.u32 %v119, 4294901760
    %183 = vmatprep.subr.mxu0 %v182
    %v184 = vand.u32 %v118, 4294901760
    %185 = vmatpush1.msra.mxu0 %v184
    %186 = vmatprep.subr.mxu0 0.0
    %187 = vmatpush1.msra.mxu0 0.0
    %188 = vmatprep.subr.mxu0 0.0
    %189 = vmatpush1.msra.mxu0 0.0
    %190 = vmatprep.subr.mxu0 0.0
    %191 = vmatpush1.msra.mxu0 0.0
    %192 = vmatprep.subr.mxu0 0.0
    %193 = vmatpush1.msra.mxu0 0.0
    %194 = vmatprep.subr.mxu0 0.0
    %195 = vmatpush1.msra.mxu0 0.0
    %196 = vmatprep.subr.mxu0 0.0
    %197 = vmatpush1.msra.mxu0 0.0
    %198 = vmatprep.subr.mxu0 0.0
    %199 = vmatpush1.msra.mxu0 0.0
    %200 = vmatprep.subr.mxu0 0.0
    %201 = vmatpush1.msra.mxu0 0.0
    %202 = vmatprep.subr.mxu0 0.0
    %203 = vmatpush1.msra.mxu0 0.0
    %204 = vmatprep.subr.mxu0 0.0
    %205 = vmatpush1.msra.mxu0 0.0
    %206 = vmatprep.subr.mxu0 0.0
    %207 = vmatpush1.msra.mxu0 0.0
    %208 = vmatprep.subr.mxu0 0.0
    %209 = vmatpush1.msra.mxu0 0.0
    %210 = vmatprep.subr.mxu0 0.0
    %211 = vmatpush1.msra.mxu0 0.0
    %212 = vmatprep.subr.mxu0 0.0
    %213 = vmatpush1.msra.mxu0 0.0
    %214 = vmatprep.subr.mxu0 0.0
    %215 = vmatpush1.msra.mxu0 0.0
    %216 = vmatprep.subr.mxu0 0.0
    %217 = vmatpush1.msra.mxu0 0.0
    %218 = vmatprep.mubr.f32.mxu0 0.0
    %v219 = vand.u32 %v56, 4294901760
    %v220 = vsub.f32 %v56, %v219
    %v221 = vand.u32 %v220, 4294901760
    %v222 = vsub.f32 %v220, %v221
    %v223 = vand.u32 %v222, 4294901760
    %224 = vmatmul.mubr.f32.gmra.mrb[0].mxu0 %v223
    %v225 = vpop.f32.mrb[0].mxu0
    %v226 = vadd.f32 0.0, %v225
    %v227 = vpop.f32.mrb[0].mxu0
    %v228 = vadd.f32 0.0, %v227
    %229 = vmatprep.mubr.f32.mxu0 0.0
    %v230 = vand.u32 %v57, 4294901760
    %v231 = vsub.f32 %v57, %v230
    %v232 = vand.u32 %v231, 4294901760
    %v233 = vsub.f32 %v231, %v232
    %v234 = vand.u32 %v233, 4294901760
    %235 = vmatmul.mubr.f32.gmra.mrb[0].mxu0 %v234
    %v236 = vpop.f32.mrb[0].mxu0
    %v237 = vadd.f32 0.0, %v236
    %v238 = vpop.f32.mrb[0].mxu0
    %v239 = vadd.f32 0.0, %v238
    %240 = vdwg.mxu0
    %v241 = vand.u32 %v59, 4294901760
    %v242 = vsub.f32 %v59, %v241
    %v243 = vand.u32 %v242, 4294901760
    %v244 = vsub.f32 %v242, %v243
    %v245 = vand.u32 %v244, 4294901760
    %246 = vmatprep.subr.mxu0 %v245
    %v247 = vand.u32 %v58, 4294901760
    %v248 = vsub.f32 %v58, %v247
    %v249 = vand.u32 %v248, 4294901760
    %v250 = vsub.f32 %v248, %v249
    %v251 = vand.u32 %v250, 4294901760
    %252 = vmatpush1.msra.mxu0 %v251
    %v253 = vand.u32 %v63, 4294901760
    %v254 = vsub.f32 %v63, %v253
    %v255 = vand.u32 %v254, 4294901760
    %v256 = vsub.f32 %v254, %v255
    %v257 = vand.u32 %v256, 4294901760
    %258 = vmatprep.subr.mxu0 %v257
    %v259 = vand.u32 %v62, 4294901760
    %v260 = vsub.f32 %v62, %v259
    %v261 = vand.u32 %v260, 4294901760
    %v262 = vsub.f32 %v260, %v261
    %v263 = vand.u32 %v262, 4294901760
    %264 = vmatpush1.msra.mxu0 %v263
    %v265 = vand.u32 %v67, 4294901760
    %v266 = vsub.f32 %v67, %v265
    %v267 = vand.u32 %v266, 4294901760
    %v268 = vsub.f32 %v266, %v267
    %v269 = vand.u32 %v268, 4294901760
    %270 = vmatprep.subr.mxu0 %v269
    %v271 = vand.u32 %v66, 4294901760
    %v272 = vsub.f32 %v66, %v271
    %v273 = vand.u32 %v272, 4294901760
    %v274 = vsub.f32 %v272, %v273
    %v275 = vand.u32 %v274, 4294901760
    %276 = vmatpush1.msra.mxu0 %v275
    %v277 = vand.u32 %v71, 4294901760
    %v278 = vsub.f32 %v71, %v277
    %v279 = vand.u32 %v278, 4294901760
    %v280 = vsub.f32 %v278, %v279
    %v281 = vand.u32 %v280, 4294901760
    %282 = vmatprep.subr.mxu0 %v281
    %v283 = vand.u32 %v70, 4294901760
    %v284 = vsub.f32 %v70, %v283
    %v285 = vand.u32 %v284, 4294901760
    %v286 = vsub.f32 %v284, %v285
    %v287 = vand.u32 %v286, 4294901760
    %288 = vmatpush1.msra.mxu0 %v287
    %v289 = vand.u32 %v75, 4294901760
    %v290 = vsub.f32 %v75, %v289
    %v291 = vand.u32 %v290, 4294901760
    %v292 = vsub.f32 %v290, %v291
    %v293 = vand.u32 %v292, 4294901760
    %294 = vmatprep.subr.mxu0 %v293
    %v295 = vand.u32 %v74, 4294901760
    %v296 = vsub.f32 %v74, %v295
    %v297 = vand.u32 %v296, 4294901760
    %v298 = vsub.f32 %v296, %v297
    %v299 = vand.u32 %v298, 4294901760
    %300 = vmatpush1.msra.mxu0 %v299
    %v301 = vand.u32 %v79, 4294901760
    %v302 = vsub.f32 %v79, %v301
    %v303 = vand.u32 %v302, 4294901760
    %v304 = vsub.f32 %v302, %v303
    %v305 = vand.u32 %v304, 4294901760
    %306 = vmatprep.subr.mxu0 %v305
    %v307 = vand.u32 %v78, 4294901760
    %v308 = vsub.f32 %v78, %v307
    %v309 = vand.u32 %v308, 4294901760
    %v310 = vsub.f32 %v308, %v309
    %v311 = vand.u32 %v310, 4294901760
    %312 = vmatpush1.msra.mxu0 %v311
    %v313 = vand.u32 %v83, 4294901760
    %v314 = vsub.f32 %v83, %v313
    %v315 = vand.u32 %v314, 4294901760
    %v316 = vsub.f32 %v314, %v315
    %v317 = vand.u32 %v316, 4294901760
    %318 = vmatprep.subr.mxu0 %v317
    %v319 = vand.u32 %v82, 4294901760
    %v320 = vsub.f32 %v82, %v319
    %v321 = vand.u32 %v320, 4294901760
    %v322 = vsub.f32 %v320, %v321
    %v323 = vand.u32 %v322, 4294901760
    %324 = vmatpush1.msra.mxu0 %v323
    %v325 = vand.u32 %v87, 4294901760
    %v326 = vsub.f32 %v87, %v325
    %v327 = vand.u32 %v326, 4294901760
    %v328 = vsub.f32 %v326, %v327
    %v329 = vand.u32 %v328, 4294901760
    %330 = vmatprep.subr.mxu0 %v329
    %v331 = vand.u32 %v86, 4294901760
    %v332 = vsub.f32 %v86, %v331
    %v333 = vand.u32 %v332, 4294901760
    %v334 = vsub.f32 %v332, %v333
    %v335 = vand.u32 %v334, 4294901760
    %336 = vmatpush1.msra.mxu0 %v335
    %v337 = vand.u32 %v91, 4294901760
    %v338 = vsub.f32 %v91, %v337
    %v339 = vand.u32 %v338, 4294901760
    %v340 = vsub.f32 %v338, %v339
    %v341 = vand.u32 %v340, 4294901760
    %342 = vmatprep.subr.mxu0 %v341
    %v343 = vand.u32 %v90, 4294901760
    %v344 = vsub.f32 %v90, %v343
    %v345 = vand.u32 %v344, 4294901760
    %v346 = vsub.f32 %v344, %v345
    %v347 = vand.u32 %v346, 4294901760
    %348 = vmatpush1.msra.mxu0 %v347
    %v349 = vand.u32 %v95, 4294901760
    %v350 = vsub.f32 %v95, %v349
    %v351 = vand.u32 %v350, 4294901760
    %v352 = vsub.f32 %v350, %v351
    %v353 = vand.u32 %v352, 4294901760
    %354 = vmatprep.subr.mxu0 %v353
    %v355 = vand.u32 %v94, 4294901760
    %v356 = vsub.f32 %v94, %v355
    %v357 = vand.u32 %v356, 4294901760
    %v358 = vsub.f32 %v356, %v357
    %v359 = vand.u32 %v358, 4294901760
    %360 = vmatpush1.msra.mxu0 %v359
    %v361 = vand.u32 %v99, 4294901760
    %v362 = vsub.f32 %v99, %v361
    %v363 = vand.u32 %v362, 4294901760
    %v364 = vsub.f32 %v362, %v363
    %v365 = vand.u32 %v364, 4294901760
    %366 = vmatprep.subr.mxu0 %v365
    %v367 = vand.u32 %v98, 4294901760
    %v368 = vsub.f32 %v98, %v367
    %v369 = vand.u32 %v368, 4294901760
    %v370 = vsub.f32 %v368, %v369
    %v371 = vand.u32 %v370, 4294901760
    %372 = vmatpush1.msra.mxu0 %v371
    %v373 = vand.u32 %v103, 4294901760
    %v374 = vsub.f32 %v103, %v373
    %v375 = vand.u32 %v374, 4294901760
    %v376 = vsub.f32 %v374, %v375
    %v377 = vand.u32 %v376, 4294901760
    %378 = vmatprep.subr.mxu0 %v377
    %v379 = vand.u32 %v102, 4294901760
    %v380 = vsub.f32 %v102, %v379
    %v381 = vand.u32 %v380, 4294901760
    %v382 = vsub.f32 %v380, %v381
    %v383 = vand.u32 %v382, 4294901760
    %384 = vmatpush1.msra.mxu0 %v383
    %v385 = vand.u32 %v107, 4294901760
    %v386 = vsub.f32 %v107, %v385
    %v387 = vand.u32 %v386, 4294901760
    %v388 = vsub.f32 %v386, %v387
    %v389 = vand.u32 %v388, 4294901760
    %390 = vmatprep.subr.mxu0 %v389
    %v391 = vand.u32 %v106, 4294901760
    %v392 = vsub.f32 %v106, %v391
    %v393 = vand.u32 %v392, 4294901760
    %v394 = vsub.f32 %v392, %v393
    %v395 = vand.u32 %v394, 4294901760
    %396 = vmatpush1.msra.mxu0 %v395
    %v397 = vand.u32 %v111, 4294901760
    %v398 = vsub.f32 %v111, %v397
    %v399 = vand.u32 %v398, 4294901760
    %v400 = vsub.f32 %v398, %v399
    %v401 = vand.u32 %v400, 4294901760
    %402 = vmatprep.subr.mxu0 %v401
    %v403 = vand.u32 %v110, 4294901760
    %v404 = vsub.f32 %v110, %v403
    %v405 = vand.u32 %v404, 4294901760
    %v406 = vsub.f32 %v404, %v405
    %v407 = vand.u32 %v406, 4294901760
    %408 = vmatpush1.msra.mxu0 %v407
    %v409 = vand.u32 %v115, 4294901760
    %v410 = vsub.f32 %v115, %v409
    %v411 = vand.u32 %v410, 4294901760
    %v412 = vsub.f32 %v410, %v411
    %v413 = vand.u32 %v412, 4294901760
    %414 = vmatprep.subr.mxu0 %v413
    %v415 = vand.u32 %v114, 4294901760
    %v416 = vsub.f32 %v114, %v415
    %v417 = vand.u32 %v416, 4294901760
    %v418 = vsub.f32 %v416, %v417
    %v419 = vand.u32 %v418, 4294901760
    %420 = vmatpush1.msra.mxu0 %v419
    %v421 = vand.u32 %v119, 4294901760
    %v422 = vsub.f32 %v119, %v421
    %v423 = vand.u32 %v422, 4294901760
    %v424 = vsub.f32 %v422, %v423
    %v425 = vand.u32 %v424, 4294901760
    %426 = vmatprep.subr.mxu0 %v425
    %v427 = vand.u32 %v118, 4294901760
    %v428 = vsub.f32 %v118, %v427
    %v429 = vand.u32 %v428, 4294901760
    %v430 = vsub.f32 %v428, %v429
    %v431 = vand.u32 %v430, 4294901760
    %432 = vmatpush1.msra.mxu0 %v431
    %433 = vmatprep.subr.mxu0 0.0
    %434 = vmatpush1.msra.mxu0 0.0
    %435 = vmatprep.subr.mxu0 0.0
    %436 = vmatpush1.msra.mxu0 0.0
    %437 = vmatprep.subr.mxu0 0.0
    %438 = vmatpush1.msra.mxu0 0.0
    %439 = vmatprep.subr.mxu0 0.0
    %440 = vmatpush1.msra.mxu0 0.0
    %441 = vmatprep.subr.mxu0 0.0
    %442 = vmatpush1.msra.mxu0 0.0
    %443 = vmatprep.subr.mxu0 0.0
    %444 = vmatpush1.msra.mxu0 0.0
    %445 = vmatprep.subr.mxu0 0.0
    %446 = vmatpush1.msra.mxu0 0.0
    %447 = vmatprep.subr.mxu0 0.0
    %448 = vmatpush1.msra.mxu0 0.0
    %449 = vmatprep.subr.mxu0 0.0
    %450 = vmatpush1.msra.mxu0 0.0
    %451 = vmatprep.subr.mxu0 0.0
    %452 = vmatpush1.msra.mxu0 0.0
    %453 = vmatprep.subr.mxu0 0.0
    %454 = vmatpush1.msra.mxu0 0.0
    %455 = vmatprep.subr.mxu0 0.0
    %456 = vmatpush1.msra.mxu0 0.0
    %457 = vmatprep.subr.mxu0 0.0
    %458 = vmatpush1.msra.mxu0 0.0
    %459 = vmatprep.subr.mxu0 0.0
    %460 = vmatpush1.msra.mxu0 0.0
    %461 = vmatprep.subr.mxu0 0.0
    %462 = vmatpush1.msra.mxu0 0.0
    %463 = vmatprep.subr.mxu0 0.0
    %464 = vmatpush1.msra.mxu0 0.0
    %465 = vmatprep.mubr.f32.mxu0 0.0
    %v466 = vand.u32 %v56, 4294901760
    %467 = vmatmul.mubr.f32.gmra.mrb[0].mxu0 %v466
    %v468 = vpop.f32.mrb[0].mxu0
    %v469 = vadd.f32 %v226, %v468
    %v470 = vpop.f32.mrb[0].mxu0
    %v471 = vadd.f32 %v228, %v470
    %472 = vmatprep.mubr.f32.mxu0 0.0
    %v473 = vand.u32 %v57, 4294901760
    %474 = vmatmul.mubr.f32.gmra.mrb[0].mxu0 %v473
    %v475 = vpop.f32.mrb[0].mxu0
    %v476 = vadd.f32 %v237, %v475
    %v477 = vpop.f32.mrb[0].mxu0
    %v478 = vadd.f32 %v239, %v477
    %479 = vdwg.mxu0
    %v480 = vand.u32 %v59, 4294901760
    %v481 = vsub.f32 %v59, %v480
    %482 = vmatprep.subr.mxu0 %v481
    %v483 = vand.u32 %v58, 4294901760
    %v484 = vsub.f32 %v58, %v483
    %485 = vmatpush1.msra.mxu0 %v484
    %v486 = vand.u32 %v63, 4294901760
    %v487 = vsub.f32 %v63, %v486
    %488 = vmatprep.subr.mxu0 %v487
    %v489 = vand.u32 %v62, 4294901760
    %v490 = vsub.f32 %v62, %v489
    %491 = vmatpush1.msra.mxu0 %v490
    %v492 = vand.u32 %v67, 4294901760
    %v493 = vsub.f32 %v67, %v492
    %494 = vmatprep.subr.mxu0 %v493
    %v495 = vand.u32 %v66, 4294901760
    %v496 = vsub.f32 %v66, %v495
    %497 = vmatpush1.msra.mxu0 %v496
    %v498 = vand.u32 %v71, 4294901760
    %v499 = vsub.f32 %v71, %v498
    %500 = vmatprep.subr.mxu0 %v499
    %v501 = vand.u32 %v70, 4294901760
    %v502 = vsub.f32 %v70, %v501
    %503 = vmatpush1.msra.mxu0 %v502
    %v504 = vand.u32 %v75, 4294901760
    %v505 = vsub.f32 %v75, %v504
    %506 = vmatprep.subr.mxu0 %v505
    %v507 = vand.u32 %v74, 4294901760
    %v508 = vsub.f32 %v74, %v507
    %509 = vmatpush1.msra.mxu0 %v508
    %v510 = vand.u32 %v79, 4294901760
    %v511 = vsub.f32 %v79, %v510
    %512 = vmatprep.subr.mxu0 %v511
    %v513 = vand.u32 %v78, 4294901760
    %v514 = vsub.f32 %v78, %v513
    %515 = vmatpush1.msra.mxu0 %v514
    %v516 = vand.u32 %v83, 4294901760
    %v517 = vsub.f32 %v83, %v516
    %518 = vmatprep.subr.mxu0 %v517
    %v519 = vand.u32 %v82, 4294901760
    %v520 = vsub.f32 %v82, %v519
    %521 = vmatpush1.msra.mxu0 %v520
    %v522 = vand.u32 %v87, 4294901760
    %v523 = vsub.f32 %v87, %v522
    %524 = vmatprep.subr.mxu0 %v523
    %v525 = vand.u32 %v86, 4294901760
    %v526 = vsub.f32 %v86, %v525
    %527 = vmatpush1.msra.mxu0 %v526
    %v528 = vand.u32 %v91, 4294901760
    %v529 = vsub.f32 %v91, %v528
    %530 = vmatprep.subr.mxu0 %v529
    %v531 = vand.u32 %v90, 4294901760
    %v532 = vsub.f32 %v90, %v531
    %533 = vmatpush1.msra.mxu0 %v532
    %v534 = vand.u32 %v95, 4294901760
    %v535 = vsub.f32 %v95, %v534
    %536 = vmatprep.subr.mxu0 %v535
    %v537 = vand.u32 %v94, 4294901760
    %v538 = vsub.f32 %v94, %v537
    %539 = vmatpush1.msra.mxu0 %v538
    %v540 = vand.u32 %v99, 4294901760
    %v541 = vsub.f32 %v99, %v540
    %542 = vmatprep.subr.mxu0 %v541
    %v543 = vand.u32 %v98, 4294901760
    %v544 = vsub.f32 %v98, %v543
    %545 = vmatpush1.msra.mxu0 %v544
    %v546 = vand.u32 %v103, 4294901760
    %v547 = vsub.f32 %v103, %v546
    %548 = vmatprep.subr.mxu0 %v547
    %v549 = vand.u32 %v102, 4294901760
    %v550 = vsub.f32 %v102, %v549
    %551 = vmatpush1.msra.mxu0 %v550
    %v552 = vand.u32 %v107, 4294901760
    %v553 = vsub.f32 %v107, %v552
    %554 = vmatprep.subr.mxu0 %v553
    %v555 = vand.u32 %v106, 4294901760
    %v556 = vsub.f32 %v106, %v555
    %557 = vmatpush1.msra.mxu0 %v556
    %v558 = vand.u32 %v111, 4294901760
    %v559 = vsub.f32 %v111, %v558
    %560 = vmatprep.subr.mxu0 %v559
    %v561 = vand.u32 %v110, 4294901760
    %v562 = vsub.f32 %v110, %v561
    %563 = vmatpush1.msra.mxu0 %v562
    %v564 = vand.u32 %v115, 4294901760
    %v565 = vsub.f32 %v115, %v564
    %566 = vmatprep.subr.mxu0 %v565
    %v567 = vand.u32 %v114, 4294901760
    %v568 = vsub.f32 %v114, %v567
    %569 = vmatpush1.msra.mxu0 %v568
    %v570 = vand.u32 %v119, 4294901760
    %v571 = vsub.f32 %v119, %v570
    %572 = vmatprep.subr.mxu0 %v571
    %v573 = vand.u32 %v118, 4294901760
    %v574 = vsub.f32 %v118, %v573
    %575 = vmatpush1.msra.mxu0 %v574
    %576 = vmatprep.subr.mxu0 0.0
    %577 = vmatpush1.msra.mxu0 0.0
    %578 = vmatprep.subr.mxu0 0.0
    %579 = vmatpush1.msra.mxu0 0.0
    %580 = vmatprep.subr.mxu0 0.0
    %581 = vmatpush1.msra.mxu0 0.0
    %582 = vmatprep.subr.mxu0 0.0
    %583 = vmatpush1.msra.mxu0 0.0
    %584 = vmatprep.subr.mxu0 0.0
    %585 = vmatpush1.msra.mxu0 0.0
    %586 = vmatprep.subr.mxu0 0.0
    %587 = vmatpush1.msra.mxu0 0.0
    %588 = vmatprep.subr.mxu0 0.0
    %589 = vmatpush1.msra.mxu0 0.0
    %590 = vmatprep.subr.mxu0 0.0
    %591 = vmatpush1.msra.mxu0 0.0
    %592 = vmatprep.subr.mxu0 0.0
    %593 = vmatpush1.msra.mxu0 0.0
    %594 = vmatprep.subr.mxu0 0.0
    %595 = vmatpush1.msra.mxu0 0.0
    %596 = vmatprep.subr.mxu0 0.0
    %597 = vmatpush1.msra.mxu0 0.0
    %598 = vmatprep.subr.mxu0 0.0
    %599 = vmatpush1.msra.mxu0 0.0
    %600 = vmatprep.subr.mxu0 0.0
    %601 = vmatpush1.msra.mxu0 0.0
    %602 = vmatprep.subr.mxu0 0.0
    %603 = vmatpush1.msra.mxu0 0.0
    %604 = vmatprep.subr.mxu0 0.0
    %605 = vmatpush1.msra.mxu0 0.0
    %606 = vmatprep.subr.mxu0 0.0
    %607 = vmatpush1.msra.mxu0 0.0
    %608 = vmatprep.mubr.f32.mxu0 0.0
    %v609 = vand.u32 %v56, 4294901760
    %v610 = vsub.f32 %v56, %v609
    %611 = vmatmul.mubr.f32.gmra.mrb[0].mxu0 %v610
    %v612 = vpop.f32.mrb[0].mxu0
    %v613 = vadd.f32 %v469, %v612
    %v614 = vpop.f32.mrb[0].mxu0
    %v615 = vadd.f32 %v471, %v614
    %616 = vmatprep.mubr.f32.mxu0 0.0
    %v617 = vand.u32 %v57, 4294901760
    %v618 = vsub.f32 %v57, %v617
    %619 = vmatmul.mubr.f32.gmra.mrb[0].mxu0 %v618
    %v620 = vpop.f32.mrb[0].mxu0
    %v621 = vadd.f32 %v476, %v620
    %v622 = vpop.f32.mrb[0].mxu0
    %v623 = vadd.f32 %v478, %v622
    %624 = vdwg.mxu0
    %v625 = vand.u32 %v59, 4294901760
    %626 = vmatprep.subr.mxu0 %v625
    %v627 = vand.u32 %v58, 4294901760
    %628 = vmatpush1.msra.mxu0 %v627
    %v629 = vand.u32 %v63, 4294901760
    %630 = vmatprep.subr.mxu0 %v629
    %v631 = vand.u32 %v62, 4294901760
    %632 = vmatpush1.msra.mxu0 %v631
    %v633 = vand.u32 %v67, 4294901760
    %634 = vmatprep.subr.mxu0 %v633
    %v635 = vand.u32 %v66, 4294901760
    %636 = vmatpush1.msra.mxu0 %v635
    %v637 = vand.u32 %v71, 4294901760
    %638 = vmatprep.subr.mxu0 %v637
    %v639 = vand.u32 %v70, 4294901760
    %640 = vmatpush1.msra.mxu0 %v639
    %v641 = vand.u32 %v75, 4294901760
    %642 = vmatprep.subr.mxu0 %v641
    %v643 = vand.u32 %v74, 4294901760
    %644 = vmatpush1.msra.mxu0 %v643
    %v645 = vand.u32 %v79, 4294901760
    %646 = vmatprep.subr.mxu0 %v645
    %v647 = vand.u32 %v78, 4294901760
    %648 = vmatpush1.msra.mxu0 %v647
    %v649 = vand.u32 %v83, 4294901760
    %650 = vmatprep.subr.mxu0 %v649
    %v651 = vand.u32 %v82, 4294901760
    %652 = vmatpush1.msra.mxu0 %v651
    %v653 = vand.u32 %v87, 4294901760
    %654 = vmatprep.subr.mxu0 %v653
    %v655 = vand.u32 %v86, 4294901760
    %656 = vmatpush1.msra.mxu0 %v655
    %v657 = vand.u32 %v91, 4294901760
    %658 = vmatprep.subr.mxu0 %v657
    %v659 = vand.u32 %v90, 4294901760
    %660 = vmatpush1.msra.mxu0 %v659
    %v661 = vand.u32 %v95, 4294901760
    %662 = vmatprep.subr.mxu0 %v661
    %v663 = vand.u32 %v94, 4294901760
    %664 = vmatpush1.msra.mxu0 %v663
    %v665 = vand.u32 %v99, 4294901760
    %666 = vmatprep.subr.mxu0 %v665
    %v667 = vand.u32 %v98, 4294901760
    %668 = vmatpush1.msra.mxu0 %v667
    %v669 = vand.u32 %v103, 4294901760
    %670 = vmatprep.subr.mxu0 %v669
    %v671 = vand.u32 %v102, 4294901760
    %672 = vmatpush1.msra.mxu0 %v671
    %v673 = vand.u32 %v107, 4294901760
    %674 = vmatprep.subr.mxu0 %v673
    %v675 = vand.u32 %v106, 4294901760
    %676 = vmatpush1.msra.mxu0 %v675
    %v677 = vand.u32 %v111, 4294901760
    %678 = vmatprep.subr.mxu0 %v677
    %v679 = vand.u32 %v110, 4294901760
    %680 = vmatpush1.msra.mxu0 %v679
    %v681 = vand.u32 %v115, 4294901760
    %682 = vmatprep.subr.mxu0 %v681
    %v683 = vand.u32 %v114, 4294901760
    %684 = vmatpush1.msra.mxu0 %v683
    %v685 = vand.u32 %v119, 4294901760
    %686 = vmatprep.subr.mxu0 %v685
    %v687 = vand.u32 %v118, 4294901760
    %688 = vmatpush1.msra.mxu0 %v687
    %689 = vmatprep.subr.mxu0 0.0
    %690 = vmatpush1.msra.mxu0 0.0
    %691 = vmatprep.subr.mxu0 0.0
    %692 = vmatpush1.msra.mxu0 0.0
    %693 = vmatprep.subr.mxu0 0.0
    %694 = vmatpush1.msra.mxu0 0.0
    %695 = vmatprep.subr.mxu0 0.0
    %696 = vmatpush1.msra.mxu0 0.0
    %697 = vmatprep.subr.mxu0 0.0
    %698 = vmatpush1.msra.mxu0 0.0
    %699 = vmatprep.subr.mxu0 0.0
    %700 = vmatpush1.msra.mxu0 0.0
    %701 = vmatprep.subr.mxu0 0.0
    %702 = vmatpush1.msra.mxu0 0.0
    %703 = vmatprep.subr.mxu0 0.0
    %704 = vmatpush1.msra.mxu0 0.0
    %705 = vmatprep.subr.mxu0 0.0
    %706 = vmatpush1.msra.mxu0 0.0
    %707 = vmatprep.subr.mxu0 0.0
    %708 = vmatpush1.msra.mxu0 0.0
    %709 = vmatprep.subr.mxu0 0.0
    %710 = vmatpush1.msra.mxu0 0.0
    %711 = vmatprep.subr.mxu0 0.0
    %712 = vmatpush1.msra.mxu0 0.0
    %713 = vmatprep.subr.mxu0 0.0
    %714 = vmatpush1.msra.mxu0 0.0
    %715 = vmatprep.subr.mxu0 0.0
    %716 = vmatpush1.msra.mxu0 0.0
    %717 = vmatprep.subr.mxu0 0.0
    %718 = vmatpush1.msra.mxu0 0.0
    %719 = vmatprep.subr.mxu0 0.0
    %720 = vmatpush1.msra.mxu0 0.0
    %721 = vmatprep.mubr.f32.mxu0 0.0
    %v722 = vand.u32 %v56, 4294901760
    %v723 = vsub.f32 %v56, %v722
    %v724 = vand.u32 %v723, 4294901760
    %725 = vmatmul.mubr.f32.gmra.mrb[0].mxu0 %v724
    %v726 = vpop.f32.mrb[0].mxu0
    %v727 = vadd.f32 %v613, %v726
    %v728 = vpop.f32.mrb[0].mxu0
    %v729 = vadd.f32 %v615, %v728
    %730 = vmatprep.mubr.f32.mxu0 0.0
    %v731 = vand.u32 %v57, 4294901760
    %v732 = vsub.f32 %v57, %v731
    %v733 = vand.u32 %v732, 4294901760
    %734 = vmatmul.mubr.f32.gmra.mrb[0].mxu0 %v733
    %v735 = vpop.f32.mrb[0].mxu0
    %v736 = vadd.f32 %v621, %v735
    %v737 = vpop.f32.mrb[0].mxu0
    %v738 = vadd.f32 %v623, %v737
    %739 = vdwg.mxu0
    %v740 = vand.u32 %v59, 4294901760
    %v741 = vsub.f32 %v59, %v740
    %v742 = vand.u32 %v741, 4294901760
    %743 = vmatprep.subr.mxu0 %v742
    %v744 = vand.u32 %v58, 4294901760
    %v745 = vsub.f32 %v58, %v744
    %v746 = vand.u32 %v745, 4294901760
    %747 = vmatpush1.msra.mxu0 %v746
    %v748 = vand.u32 %v63, 4294901760
    %v749 = vsub.f32 %v63, %v748
    %v750 = vand.u32 %v749, 4294901760
    %751 = vmatprep.subr.mxu0 %v750
    %v752 = vand.u32 %v62, 4294901760
    %v753 = vsub.f32 %v62, %v752
    %v754 = vand.u32 %v753, 4294901760
    %755 = vmatpush1.msra.mxu0 %v754
    %v756 = vand.u32 %v67, 4294901760
    %v757 = vsub.f32 %v67, %v756
    %v758 = vand.u32 %v757, 4294901760
    %759 = vmatprep.subr.mxu0 %v758
    %v760 = vand.u32 %v66, 4294901760
    %v761 = vsub.f32 %v66, %v760
    %v762 = vand.u32 %v761, 4294901760
    %763 = vmatpush1.msra.mxu0 %v762
    %v764 = vand.u32 %v71, 4294901760
    %v765 = vsub.f32 %v71, %v764
    %v766 = vand.u32 %v765, 4294901760
    %767 = vmatprep.subr.mxu0 %v766
    %v768 = vand.u32 %v70, 4294901760
    %v769 = vsub.f32 %v70, %v768
    %v770 = vand.u32 %v769, 4294901760
    %771 = vmatpush1.msra.mxu0 %v770
    %v772 = vand.u32 %v75, 4294901760
    %v773 = vsub.f32 %v75, %v772
    %v774 = vand.u32 %v773, 4294901760
    %775 = vmatprep.subr.mxu0 %v774
    %v776 = vand.u32 %v74, 4294901760
    %v777 = vsub.f32 %v74, %v776
    %v778 = vand.u32 %v777, 4294901760
    %779 = vmatpush1.msra.mxu0 %v778
    %v780 = vand.u32 %v79, 4294901760
    %v781 = vsub.f32 %v79, %v780
    %v782 = vand.u32 %v781, 4294901760
    %783 = vmatprep.subr.mxu0 %v782
    %v784 = vand.u32 %v78, 4294901760
    %v785 = vsub.f32 %v78, %v784
    %v786 = vand.u32 %v785, 4294901760
    %787 = vmatpush1.msra.mxu0 %v786
    %v788 = vand.u32 %v83, 4294901760
    %v789 = vsub.f32 %v83, %v788
    %v790 = vand.u32 %v789, 4294901760
    %791 = vmatprep.subr.mxu0 %v790
    %v792 = vand.u32 %v82, 4294901760
    %v793 = vsub.f32 %v82, %v792
    %v794 = vand.u32 %v793, 4294901760
    %795 = vmatpush1.msra.mxu0 %v794
    %v796 = vand.u32 %v87, 4294901760
    %v797 = vsub.f32 %v87, %v796
    %v798 = vand.u32 %v797, 4294901760
    %799 = vmatprep.subr.mxu0 %v798
    %v800 = vand.u32 %v86, 4294901760
    %v801 = vsub.f32 %v86, %v800
    %v802 = vand.u32 %v801, 4294901760
    %803 = vmatpush1.msra.mxu0 %v802
    %v804 = vand.u32 %v91, 4294901760
    %v805 = vsub.f32 %v91, %v804
    %v806 = vand.u32 %v805, 4294901760
    %807 = vmatprep.subr.mxu0 %v806
    %v808 = vand.u32 %v90, 4294901760
    %v809 = vsub.f32 %v90, %v808
    %v810 = vand.u32 %v809, 4294901760
    %811 = vmatpush1.msra.mxu0 %v810
    %v812 = vand.u32 %v95, 4294901760
    %v813 = vsub.f32 %v95, %v812
    %v814 = vand.u32 %v813, 4294901760
    %815 = vmatprep.subr.mxu0 %v814
    %v816 = vand.u32 %v94, 4294901760
    %v817 = vsub.f32 %v94, %v816
    %v818 = vand.u32 %v817, 4294901760
    %819 = vmatpush1.msra.mxu0 %v818
    %v820 = vand.u32 %v99, 4294901760
    %v821 = vsub.f32 %v99, %v820
    %v822 = vand.u32 %v821, 4294901760
    %823 = vmatprep.subr.mxu0 %v822
    %v824 = vand.u32 %v98, 4294901760
    %v825 = vsub.f32 %v98, %v824
    %v826 = vand.u32 %v825, 4294901760
    %827 = vmatpush1.msra.mxu0 %v826
    %v828 = vand.u32 %v103, 4294901760
    %v829 = vsub.f32 %v103, %v828
    %v830 = vand.u32 %v829, 4294901760
    %831 = vmatprep.subr.mxu0 %v830
    %v832 = vand.u32 %v102, 4294901760
    %v833 = vsub.f32 %v102, %v832
    %v834 = vand.u32 %v833, 4294901760
    %835 = vmatpush1.msra.mxu0 %v834
    %v836 = vand.u32 %v107, 4294901760
    %v837 = vsub.f32 %v107, %v836
    %v838 = vand.u32 %v837, 4294901760
    %839 = vmatprep.subr.mxu0 %v838
    %v840 = vand.u32 %v106, 4294901760
    %v841 = vsub.f32 %v106, %v840
    %v842 = vand.u32 %v841, 4294901760
    %843 = vmatpush1.msra.mxu0 %v842
    %v844 = vand.u32 %v111, 4294901760
    %v845 = vsub.f32 %v111, %v844
    %v846 = vand.u32 %v845, 4294901760
    %847 = vmatprep.subr.mxu0 %v846
    %v848 = vand.u32 %v110, 4294901760
    %v849 = vsub.f32 %v110, %v848
    %v850 = vand.u32 %v849, 4294901760
    %851 = vmatpush1.msra.mxu0 %v850
    %v852 = vand.u32 %v115, 4294901760
    %v853 = vsub.f32 %v115, %v852
    %v854 = vand.u32 %v853, 4294901760
    %855 = vmatprep.subr.mxu0 %v854
    %v856 = vand.u32 %v114, 4294901760
    %v857 = vsub.f32 %v114, %v856
    %v858 = vand.u32 %v857, 4294901760
    %859 = vmatpush1.msra.mxu0 %v858
    %v860 = vand.u32 %v119, 4294901760
    %v861 = vsub.f32 %v119, %v860
    %v862 = vand.u32 %v861, 4294901760
    %863 = vmatprep.subr.mxu0 %v862
    %v864 = vand.u32 %v118, 4294901760
    %v865 = vsub.f32 %v118, %v864
    %v866 = vand.u32 %v865, 4294901760
    %867 = vmatpush1.msra.mxu0 %v866
    %868 = vmatprep.subr.mxu0 0.0
    %869 = vmatpush1.msra.mxu0 0.0
    %870 = vmatprep.subr.mxu0 0.0
    %871 = vmatpush1.msra.mxu0 0.0
    %872 = vmatprep.subr.mxu0 0.0
    %873 = vmatpush1.msra.mxu0 0.0
    %874 = vmatprep.subr.mxu0 0.0
    %875 = vmatpush1.msra.mxu0 0.0
    %876 = vmatprep.subr.mxu0 0.0
    %877 = vmatpush1.msra.mxu0 0.0
    %878 = vmatprep.subr.mxu0 0.0
    %879 = vmatpush1.msra.mxu0 0.0
    %880 = vmatprep.subr.mxu0 0.0
    %881 = vmatpush1.msra.mxu0 0.0
    %882 = vmatprep.subr.mxu0 0.0
    %883 = vmatpush1.msra.mxu0 0.0
    %884 = vmatprep.subr.mxu0 0.0
    %885 = vmatpush1.msra.mxu0 0.0
    %886 = vmatprep.subr.mxu0 0.0
    %887 = vmatpush1.msra.mxu0 0.0
    %888 = vmatprep.subr.mxu0 0.0
    %889 = vmatpush1.msra.mxu0 0.0
    %890 = vmatprep.subr.mxu0 0.0
    %891 = vmatpush1.msra.mxu0 0.0
    %892 = vmatprep.subr.mxu0 0.0
    %893 = vmatpush1.msra.mxu0 0.0
    %894 = vmatprep.subr.mxu0 0.0
    %895 = vmatpush1.msra.mxu0 0.0
    %896 = vmatprep.subr.mxu0 0.0
    %897 = vmatpush1.msra.mxu0 0.0
    %898 = vmatprep.subr.mxu0 0.0
    %899 = vmatpush1.msra.mxu0 0.0
    %900 = vmatprep.mubr.f32.mxu0 0.0
    %v901 = vand.u32 %v56, 4294901760
    %902 = vmatmul.mubr.f32.gmra.mrb[0].mxu0 %v901
    %v903 = vpop.f32.mrb[0].mxu0
    %v904 = vadd.f32 %v727, %v903
    %v905 = vpop.f32.mrb[0].mxu0
    %v906 = vadd.f32 %v729, %v905
    %907 = vmatprep.mubr.f32.mxu0 0.0
    %v908 = vand.u32 %v57, 4294901760
    %909 = vmatmul.mubr.f32.gmra.mrb[0].mxu0 %v908
    %v910 = vpop.f32.mrb[0].mxu0
    %v911 = vadd.f32 %v736, %v910
    %v912 = vpop.f32.mrb[0].mxu0
    %v913 = vadd.f32 %v738, %v912
    %914 = vdwg.mxu0
    %v915 = vand.u32 %v59, 4294901760
    %916 = vmatprep.subr.mxu0 %v915
    %v917 = vand.u32 %v58, 4294901760
    %918 = vmatpush1.msra.mxu0 %v917
    %v919 = vand.u32 %v63, 4294901760
    %920 = vmatprep.subr.mxu0 %v919
    %v921 = vand.u32 %v62, 4294901760
    %922 = vmatpush1.msra.mxu0 %v921
    %v923 = vand.u32 %v67, 4294901760
    %924 = vmatprep.subr.mxu0 %v923
    %v925 = vand.u32 %v66, 4294901760
    %926 = vmatpush1.msra.mxu0 %v925
    %v927 = vand.u32 %v71, 4294901760
    %928 = vmatprep.subr.mxu0 %v927
    %v929 = vand.u32 %v70, 4294901760
    %930 = vmatpush1.msra.mxu0 %v929
    %v931 = vand.u32 %v75, 4294901760
    %932 = vmatprep.subr.mxu0 %v931
    %v933 = vand.u32 %v74, 4294901760
    %934 = vmatpush1.msra.mxu0 %v933
    %v935 = vand.u32 %v79, 4294901760
    %936 = vmatprep.subr.mxu0 %v935
    %v937 = vand.u32 %v78, 4294901760
    %938 = vmatpush1.msra.mxu0 %v937
    %v939 = vand.u32 %v83, 4294901760
    %940 = vmatprep.subr.mxu0 %v939
    %v941 = vand.u32 %v82, 4294901760
    %942 = vmatpush1.msra.mxu0 %v941
    %v943 = vand.u32 %v87, 4294901760
    %944 = vmatprep.subr.mxu0 %v943
    %v945 = vand.u32 %v86, 4294901760
    %946 = vmatpush1.msra.mxu0 %v945
    %v947 = vand.u32 %v91, 4294901760
    %948 = vmatprep.subr.mxu0 %v947
    %v949 = vand.u32 %v90, 4294901760
    %950 = vmatpush1.msra.mxu0 %v949
    %v951 = vand.u32 %v95, 4294901760
    %952 = vmatprep.subr.mxu0 %v951
    %v953 = vand.u32 %v94, 4294901760
    %954 = vmatpush1.msra.mxu0 %v953
    %v955 = vand.u32 %v99, 4294901760
    %956 = vmatprep.subr.mxu0 %v955
    %v957 = vand.u32 %v98, 4294901760
    %958 = vmatpush1.msra.mxu0 %v957
    %v959 = vand.u32 %v103, 4294901760
    %960 = vmatprep.subr.mxu0 %v959
    %v961 = vand.u32 %v102, 4294901760
    %962 = vmatpush1.msra.mxu0 %v961
    %v963 = vand.u32 %v107, 4294901760
    %964 = vmatprep.subr.mxu0 %v963
    %v965 = vand.u32 %v106, 4294901760
    %966 = vmatpush1.msra.mxu0 %v965
    %v967 = vand.u32 %v111, 4294901760
    %968 = vmatprep.subr.mxu0 %v967
    %v969 = vand.u32 %v110, 4294901760
    %970 = vmatpush1.msra.mxu0 %v969
    %v971 = vand.u32 %v115, 4294901760
    %972 = vmatprep.subr.mxu0 %v971
    %v973 = vand.u32 %v114, 4294901760
    %974 = vmatpush1.msra.mxu0 %v973
    %v975 = vand.u32 %v119, 4294901760
    %976 = vmatprep.subr.mxu0 %v975
    %v977 = vand.u32 %v118, 4294901760
    %978 = vmatpush1.msra.mxu0 %v977
    %979 = vmatprep.subr.mxu0 0.0
    %980 = vmatpush1.msra.mxu0 0.0
    %981 = vmatprep.subr.mxu0 0.0
    %982 = vmatpush1.msra.mxu0 0.0
    %983 = vmatprep.subr.mxu0 0.0
    %984 = vmatpush1.msra.mxu0 0.0
    %985 = vmatprep.subr.mxu0 0.0
    %986 = vmatpush1.msra.mxu0 0.0
    %987 = vmatprep.subr.mxu0 0.0
    %988 = vmatpush1.msra.mxu0 0.0
    %989 = vmatprep.subr.mxu0 0.0
    %990 = vmatpush1.msra.mxu0 0.0
    %991 = vmatprep.subr.mxu0 0.0
    %992 = vmatpush1.msra.mxu0 0.0
    %993 = vmatprep.subr.mxu0 0.0
    %994 = vmatpush1.msra.mxu0 0.0
    %995 = vmatprep.subr.mxu0 0.0
    %996 = vmatpush1.msra.mxu0 0.0
    %997 = vmatprep.subr.mxu0 0.0
    %998 = vmatpush1.msra.mxu0 0.0
    %999 = vmatprep.subr.mxu0 0.0
    %1000 = vmatpush1.msra.mxu0 0.0
    %1001 = vmatprep.subr.mxu0 0.0
    %1002 = vmatpush1.msra.mxu0 0.0
    %1003 = vmatprep.subr.mxu0 0.0
    %1004 = vmatpush1.msra.mxu0 0.0
    %1005 = vmatprep.subr.mxu0 0.0
    %1006 = vmatpush1.msra.mxu0 0.0
    %1007 = vmatprep.subr.mxu0 0.0
    %1008 = vmatpush1.msra.mxu0 0.0
    %1009 = vmatprep.subr.mxu0 0.0
    %1010 = vmatpush1.msra.mxu0 0.0
    %1011 = vmatprep.mubr.f32.mxu0 0.0
    %v1012 = vand.u32 %v56, 4294901760
    %1013 = vmatmul.mubr.f32.gmra.mrb[0].mxu0 %v1012
    %v1014 = vpop.f32.mrb[0].mxu0
    %v1015 = vadd.f32 %v904, %v1014
    %v1016 = vpop.f32.mrb[0].mxu0
    %v1017 = vadd.f32 %v906, %v1016
    %1018 = vmatprep.mubr.f32.mxu0 0.0
    %v1019 = vand.u32 %v57, 4294901760
    %1020 = vmatmul.mubr.f32.gmra.mrb[0].mxu0 %v1019
    %v1021 = vpop.f32.mrb[0].mxu0
    %v1022 = vadd.f32 %v911, %v1021
    %v1023 = vpop.f32.mrb[0].mxu0
    %v1024 = vadd.f32 %v913, %v1023
    %1025 = vdwg.mxu0
    %v1026 = vand.u32 %v61, 4294901760
    %1027 = vmatprep.subr.mxu0 %v1026
    %v1028 = vand.u32 %v60, 4294901760
    %1029 = vmatpush1.msra.mxu0 %v1028
    %v1030 = vand.u32 %v65, 4294901760
    %1031 = vmatprep.subr.mxu0 %v1030
    %v1032 = vand.u32 %v64, 4294901760
    %1033 = vmatpush1.msra.mxu0 %v1032
    %v1034 = vand.u32 %v69, 4294901760
    %1035 = vmatprep.subr.mxu0 %v1034
    %v1036 = vand.u32 %v68, 4294901760
    %1037 = vmatpush1.msra.mxu0 %v1036
    %v1038 = vand.u32 %v73, 4294901760
    %1039 = vmatprep.subr.mxu0 %v1038
    %v1040 = vand.u32 %v72, 4294901760
    %1041 = vmatpush1.msra.mxu0 %v1040
    %v1042 = vand.u32 %v77, 4294901760
    %1043 = vmatprep.subr.mxu0 %v1042
    %v1044 = vand.u32 %v76, 4294901760
    %1045 = vmatpush1.msra.mxu0 %v1044
    %v1046 = vand.u32 %v81, 4294901760
    %1047 = vmatprep.subr.mxu0 %v1046
    %v1048 = vand.u32 %v80, 4294901760
    %1049 = vmatpush1.msra.mxu0 %v1048
    %v1050 = vand.u32 %v85, 4294901760
    %1051 = vmatprep.subr.mxu0 %v1050
    %v1052 = vand.u32 %v84, 4294901760
    %1053 = vmatpush1.msra.mxu0 %v1052
    %v1054 = vand.u32 %v89, 4294901760
    %1055 = vmatprep.subr.mxu0 %v1054
    %v1056 = vand.u32 %v88, 4294901760
    %1057 = vmatpush1.msra.mxu0 %v1056
    %v1058 = vand.u32 %v93, 4294901760
    %1059 = vmatprep.subr.mxu0 %v1058
    %v1060 = vand.u32 %v92, 4294901760
    %1061 = vmatpush1.msra.mxu0 %v1060
    %v1062 = vand.u32 %v97, 4294901760
    %1063 = vmatprep.subr.mxu0 %v1062
    %v1064 = vand.u32 %v96, 4294901760
    %1065 = vmatpush1.msra.mxu0 %v1064
    %v1066 = vand.u32 %v101, 4294901760
    %1067 = vmatprep.subr.mxu0 %v1066
    %v1068 = vand.u32 %v100, 4294901760
    %1069 = vmatpush1.msra.mxu0 %v1068
    %v1070 = vand.u32 %v105, 4294901760
    %1071 = vmatprep.subr.mxu0 %v1070
    %v1072 = vand.u32 %v104, 4294901760
    %1073 = vmatpush1.msra.mxu0 %v1072
    %v1074 = vand.u32 %v109, 4294901760
    %1075 = vmatprep.subr.mxu0 %v1074
    %v1076 = vand.u32 %v108, 4294901760
    %1077 = vmatpush1.msra.mxu0 %v1076
    %v1078 = vand.u32 %v113, 4294901760
    %1079 = vmatprep.subr.mxu0 %v1078
    %v1080 = vand.u32 %v112, 4294901760
    %1081 = vmatpush1.msra.mxu0 %v1080
    %v1082 = vand.u32 %v117, 4294901760
    %1083 = vmatprep.subr.mxu0 %v1082
    %v1084 = vand.u32 %v116, 4294901760
    %1085 = vmatpush1.msra.mxu0 %v1084
    %v1086 = vand.u32 %v121, 4294901760
    %1087 = vmatprep.subr.mxu0 %v1086
    %v1088 = vand.u32 %v120, 4294901760
    %1089 = vmatpush1.msra.mxu0 %v1088
    %1090 = vmatprep.subr.mxu0 0.0
    %1091 = vmatpush1.msra.mxu0 0.0
    %1092 = vmatprep.subr.mxu0 0.0
    %1093 = vmatpush1.msra.mxu0 0.0
    %1094 = vmatprep.subr.mxu0 0.0
    %1095 = vmatpush1.msra.mxu0 0.0
    %1096 = vmatprep.subr.mxu0 0.0
    %1097 = vmatpush1.msra.mxu0 0.0
    %1098 = vmatprep.subr.mxu0 0.0
    %1099 = vmatpush1.msra.mxu0 0.0
    %1100 = vmatprep.subr.mxu0 0.0
    %1101 = vmatpush1.msra.mxu0 0.0
    %1102 = vmatprep.subr.mxu0 0.0
    %1103 = vmatpush1.msra.mxu0 0.0
    %1104 = vmatprep.subr.mxu0 0.0
    %1105 = vmatpush1.msra.mxu0 0.0
    %1106 = vmatprep.subr.mxu0 0.0
    %1107 = vmatpush1.msra.mxu0 0.0
    %1108 = vmatprep.subr.mxu0 0.0
    %1109 = vmatpush1.msra.mxu0 0.0
    %1110 = vmatprep.subr.mxu0 0.0
    %1111 = vmatpush1.msra.mxu0 0.0
    %1112 = vmatprep.subr.mxu0 0.0
    %1113 = vmatpush1.msra.mxu0 0.0
    %1114 = vmatprep.subr.mxu0 0.0
    %1115 = vmatpush1.msra.mxu0 0.0
    %1116 = vmatprep.subr.mxu0 0.0
    %1117 = vmatpush1.msra.mxu0 0.0
    %1118 = vmatprep.subr.mxu0 0.0
    %1119 = vmatpush1.msra.mxu0 0.0
    %1120 = vmatprep.subr.mxu0 0.0
    %1121 = vmatpush1.msra.mxu0 0.0
    %1122 = vmatprep.mubr.f32.mxu0 0.0
    %v1123 = vand.u32 %v56, 4294901760
    %v1124 = vsub.f32 %v56, %v1123
    %v1125 = vand.u32 %v1124, 4294901760
    %v1126 = vsub.f32 %v1124, %v1125
    %v1127 = vand.u32 %v1126, 4294901760
    %1128 = vmatmul.mubr.f32.gmra.mrb[0].mxu0 %v1127
    %v1129 = vpop.f32.mrb[0].mxu0
    %v1130 = vadd.f32 0.0, %v1129
    %v1131 = vpop.f32.mrb[0].mxu0
    %v1132 = vadd.f32 0.0, %v1131
    %1133 = vmatprep.mubr.f32.mxu0 0.0
    %v1134 = vand.u32 %v57, 4294901760
    %v1135 = vsub.f32 %v57, %v1134
    %v1136 = vand.u32 %v1135, 4294901760
    %v1137 = vsub.f32 %v1135, %v1136
    %v1138 = vand.u32 %v1137, 4294901760
    %1139 = vmatmul.mubr.f32.gmra.mrb[0].mxu0 %v1138
    %v1140 = vpop.f32.mrb[0].mxu0
    %v1141 = vadd.f32 0.0, %v1140
    %v1142 = vpop.f32.mrb[0].mxu0
    %v1143 = vadd.f32 0.0, %v1142
    %1144 = vdwg.mxu0
    %v1145 = vand.u32 %v61, 4294901760
    %v1146 = vsub.f32 %v61, %v1145
    %v1147 = vand.u32 %v1146, 4294901760
    %v1148 = vsub.f32 %v1146, %v1147
    %v1149 = vand.u32 %v1148, 4294901760
    %1150 = vmatprep.subr.mxu0 %v1149
    %v1151 = vand.u32 %v60, 4294901760
    %v1152 = vsub.f32 %v60, %v1151
    %v1153 = vand.u32 %v1152, 4294901760
    %v1154 = vsub.f32 %v1152, %v1153
    %v1155 = vand.u32 %v1154, 4294901760
    %1156 = vmatpush1.msra.mxu0 %v1155
    %v1157 = vand.u32 %v65, 4294901760
    %v1158 = vsub.f32 %v65, %v1157
    %v1159 = vand.u32 %v1158, 4294901760
    %v1160 = vsub.f32 %v1158, %v1159
    %v1161 = vand.u32 %v1160, 4294901760
    %1162 = vmatprep.subr.mxu0 %v1161
    %v1163 = vand.u32 %v64, 4294901760
    %v1164 = vsub.f32 %v64, %v1163
    %v1165 = vand.u32 %v1164, 4294901760
    %v1166 = vsub.f32 %v1164, %v1165
    %v1167 = vand.u32 %v1166, 4294901760
    %1168 = vmatpush1.msra.mxu0 %v1167
    %v1169 = vand.u32 %v69, 4294901760
    %v1170 = vsub.f32 %v69, %v1169
    %v1171 = vand.u32 %v1170, 4294901760
    %v1172 = vsub.f32 %v1170, %v1171
    %v1173 = vand.u32 %v1172, 4294901760
    %1174 = vmatprep.subr.mxu0 %v1173
    %v1175 = vand.u32 %v68, 4294901760
    %v1176 = vsub.f32 %v68, %v1175
    %v1177 = vand.u32 %v1176, 4294901760
    %v1178 = vsub.f32 %v1176, %v1177
    %v1179 = vand.u32 %v1178, 4294901760
    %1180 = vmatpush1.msra.mxu0 %v1179
    %v1181 = vand.u32 %v73, 4294901760
    %v1182 = vsub.f32 %v73, %v1181
    %v1183 = vand.u32 %v1182, 4294901760
    %v1184 = vsub.f32 %v1182, %v1183
    %v1185 = vand.u32 %v1184, 4294901760
    %1186 = vmatprep.subr.mxu0 %v1185
    %v1187 = vand.u32 %v72, 4294901760
    %v1188 = vsub.f32 %v72, %v1187
    %v1189 = vand.u32 %v1188, 4294901760
    %v1190 = vsub.f32 %v1188, %v1189
    %v1191 = vand.u32 %v1190, 4294901760
    %1192 = vmatpush1.msra.mxu0 %v1191
    %v1193 = vand.u32 %v77, 4294901760
    %v1194 = vsub.f32 %v77, %v1193
    %v1195 = vand.u32 %v1194, 4294901760
    %v1196 = vsub.f32 %v1194, %v1195
    %v1197 = vand.u32 %v1196, 4294901760
    %1198 = vmatprep.subr.mxu0 %v1197
    %v1199 = vand.u32 %v76, 4294901760
    %v1200 = vsub.f32 %v76, %v1199
    %v1201 = vand.u32 %v1200, 4294901760
    %v1202 = vsub.f32 %v1200, %v1201
    %v1203 = vand.u32 %v1202, 4294901760
    %1204 = vmatpush1.msra.mxu0 %v1203
    %v1205 = vand.u32 %v81, 4294901760
    %v1206 = vsub.f32 %v81, %v1205
    %v1207 = vand.u32 %v1206, 4294901760
    %v1208 = vsub.f32 %v1206, %v1207
    %v1209 = vand.u32 %v1208, 4294901760
    %1210 = vmatprep.subr.mxu0 %v1209
    %v1211 = vand.u32 %v80, 4294901760
    %v1212 = vsub.f32 %v80, %v1211
    %v1213 = vand.u32 %v1212, 4294901760
    %v1214 = vsub.f32 %v1212, %v1213
    %v1215 = vand.u32 %v1214, 4294901760
    %1216 = vmatpush1.msra.mxu0 %v1215
    %v1217 = vand.u32 %v85, 4294901760
    %v1218 = vsub.f32 %v85, %v1217
    %v1219 = vand.u32 %v1218, 4294901760
    %v1220 = vsub.f32 %v1218, %v1219
    %v1221 = vand.u32 %v1220, 4294901760
    %1222 = vmatprep.subr.mxu0 %v1221
    %v1223 = vand.u32 %v84, 4294901760
    %v1224 = vsub.f32 %v84, %v1223
    %v1225 = vand.u32 %v1224, 4294901760
    %v1226 = vsub.f32 %v1224, %v1225
    %v1227 = vand.u32 %v1226, 4294901760
    %1228 = vmatpush1.msra.mxu0 %v1227
    %v1229 = vand.u32 %v89, 4294901760
    %v1230 = vsub.f32 %v89, %v1229
    %v1231 = vand.u32 %v1230, 4294901760
    %v1232 = vsub.f32 %v1230, %v1231
    %v1233 = vand.u32 %v1232, 4294901760
    %1234 = vmatprep.subr.mxu0 %v1233
    %v1235 = vand.u32 %v88, 4294901760
    %v1236 = vsub.f32 %v88, %v1235
    %v1237 = vand.u32 %v1236, 4294901760
    %v1238 = vsub.f32 %v1236, %v1237
    %v1239 = vand.u32 %v1238, 4294901760
    %1240 = vmatpush1.msra.mxu0 %v1239
    %v1241 = vand.u32 %v93, 4294901760
    %v1242 = vsub.f32 %v93, %v1241
    %v1243 = vand.u32 %v1242, 4294901760
    %v1244 = vsub.f32 %v1242, %v1243
    %v1245 = vand.u32 %v1244, 4294901760
    %1246 = vmatprep.subr.mxu0 %v1245
    %v1247 = vand.u32 %v92, 4294901760
    %v1248 = vsub.f32 %v92, %v1247
    %v1249 = vand.u32 %v1248, 4294901760
    %v1250 = vsub.f32 %v1248, %v1249
    %v1251 = vand.u32 %v1250, 4294901760
    %1252 = vmatpush1.msra.mxu0 %v1251
    %v1253 = vand.u32 %v97, 4294901760
    %v1254 = vsub.f32 %v97, %v1253
    %v1255 = vand.u32 %v1254, 4294901760
    %v1256 = vsub.f32 %v1254, %v1255
    %v1257 = vand.u32 %v1256, 4294901760
    %1258 = vmatprep.subr.mxu0 %v1257
    %v1259 = vand.u32 %v96, 4294901760
    %v1260 = vsub.f32 %v96, %v1259
    %v1261 = vand.u32 %v1260, 4294901760
    %v1262 = vsub.f32 %v1260, %v1261
    %v1263 = vand.u32 %v1262, 4294901760
    %1264 = vmatpush1.msra.mxu0 %v1263
    %v1265 = vand.u32 %v101, 4294901760
    %v1266 = vsub.f32 %v101, %v1265
    %v1267 = vand.u32 %v1266, 4294901760
    %v1268 = vsub.f32 %v1266, %v1267
    %v1269 = vand.u32 %v1268, 4294901760
    %1270 = vmatprep.subr.mxu0 %v1269
    %v1271 = vand.u32 %v100, 4294901760
    %v1272 = vsub.f32 %v100, %v1271
    %v1273 = vand.u32 %v1272, 4294901760
    %v1274 = vsub.f32 %v1272, %v1273
    %v1275 = vand.u32 %v1274, 4294901760
    %1276 = vmatpush1.msra.mxu0 %v1275
    %v1277 = vand.u32 %v105, 4294901760
    %v1278 = vsub.f32 %v105, %v1277
    %v1279 = vand.u32 %v1278, 4294901760
    %v1280 = vsub.f32 %v1278, %v1279
    %v1281 = vand.u32 %v1280, 4294901760
    %1282 = vmatprep.subr.mxu0 %v1281
    %v1283 = vand.u32 %v104, 4294901760
    %v1284 = vsub.f32 %v104, %v1283
    %v1285 = vand.u32 %v1284, 4294901760
    %v1286 = vsub.f32 %v1284, %v1285
    %v1287 = vand.u32 %v1286, 4294901760
    %1288 = vmatpush1.msra.mxu0 %v1287
    %v1289 = vand.u32 %v109, 4294901760
    %v1290 = vsub.f32 %v109, %v1289
    %v1291 = vand.u32 %v1290, 4294901760
    %v1292 = vsub.f32 %v1290, %v1291
    %v1293 = vand.u32 %v1292, 4294901760
    %1294 = vmatprep.subr.mxu0 %v1293
    %v1295 = vand.u32 %v108, 4294901760
    %v1296 = vsub.f32 %v108, %v1295
    %v1297 = vand.u32 %v1296, 4294901760
    %v1298 = vsub.f32 %v1296, %v1297
    %v1299 = vand.u32 %v1298, 4294901760
    %1300 = vmatpush1.msra.mxu0 %v1299
    %v1301 = vand.u32 %v113, 4294901760
    %v1302 = vsub.f32 %v113, %v1301
    %v1303 = vand.u32 %v1302, 4294901760
    %v1304 = vsub.f32 %v1302, %v1303
    %v1305 = vand.u32 %v1304, 4294901760
    %1306 = vmatprep.subr.mxu0 %v1305
    %v1307 = vand.u32 %v112, 4294901760
    %v1308 = vsub.f32 %v112, %v1307
    %v1309 = vand.u32 %v1308, 4294901760
    %v1310 = vsub.f32 %v1308, %v1309
    %v1311 = vand.u32 %v1310, 4294901760
    %1312 = vmatpush1.msra.mxu0 %v1311
    %v1313 = vand.u32 %v117, 4294901760
    %v1314 = vsub.f32 %v117, %v1313
    %v1315 = vand.u32 %v1314, 4294901760
    %v1316 = vsub.f32 %v1314, %v1315
    %v1317 = vand.u32 %v1316, 4294901760
    %1318 = vmatprep.subr.mxu0 %v1317
    %v1319 = vand.u32 %v116, 4294901760
    %v1320 = vsub.f32 %v116, %v1319
    %v1321 = vand.u32 %v1320, 4294901760
    %v1322 = vsub.f32 %v1320, %v1321
    %v1323 = vand.u32 %v1322, 4294901760
    %1324 = vmatpush1.msra.mxu0 %v1323
    %v1325 = vand.u32 %v121, 4294901760
    %v1326 = vsub.f32 %v121, %v1325
    %v1327 = vand.u32 %v1326, 4294901760
    %v1328 = vsub.f32 %v1326, %v1327
    %v1329 = vand.u32 %v1328, 4294901760
    %1330 = vmatprep.subr.mxu0 %v1329
    %v1331 = vand.u32 %v120, 4294901760
    %v1332 = vsub.f32 %v120, %v1331
    %v1333 = vand.u32 %v1332, 4294901760
    %v1334 = vsub.f32 %v1332, %v1333
    %v1335 = vand.u32 %v1334, 4294901760
    %1336 = vmatpush1.msra.mxu0 %v1335
    %1337 = vmatprep.subr.mxu0 0.0
    %1338 = vmatpush1.msra.mxu0 0.0
    %1339 = vmatprep.subr.mxu0 0.0
    %1340 = vmatpush1.msra.mxu0 0.0
    %1341 = vmatprep.subr.mxu0 0.0
    %1342 = vmatpush1.msra.mxu0 0.0
    %1343 = vmatprep.subr.mxu0 0.0
    %1344 = vmatpush1.msra.mxu0 0.0
    %1345 = vmatprep.subr.mxu0 0.0
    %1346 = vmatpush1.msra.mxu0 0.0
    %1347 = vmatprep.subr.mxu0 0.0
    %1348 = vmatpush1.msra.mxu0 0.0
    %1349 = vmatprep.subr.mxu0 0.0
    %1350 = vmatpush1.msra.mxu0 0.0
    %1351 = vmatprep.subr.mxu0 0.0
    %1352 = vmatpush1.msra.mxu0 0.0
    %1353 = vmatprep.subr.mxu0 0.0
    %1354 = vmatpush1.msra.mxu0 0.0
    %1355 = vmatprep.subr.mxu0 0.0
    %1356 = vmatpush1.msra.mxu0 0.0
    %1357 = vmatprep.subr.mxu0 0.0
    %1358 = vmatpush1.msra.mxu0 0.0
    %1359 = vmatprep.subr.mxu0 0.0
    %1360 = vmatpush1.msra.mxu0 0.0
    %1361 = vmatprep.subr.mxu0 0.0
    %1362 = vmatpush1.msra.mxu0 0.0
    %1363 = vmatprep.subr.mxu0 0.0
    %1364 = vmatpush1.msra.mxu0 0.0
    %1365 = vmatprep.subr.mxu0 0.0
    %1366 = vmatpush1.msra.mxu0 0.0
    %1367 = vmatprep.subr.mxu0 0.0
    %1368 = vmatpush1.msra.mxu0 0.0
    %1369 = vmatprep.mubr.f32.mxu0 0.0
    %v1370 = vand.u32 %v56, 4294901760
    %1371 = vmatmul.mubr.f32.gmra.mrb[0].mxu0 %v1370
    %v1372 = vpop.f32.mrb[0].mxu0
    %v1373 = vadd.f32 %v1130, %v1372
    %v1374 = vpop.f32.mrb[0].mxu0
    %v1375 = vadd.f32 %v1132, %v1374
    %1376 = vmatprep.mubr.f32.mxu0 0.0
    %v1377 = vand.u32 %v57, 4294901760
    %1378 = vmatmul.mubr.f32.gmra.mrb[0].mxu0 %v1377
    %v1379 = vpop.f32.mrb[0].mxu0
    %v1380 = vadd.f32 %v1141, %v1379
    %v1381 = vpop.f32.mrb[0].mxu0
    %v1382 = vadd.f32 %v1143, %v1381
    %1383 = vdwg.mxu0
    %v1384 = vand.u32 %v61, 4294901760
    %v1385 = vsub.f32 %v61, %v1384
    %1386 = vmatprep.subr.mxu0 %v1385
    %v1387 = vand.u32 %v60, 4294901760
    %v1388 = vsub.f32 %v60, %v1387
    %1389 = vmatpush1.msra.mxu0 %v1388
    %v1390 = vand.u32 %v65, 4294901760
    %v1391 = vsub.f32 %v65, %v1390
    %1392 = vmatprep.subr.mxu0 %v1391
    %v1393 = vand.u32 %v64, 4294901760
    %v1394 = vsub.f32 %v64, %v1393
    %1395 = vmatpush1.msra.mxu0 %v1394
    %v1396 = vand.u32 %v69, 4294901760
    %v1397 = vsub.f32 %v69, %v1396
    %1398 = vmatprep.subr.mxu0 %v1397
    %v1399 = vand.u32 %v68, 4294901760
    %v1400 = vsub.f32 %v68, %v1399
    %1401 = vmatpush1.msra.mxu0 %v1400
    %v1402 = vand.u32 %v73, 4294901760
    %v1403 = vsub.f32 %v73, %v1402
    %1404 = vmatprep.subr.mxu0 %v1403
    %v1405 = vand.u32 %v72, 4294901760
    %v1406 = vsub.f32 %v72, %v1405
    %1407 = vmatpush1.msra.mxu0 %v1406
    %v1408 = vand.u32 %v77, 4294901760
    %v1409 = vsub.f32 %v77, %v1408
    %1410 = vmatprep.subr.mxu0 %v1409
    %v1411 = vand.u32 %v76, 4294901760
    %v1412 = vsub.f32 %v76, %v1411
    %1413 = vmatpush1.msra.mxu0 %v1412
    %v1414 = vand.u32 %v81, 4294901760
    %v1415 = vsub.f32 %v81, %v1414
    %1416 = vmatprep.subr.mxu0 %v1415
    %v1417 = vand.u32 %v80, 4294901760
    %v1418 = vsub.f32 %v80, %v1417
    %1419 = vmatpush1.msra.mxu0 %v1418
    %v1420 = vand.u32 %v85, 4294901760
    %v1421 = vsub.f32 %v85, %v1420
    %1422 = vmatprep.subr.mxu0 %v1421
    %v1423 = vand.u32 %v84, 4294901760
    %v1424 = vsub.f32 %v84, %v1423
    %1425 = vmatpush1.msra.mxu0 %v1424
    %v1426 = vand.u32 %v89, 4294901760
    %v1427 = vsub.f32 %v89, %v1426
    %1428 = vmatprep.subr.mxu0 %v1427
    %v1429 = vand.u32 %v88, 4294901760
    %v1430 = vsub.f32 %v88, %v1429
    %1431 = vmatpush1.msra.mxu0 %v1430
    %v1432 = vand.u32 %v93, 4294901760
    %v1433 = vsub.f32 %v93, %v1432
    %1434 = vmatprep.subr.mxu0 %v1433
    %v1435 = vand.u32 %v92, 4294901760
    %v1436 = vsub.f32 %v92, %v1435
    %1437 = vmatpush1.msra.mxu0 %v1436
    %v1438 = vand.u32 %v97, 4294901760
    %v1439 = vsub.f32 %v97, %v1438
    %1440 = vmatprep.subr.mxu0 %v1439
    %v1441 = vand.u32 %v96, 4294901760
    %v1442 = vsub.f32 %v96, %v1441
    %1443 = vmatpush1.msra.mxu0 %v1442
    %v1444 = vand.u32 %v101, 4294901760
    %v1445 = vsub.f32 %v101, %v1444
    %1446 = vmatprep.subr.mxu0 %v1445
    %v1447 = vand.u32 %v100, 4294901760
    %v1448 = vsub.f32 %v100, %v1447
    %1449 = vmatpush1.msra.mxu0 %v1448
    %v1450 = vand.u32 %v105, 4294901760
    %v1451 = vsub.f32 %v105, %v1450
    %1452 = vmatprep.subr.mxu0 %v1451
    %v1453 = vand.u32 %v104, 4294901760
    %v1454 = vsub.f32 %v104, %v1453
    %1455 = vmatpush1.msra.mxu0 %v1454
    %v1456 = vand.u32 %v109, 4294901760
    %v1457 = vsub.f32 %v109, %v1456
    %1458 = vmatprep.subr.mxu0 %v1457
    %v1459 = vand.u32 %v108, 4294901760
    %v1460 = vsub.f32 %v108, %v1459
    %1461 = vmatpush1.msra.mxu0 %v1460
    %v1462 = vand.u32 %v113, 4294901760
    %v1463 = vsub.f32 %v113, %v1462
    %1464 = vmatprep.subr.mxu0 %v1463
    %v1465 = vand.u32 %v112, 4294901760
    %v1466 = vsub.f32 %v112, %v1465
    %1467 = vmatpush1.msra.mxu0 %v1466
    %v1468 = vand.u32 %v117, 4294901760
    %v1469 = vsub.f32 %v117, %v1468
    %1470 = vmatprep.subr.mxu0 %v1469
    %v1471 = vand.u32 %v116, 4294901760
    %v1472 = vsub.f32 %v116, %v1471
    %1473 = vmatpush1.msra.mxu0 %v1472
    %v1474 = vand.u32 %v121, 4294901760
    %v1475 = vsub.f32 %v121, %v1474
    %1476 = vmatprep.subr.mxu0 %v1475
    %v1477 = vand.u32 %v120, 4294901760
    %v1478 = vsub.f32 %v120, %v1477
    %1479 = vmatpush1.msra.mxu0 %v1478
    %1480 = vmatprep.subr.mxu0 0.0
    %1481 = vmatpush1.msra.mxu0 0.0
    %1482 = vmatprep.subr.mxu0 0.0
    %1483 = vmatpush1.msra.mxu0 0.0
    %1484 = vmatprep.subr.mxu0 0.0
    %1485 = vmatpush1.msra.mxu0 0.0
    %1486 = vmatprep.subr.mxu0 0.0
    %1487 = vmatpush1.msra.mxu0 0.0
    %1488 = vmatprep.subr.mxu0 0.0
    %1489 = vmatpush1.msra.mxu0 0.0
    %1490 = vmatprep.subr.mxu0 0.0
    %1491 = vmatpush1.msra.mxu0 0.0
    %1492 = vmatprep.subr.mxu0 0.0
    %1493 = vmatpush1.msra.mxu0 0.0
    %1494 = vmatprep.subr.mxu0 0.0
    %1495 = vmatpush1.msra.mxu0 0.0
    %1496 = vmatprep.subr.mxu0 0.0
    %1497 = vmatpush1.msra.mxu0 0.0
    %1498 = vmatprep.subr.mxu0 0.0
    %1499 = vmatpush1.msra.mxu0 0.0
    %1500 = vmatprep.subr.mxu0 0.0
    %1501 = vmatpush1.msra.mxu0 0.0
    %1502 = vmatprep.subr.mxu0 0.0
    %1503 = vmatpush1.msra.mxu0 0.0
    %1504 = vmatprep.subr.mxu0 0.0
    %1505 = vmatpush1.msra.mxu0 0.0
    %1506 = vmatprep.subr.mxu0 0.0
    %1507 = vmatpush1.msra.mxu0 0.0
    %1508 = vmatprep.subr.mxu0 0.0
    %1509 = vmatpush1.msra.mxu0 0.0
    %1510 = vmatprep.subr.mxu0 0.0
    %1511 = vmatpush1.msra.mxu0 0.0
    %1512 = vmatprep.mubr.f32.mxu0 0.0
    %v1513 = vand.u32 %v56, 4294901760
    %v1514 = vsub.f32 %v56, %v1513
    %1515 = vmatmul.mubr.f32.gmra.mrb[0].mxu0 %v1514
    %v1516 = vpop.f32.mrb[0].mxu0
    %v1517 = vadd.f32 %v1373, %v1516
    %v1518 = vpop.f32.mrb[0].mxu0
    %v1519 = vadd.f32 %v1375, %v1518
    %1520 = vmatprep.mubr.f32.mxu0 0.0
    %v1521 = vand.u32 %v57, 4294901760
    %v1522 = vsub.f32 %v57, %v1521
    %1523 = vmatmul.mubr.f32.gmra.mrb[0].mxu0 %v1522
    %v1524 = vpop.f32.mrb[0].mxu0
    %v1525 = vadd.f32 %v1380, %v1524
    %v1526 = vpop.f32.mrb[0].mxu0
    %v1527 = vadd.f32 %v1382, %v1526
    %1528 = vdwg.mxu0
    %v1529 = vand.u32 %v61, 4294901760
    %1530 = vmatprep.subr.mxu0 %v1529
    %v1531 = vand.u32 %v60, 4294901760
    %1532 = vmatpush1.msra.mxu0 %v1531
    %v1533 = vand.u32 %v65, 4294901760
    %1534 = vmatprep.subr.mxu0 %v1533
    %v1535 = vand.u32 %v64, 4294901760
    %1536 = vmatpush1.msra.mxu0 %v1535
    %v1537 = vand.u32 %v69, 4294901760
    %1538 = vmatprep.subr.mxu0 %v1537
    %v1539 = vand.u32 %v68, 4294901760
    %1540 = vmatpush1.msra.mxu0 %v1539
    %v1541 = vand.u32 %v73, 4294901760
    %1542 = vmatprep.subr.mxu0 %v1541
    %v1543 = vand.u32 %v72, 4294901760
    %1544 = vmatpush1.msra.mxu0 %v1543
    %v1545 = vand.u32 %v77, 4294901760
    %1546 = vmatprep.subr.mxu0 %v1545
    %v1547 = vand.u32 %v76, 4294901760
    %1548 = vmatpush1.msra.mxu0 %v1547
    %v1549 = vand.u32 %v81, 4294901760
    %1550 = vmatprep.subr.mxu0 %v1549
    %v1551 = vand.u32 %v80, 4294901760
    %1552 = vmatpush1.msra.mxu0 %v1551
    %v1553 = vand.u32 %v85, 4294901760
    %1554 = vmatprep.subr.mxu0 %v1553
    %v1555 = vand.u32 %v84, 4294901760
    %1556 = vmatpush1.msra.mxu0 %v1555
    %v1557 = vand.u32 %v89, 4294901760
    %1558 = vmatprep.subr.mxu0 %v1557
    %v1559 = vand.u32 %v88, 4294901760
    %1560 = vmatpush1.msra.mxu0 %v1559
    %v1561 = vand.u32 %v93, 4294901760
    %1562 = vmatprep.subr.mxu0 %v1561
    %v1563 = vand.u32 %v92, 4294901760
    %1564 = vmatpush1.msra.mxu0 %v1563
    %v1565 = vand.u32 %v97, 4294901760
    %1566 = vmatprep.subr.mxu0 %v1565
    %v1567 = vand.u32 %v96, 4294901760
    %1568 = vmatpush1.msra.mxu0 %v1567
    %v1569 = vand.u32 %v101, 4294901760
    %1570 = vmatprep.subr.mxu0 %v1569
    %v1571 = vand.u32 %v100, 4294901760
    %1572 = vmatpush1.msra.mxu0 %v1571
    %v1573 = vand.u32 %v105, 4294901760
    %1574 = vmatprep.subr.mxu0 %v1573
    %v1575 = vand.u32 %v104, 4294901760
    %1576 = vmatpush1.msra.mxu0 %v1575
    %v1577 = vand.u32 %v109, 4294901760
    %1578 = vmatprep.subr.mxu0 %v1577
    %v1579 = vand.u32 %v108, 4294901760
    %1580 = vmatpush1.msra.mxu0 %v1579
    %v1581 = vand.u32 %v113, 4294901760
    %1582 = vmatprep.subr.mxu0 %v1581
    %v1583 = vand.u32 %v112, 4294901760
    %1584 = vmatpush1.msra.mxu0 %v1583
    %v1585 = vand.u32 %v117, 4294901760
    %1586 = vmatprep.subr.mxu0 %v1585
    %v1587 = vand.u32 %v116, 4294901760
    %1588 = vmatpush1.msra.mxu0 %v1587
    %v1589 = vand.u32 %v121, 4294901760
    %1590 = vmatprep.subr.mxu0 %v1589
    %v1591 = vand.u32 %v120, 4294901760
    %1592 = vmatpush1.msra.mxu0 %v1591
    %1593 = vmatprep.subr.mxu0 0.0
    %1594 = vmatpush1.msra.mxu0 0.0
    %1595 = vmatprep.subr.mxu0 0.0
    %1596 = vmatpush1.msra.mxu0 0.0
    %1597 = vmatprep.subr.mxu0 0.0
    %1598 = vmatpush1.msra.mxu0 0.0
    %1599 = vmatprep.subr.mxu0 0.0
    %1600 = vmatpush1.msra.mxu0 0.0
    %1601 = vmatprep.subr.mxu0 0.0
    %1602 = vmatpush1.msra.mxu0 0.0
    %1603 = vmatprep.subr.mxu0 0.0
    %1604 = vmatpush1.msra.mxu0 0.0
    %1605 = vmatprep.subr.mxu0 0.0
    %1606 = vmatpush1.msra.mxu0 0.0
    %1607 = vmatprep.subr.mxu0 0.0
    %1608 = vmatpush1.msra.mxu0 0.0
    %1609 = vmatprep.subr.mxu0 0.0
    %1610 = vmatpush1.msra.mxu0 0.0
    %1611 = vmatprep.subr.mxu0 0.0
    %1612 = vmatpush1.msra.mxu0 0.0
    %1613 = vmatprep.subr.mxu0 0.0
    %1614 = vmatpush1.msra.mxu0 0.0
    %1615 = vmatprep.subr.mxu0 0.0
    %1616 = vmatpush1.msra.mxu0 0.0
    %1617 = vmatprep.subr.mxu0 0.0
    %1618 = vmatpush1.msra.mxu0 0.0
    %1619 = vmatprep.subr.mxu0 0.0
    %1620 = vmatpush1.msra.mxu0 0.0
    %1621 = vmatprep.subr.mxu0 0.0
    %1622 = vmatpush1.msra.mxu0 0.0
    %1623 = vmatprep.subr.mxu0 0.0
    %1624 = vmatpush1.msra.mxu0 0.0
    %1625 = vmatprep.mubr.f32.mxu0 0.0
    %v1626 = vand.u32 %v56, 4294901760
    %v1627 = vsub.f32 %v56, %v1626
    %v1628 = vand.u32 %v1627, 4294901760
    %1629 = vmatmul.mubr.f32.gmra.mrb[0].mxu0 %v1628
    %v1630 = vpop.f32.mrb[0].mxu0
    %v1631 = vadd.f32 %v1517, %v1630
    %v1632 = vpop.f32.mrb[0].mxu0
    %v1633 = vadd.f32 %v1519, %v1632
    %1634 = vmatprep.mubr.f32.mxu0 0.0
    %v1635 = vand.u32 %v57, 4294901760
    %v1636 = vsub.f32 %v57, %v1635
    %v1637 = vand.u32 %v1636, 4294901760
    %1638 = vmatmul.mubr.f32.gmra.mrb[0].mxu0 %v1637
    %v1639 = vpop.f32.mrb[0].mxu0
    %v1640 = vadd.f32 %v1525, %v1639
    %v1641 = vpop.f32.mrb[0].mxu0
    %v1642 = vadd.f32 %v1527, %v1641
    %1643 = vdwg.mxu0
    %v1644 = vand.u32 %v61, 4294901760
    %v1645 = vsub.f32 %v61, %v1644
    %v1646 = vand.u32 %v1645, 4294901760
    %1647 = vmatprep.subr.mxu0 %v1646
    %v1648 = vand.u32 %v60, 4294901760
    %v1649 = vsub.f32 %v60, %v1648
    %v1650 = vand.u32 %v1649, 4294901760
    %1651 = vmatpush1.msra.mxu0 %v1650
    %v1652 = vand.u32 %v65, 4294901760
    %v1653 = vsub.f32 %v65, %v1652
    %v1654 = vand.u32 %v1653, 4294901760
    %1655 = vmatprep.subr.mxu0 %v1654
    %v1656 = vand.u32 %v64, 4294901760
    %v1657 = vsub.f32 %v64, %v1656
    %v1658 = vand.u32 %v1657, 4294901760
    %1659 = vmatpush1.msra.mxu0 %v1658
    %v1660 = vand.u32 %v69, 4294901760
    %v1661 = vsub.f32 %v69, %v1660
    %v1662 = vand.u32 %v1661, 4294901760
    %1663 = vmatprep.subr.mxu0 %v1662
    %v1664 = vand.u32 %v68, 4294901760
    %v1665 = vsub.f32 %v68, %v1664
    %v1666 = vand.u32 %v1665, 4294901760
    %1667 = vmatpush1.msra.mxu0 %v1666
    %v1668 = vand.u32 %v73, 4294901760
    %v1669 = vsub.f32 %v73, %v1668
    %v1670 = vand.u32 %v1669, 4294901760
    %1671 = vmatprep.subr.mxu0 %v1670
    %v1672 = vand.u32 %v72, 4294901760
    %v1673 = vsub.f32 %v72, %v1672
    %v1674 = vand.u32 %v1673, 4294901760
    %1675 = vmatpush1.msra.mxu0 %v1674
    %v1676 = vand.u32 %v77, 4294901760
    %v1677 = vsub.f32 %v77, %v1676
    %v1678 = vand.u32 %v1677, 4294901760
    %1679 = vmatprep.subr.mxu0 %v1678
    %v1680 = vand.u32 %v76, 4294901760
    %v1681 = vsub.f32 %v76, %v1680
    %v1682 = vand.u32 %v1681, 4294901760
    %1683 = vmatpush1.msra.mxu0 %v1682
    %v1684 = vand.u32 %v81, 4294901760
    %v1685 = vsub.f32 %v81, %v1684
    %v1686 = vand.u32 %v1685, 4294901760
    %1687 = vmatprep.subr.mxu0 %v1686
    %v1688 = vand.u32 %v80, 4294901760
    %v1689 = vsub.f32 %v80, %v1688
    %v1690 = vand.u32 %v1689, 4294901760
    %1691 = vmatpush1.msra.mxu0 %v1690
    %v1692 = vand.u32 %v85, 4294901760
    %v1693 = vsub.f32 %v85, %v1692
    %v1694 = vand.u32 %v1693, 4294901760
    %1695 = vmatprep.subr.mxu0 %v1694
    %v1696 = vand.u32 %v84, 4294901760
    %v1697 = vsub.f32 %v84, %v1696
    %v1698 = vand.u32 %v1697, 4294901760
    %1699 = vmatpush1.msra.mxu0 %v1698
    %v1700 = vand.u32 %v89, 4294901760
    %v1701 = vsub.f32 %v89, %v1700
    %v1702 = vand.u32 %v1701, 4294901760
    %1703 = vmatprep.subr.mxu0 %v1702
    %v1704 = vand.u32 %v88, 4294901760
    %v1705 = vsub.f32 %v88, %v1704
    %v1706 = vand.u32 %v1705, 4294901760
    %1707 = vmatpush1.msra.mxu0 %v1706
    %v1708 = vand.u32 %v93, 4294901760
    %v1709 = vsub.f32 %v93, %v1708
    %v1710 = vand.u32 %v1709, 4294901760
    %1711 = vmatprep.subr.mxu0 %v1710
    %v1712 = vand.u32 %v92, 4294901760
    %v1713 = vsub.f32 %v92, %v1712
    %v1714 = vand.u32 %v1713, 4294901760
    %1715 = vmatpush1.msra.mxu0 %v1714
    %v1716 = vand.u32 %v97, 4294901760
    %v1717 = vsub.f32 %v97, %v1716
    %v1718 = vand.u32 %v1717, 4294901760
    %1719 = vmatprep.subr.mxu0 %v1718
    %v1720 = vand.u32 %v96, 4294901760
    %v1721 = vsub.f32 %v96, %v1720
    %v1722 = vand.u32 %v1721, 4294901760
    %1723 = vmatpush1.msra.mxu0 %v1722
    %v1724 = vand.u32 %v101, 4294901760
    %v1725 = vsub.f32 %v101, %v1724
    %v1726 = vand.u32 %v1725, 4294901760
    %1727 = vmatprep.subr.mxu0 %v1726
    %v1728 = vand.u32 %v100, 4294901760
    %v1729 = vsub.f32 %v100, %v1728
    %v1730 = vand.u32 %v1729, 4294901760
    %1731 = vmatpush1.msra.mxu0 %v1730
    %v1732 = vand.u32 %v105, 4294901760
    %v1733 = vsub.f32 %v105, %v1732
    %v1734 = vand.u32 %v1733, 4294901760
    %1735 = vmatprep.subr.mxu0 %v1734
    %v1736 = vand.u32 %v104, 4294901760
    %v1737 = vsub.f32 %v104, %v1736
    %v1738 = vand.u32 %v1737, 4294901760
    %1739 = vmatpush1.msra.mxu0 %v1738
    %v1740 = vand.u32 %v109, 4294901760
    %v1741 = vsub.f32 %v109, %v1740
    %v1742 = vand.u32 %v1741, 4294901760
    %1743 = vmatprep.subr.mxu0 %v1742
    %v1744 = vand.u32 %v108, 4294901760
    %v1745 = vsub.f32 %v108, %v1744
    %v1746 = vand.u32 %v1745, 4294901760
    %1747 = vmatpush1.msra.mxu0 %v1746
    %v1748 = vand.u32 %v113, 4294901760
    %v1749 = vsub.f32 %v113, %v1748
    %v1750 = vand.u32 %v1749, 4294901760
    %1751 = vmatprep.subr.mxu0 %v1750
    %v1752 = vand.u32 %v112, 4294901760
    %v1753 = vsub.f32 %v112, %v1752
    %v1754 = vand.u32 %v1753, 4294901760
    %1755 = vmatpush1.msra.mxu0 %v1754
    %v1756 = vand.u32 %v117, 4294901760
    %v1757 = vsub.f32 %v117, %v1756
    %v1758 = vand.u32 %v1757, 4294901760
    %1759 = vmatprep.subr.mxu0 %v1758
    %v1760 = vand.u32 %v116, 4294901760
    %v1761 = vsub.f32 %v116, %v1760
    %v1762 = vand.u32 %v1761, 4294901760
    %1763 = vmatpush1.msra.mxu0 %v1762
    %v1764 = vand.u32 %v121, 4294901760
    %v1765 = vsub.f32 %v121, %v1764
    %v1766 = vand.u32 %v1765, 4294901760
    %1767 = vmatprep.subr.mxu0 %v1766
    %v1768 = vand.u32 %v120, 4294901760
    %v1769 = vsub.f32 %v120, %v1768
    %v1770 = vand.u32 %v1769, 4294901760
    %1771 = vmatpush1.msra.mxu0 %v1770
    %1772 = vmatprep.subr.mxu0 0.0
    %1773 = vmatpush1.msra.mxu0 0.0
    %1774 = vmatprep.subr.mxu0 0.0
    %1775 = vmatpush1.msra.mxu0 0.0
    %1776 = vmatprep.subr.mxu0 0.0
    %1777 = vmatpush1.msra.mxu0 0.0
    %1778 = vmatprep.subr.mxu0 0.0
    %1779 = vmatpush1.msra.mxu0 0.0
    %1780 = vmatprep.subr.mxu0 0.0
    %1781 = vmatpush1.msra.mxu0 0.0
    %1782 = vmatprep.subr.mxu0 0.0
    %1783 = vmatpush1.msra.mxu0 0.0
    %1784 = vmatprep.subr.mxu0 0.0
    %1785 = vmatpush1.msra.mxu0 0.0
    %1786 = vmatprep.subr.mxu0 0.0
    %1787 = vmatpush1.msra.mxu0 0.0
    %1788 = vmatprep.subr.mxu0 0.0
    %1789 = vmatpush1.msra.mxu0 0.0
    %1790 = vmatprep.subr.mxu0 0.0
    %1791 = vmatpush1.msra.mxu0 0.0
    %1792 = vmatprep.subr.mxu0 0.0
    %1793 = vmatpush1.msra.mxu0 0.0
    %1794 = vmatprep.subr.mxu0 0.0
    %1795 = vmatpush1.msra.mxu0 0.0
    %1796 = vmatprep.subr.mxu0 0.0
    %1797 = vmatpush1.msra.mxu0 0.0
    %1798 = vmatprep.subr.mxu0 0.0
    %1799 = vmatpush1.msra.mxu0 0.0
    %1800 = vmatprep.subr.mxu0 0.0
    %1801 = vmatpush1.msra.mxu0 0.0
    %1802 = vmatprep.subr.mxu0 0.0
    %1803 = vmatpush1.msra.mxu0 0.0
    %1804 = vmatprep.mubr.f32.mxu0 0.0
    %v1805 = vand.u32 %v56, 4294901760
    %1806 = vmatmul.mubr.f32.gmra.mrb[0].mxu0 %v1805
    %v1807 = vpop.f32.mrb[0].mxu0
    %v1808 = vadd.f32 %v1631, %v1807
    %v1809 = vpop.f32.mrb[0].mxu0
    %v1810 = vadd.f32 %v1633, %v1809
    %1811 = vmatprep.mubr.f32.mxu0 0.0
    %v1812 = vand.u32 %v57, 4294901760
    %1813 = vmatmul.mubr.f32.gmra.mrb[0].mxu0 %v1812
    %v1814 = vpop.f32.mrb[0].mxu0
    %v1815 = vadd.f32 %v1640, %v1814
    %v1816 = vpop.f32.mrb[0].mxu0
    %v1817 = vadd.f32 %v1642, %v1816
    %1818 = vdwg.mxu0
    %v1819 = vand.u32 %v61, 4294901760
    %1820 = vmatprep.subr.mxu0 %v1819
    %v1821 = vand.u32 %v60, 4294901760
    %1822 = vmatpush1.msra.mxu0 %v1821
    %v1823 = vand.u32 %v65, 4294901760
    %1824 = vmatprep.subr.mxu0 %v1823
    %v1825 = vand.u32 %v64, 4294901760
    %1826 = vmatpush1.msra.mxu0 %v1825
    %v1827 = vand.u32 %v69, 4294901760
    %1828 = vmatprep.subr.mxu0 %v1827
    %v1829 = vand.u32 %v68, 4294901760
    %1830 = vmatpush1.msra.mxu0 %v1829
    %v1831 = vand.u32 %v73, 4294901760
    %1832 = vmatprep.subr.mxu0 %v1831
    %v1833 = vand.u32 %v72, 4294901760
    %1834 = vmatpush1.msra.mxu0 %v1833
    %v1835 = vand.u32 %v77, 4294901760
    %1836 = vmatprep.subr.mxu0 %v1835
    %v1837 = vand.u32 %v76, 4294901760
    %1838 = vmatpush1.msra.mxu0 %v1837
    %v1839 = vand.u32 %v81, 4294901760
    %1840 = vmatprep.subr.mxu0 %v1839
    %v1841 = vand.u32 %v80, 4294901760
    %1842 = vmatpush1.msra.mxu0 %v1841
    %v1843 = vand.u32 %v85, 4294901760
    %1844 = vmatprep.subr.mxu0 %v1843
    %v1845 = vand.u32 %v84, 4294901760
    %1846 = vmatpush1.msra.mxu0 %v1845
    %v1847 = vand.u32 %v89, 4294901760
    %1848 = vmatprep.subr.mxu0 %v1847
    %v1849 = vand.u32 %v88, 4294901760
    %1850 = vmatpush1.msra.mxu0 %v1849
    %v1851 = vand.u32 %v93, 4294901760
    %1852 = vmatprep.subr.mxu0 %v1851
    %v1853 = vand.u32 %v92, 4294901760
    %1854 = vmatpush1.msra.mxu0 %v1853
    %v1855 = vand.u32 %v97, 4294901760
    %1856 = vmatprep.subr.mxu0 %v1855
    %v1857 = vand.u32 %v96, 4294901760
    %1858 = vmatpush1.msra.mxu0 %v1857
    %v1859 = vand.u32 %v101, 4294901760
    %1860 = vmatprep.subr.mxu0 %v1859
    %v1861 = vand.u32 %v100, 4294901760
    %1862 = vmatpush1.msra.mxu0 %v1861
    %v1863 = vand.u32 %v105, 4294901760
    %1864 = vmatprep.subr.mxu0 %v1863
    %v1865 = vand.u32 %v104, 4294901760
    %1866 = vmatpush1.msra.mxu0 %v1865
    %v1867 = vand.u32 %v109, 4294901760
    %1868 = vmatprep.subr.mxu0 %v1867
    %v1869 = vand.u32 %v108, 4294901760
    %1870 = vmatpush1.msra.mxu0 %v1869
    %v1871 = vand.u32 %v113, 4294901760
    %1872 = vmatprep.subr.mxu0 %v1871
    %v1873 = vand.u32 %v112, 4294901760
    %1874 = vmatpush1.msra.mxu0 %v1873
    %v1875 = vand.u32 %v117, 4294901760
    %1876 = vmatprep.subr.mxu0 %v1875
    %v1877 = vand.u32 %v116, 4294901760
    %1878 = vmatpush1.msra.mxu0 %v1877
    %v1879 = vand.u32 %v121, 4294901760
    %1880 = vmatprep.subr.mxu0 %v1879
    %v1881 = vand.u32 %v120, 4294901760
    %1882 = vmatpush1.msra.mxu0 %v1881
    %1883 = vmatprep.subr.mxu0 0.0
    %1884 = vmatpush1.msra.mxu0 0.0
    %1885 = vmatprep.subr.mxu0 0.0
    %1886 = vmatpush1.msra.mxu0 0.0
    %1887 = vmatprep.subr.mxu0 0.0
    %1888 = vmatpush1.msra.mxu0 0.0
    %1889 = vmatprep.subr.mxu0 0.0
    %1890 = vmatpush1.msra.mxu0 0.0
    %1891 = vmatprep.subr.mxu0 0.0
    %1892 = vmatpush1.msra.mxu0 0.0
    %1893 = vmatprep.subr.mxu0 0.0
    %1894 = vmatpush1.msra.mxu0 0.0
    %1895 = vmatprep.subr.mxu0 0.0
    %1896 = vmatpush1.msra.mxu0 0.0
    %1897 = vmatprep.subr.mxu0 0.0
    %1898 = vmatpush1.msra.mxu0 0.0
    %1899 = vmatprep.subr.mxu0 0.0
    %1900 = vmatpush1.msra.mxu0 0.0
    %1901 = vmatprep.subr.mxu0 0.0
    %1902 = vmatpush1.msra.mxu0 0.0
    %1903 = vmatprep.subr.mxu0 0.0
    %1904 = vmatpush1.msra.mxu0 0.0
    %1905 = vmatprep.subr.mxu0 0.0
    %1906 = vmatpush1.msra.mxu0 0.0
    %1907 = vmatprep.subr.mxu0 0.0
    %1908 = vmatpush1.msra.mxu0 0.0
    %1909 = vmatprep.subr.mxu0 0.0
    %1910 = vmatpush1.msra.mxu0 0.0
    %1911 = vmatprep.subr.mxu0 0.0
    %1912 = vmatpush1.msra.mxu0 0.0
    %1913 = vmatprep.subr.mxu0 0.0
    %1914 = vmatpush1.msra.mxu0 0.0
    %1915 = vmatprep.mubr.f32.mxu0 0.0
    %v1916 = vand.u32 %v56, 4294901760
    %1917 = vmatmul.mubr.f32.gmra.mrb[0].mxu0 %v1916
    %v1918 = vpop.f32.mrb[0].mxu0
    %v1919 = vadd.f32 %v1808, %v1918
    %v1920 = vpop.f32.mrb[0].mxu0
    %v1921 = vadd.f32 %v1810, %v1920
    %1922 = vmatprep.mubr.f32.mxu0 0.0
    %v1923 = vand.u32 %v57, 4294901760
    %1924 = vmatmul.mubr.f32.gmra.mrb[0].mxu0 %v1923
    %v1925 = vpop.f32.mrb[0].mxu0
    %v1926 = vadd.f32 %v1815, %v1925
    %v1927 = vpop.f32.mrb[0].mxu0
    %v1928 = vadd.f32 %v1817, %v1927
    %1929 = vdwg.mxu0
    %v1930 = vmax.f32 %v1015, 0.0
    %v1931 = vmax.f32 %v1022, 0.0
    %v1932 = vld [vmem:[#allocation7] sm:$0xff]
    %v1933 = vld [vmem:[#allocation7 + $0x8] sm:$0xff]
    %v1934 = vld [vmem:[#allocation7 + $0x10] sm:$0xff]
    %v1935 = vld [vmem:[#allocation7 + $0x18] sm:$0xff]
    %v1936 = vld [vmem:[#allocation7 + $0x20] sm:$0xff]
    %v1937 = vld [vmem:[#allocation7 + $0x28] sm:$0xff]
    %v1938 = vld [vmem:[#allocation7 + $0x30] sm:$0xff]
    %v1939 = vld [vmem:[#allocation7 + $0x38] sm:$0xff]
    %v1940 = vld [vmem:[#allocation7 + $0x40] sm:$0xff]
    %v1941 = vld [vmem:[#allocation7 + $0x48] sm:$0xff]
    %v1942 = vld [vmem:[#allocation7 + $0x50] sm:$0xff]
    %v1943 = vld [vmem:[#allocation7 + $0x58] sm:$0xff]
    %v1944 = vld [vmem:[#allocation7 + $0x60] sm:$0xff]
    %v1945 = vld [vmem:[#allocation7 + $0x68] sm:$0xff]
    %v1946 = vld [vmem:[#allocation7 + $0x70] sm:$0xff]
    %v1947 = vld [vmem:[#allocation7 + $0x78] sm:$0xff]
    %1948 = vmatprep.subr.mxu0 0.0
    %v1949 = vand.u32 %v1932, 4294901760
    %1950 = vmatpush1.msra.mxu0 %v1949
    %1951 = vmatprep.subr.mxu0 0.0
    %v1952 = vand.u32 %v1933, 4294901760
    %1953 = vmatpush1.msra.mxu0 %v1952
    %1954 = vmatprep.subr.mxu0 0.0
    %v1955 = vand.u32 %v1934, 4294901760
    %1956 = vmatpush1.msra.mxu0 %v1955
    %1957 = vmatprep.subr.mxu0 0.0
    %v1958 = vand.u32 %v1935, 4294901760
    %1959 = vmatpush1.msra.mxu0 %v1958
    %1960 = vmatprep.subr.mxu0 0.0
    %v1961 = vand.u32 %v1936, 4294901760
    %1962 = vmatpush1.msra.mxu0 %v1961
    %1963 = vmatprep.subr.mxu0 0.0
    %v1964 = vand.u32 %v1937, 4294901760
    %1965 = vmatpush1.msra.mxu0 %v1964
    %1966 = vmatprep.subr.mxu0 0.0
    %v1967 = vand.u32 %v1938, 4294901760
    %1968 = vmatpush1.msra.mxu0 %v1967
    %1969 = vmatprep.subr.mxu0 0.0
    %v1970 = vand.u32 %v1939, 4294901760
    %1971 = vmatpush1.msra.mxu0 %v1970
    %1972 = vmatprep.subr.mxu0 0.0
    %v1973 = vand.u32 %v1940, 4294901760
    %1974 = vmatpush1.msra.mxu0 %v1973
    %1975 = vmatprep.subr.mxu0 0.0
    %v1976 = vand.u32 %v1941, 4294901760
    %1977 = vmatpush1.msra.mxu0 %v1976
    %1978 = vmatprep.subr.mxu0 0.0
    %v1979 = vand.u32 %v1942, 4294901760
    %1980 = vmatpush1.msra.mxu0 %v1979
    %1981 = vmatprep.subr.mxu0 0.0
    %v1982 = vand.u32 %v1943, 4294901760
    %1983 = vmatpush1.msra.mxu0 %v1982
    %1984 = vmatprep.subr.mxu0 0.0
    %v1985 = vand.u32 %v1944, 4294901760
    %1986 = vmatpush1.msra.mxu0 %v1985
    %1987 = vmatprep.subr.mxu0 0.0
    %v1988 = vand.u32 %v1945, 4294901760
    %1989 = vmatpush1.msra.mxu0 %v1988
    %1990 = vmatprep.subr.mxu0 0.0
    %v1991 = vand.u32 %v1946, 4294901760
    %1992 = vmatpush1.msra.mxu0 %v1991
    %1993 = vmatprep.subr.mxu0 0.0
    %v1994 = vand.u32 %v1947, 4294901760
    %1995 = vmatpush1.msra.mxu0 %v1994
    %1996 = vmatprep.subr.mxu0 0.0
    %1997 = vmatpush1.msra.mxu0 0.0
    %1998 = vmatprep.subr.mxu0 0.0
    %1999 = vmatpush1.msra.mxu0 0.0
    %2000 = vmatprep.subr.mxu0 0.0
    %2001 = vmatpush1.msra.mxu0 0.0
    %2002 = vmatprep.subr.mxu0 0.0
    %2003 = vmatpush1.msra.mxu0 0.0
    %2004 = vmatprep.subr.mxu0 0.0
    %2005 = vmatpush1.msra.mxu0 0.0
    %2006 = vmatprep.subr.mxu0 0.0
    %2007 = vmatpush1.msra.mxu0 0.0
    %2008 = vmatprep.subr.mxu0 0.0
    %2009 = vmatpush1.msra.mxu0 0.0
    %2010 = vmatprep.subr.mxu0 0.0
    %2011 = vmatpush1.msra.mxu0 0.0
    %2012 = vmatprep.subr.mxu0 0.0
    %2013 = vmatpush1.msra.mxu0 0.0
    %2014 = vmatprep.subr.mxu0 0.0
    %2015 = vmatpush1.msra.mxu0 0.0
    %2016 = vmatprep.subr.mxu0 0.0
    %2017 = vmatpush1.msra.mxu0 0.0
    %2018 = vmatprep.subr.mxu0 0.0
    %2019 = vmatpush1.msra.mxu0 0.0
    %2020 = vmatprep.subr.mxu0 0.0
    %2021 = vmatpush1.msra.mxu0 0.0
    %2022 = vmatprep.subr.mxu0 0.0
    %2023 = vmatpush1.msra.mxu0 0.0
    %2024 = vmatprep.subr.mxu0 0.0
    %2025 = vmatpush1.msra.mxu0 0.0
    %2026 = vmatprep.subr.mxu0 0.0
    %2027 = vmatpush1.msra.mxu0 0.0
    %2028 = vmatprep.mubr.f32.mxu0 0.0
    %v2029 = vand.u32 %v1930, 4294901760
    %v2030 = vsub.f32 %v1930, %v2029
    %v2031 = vand.u32 %v2030, 4294901760
    %v2032 = vsub.f32 %v2030, %v2031
    %v2033 = vand.u32 %v2032, 4294901760
    %2034 = vmatmul.mubr.f32.gmra.mrb[0].mxu0 %v2033
    %v2035 = vpop.f32.mrb[0].mxu0
    %v2036 = vadd.f32 0.0, %v2035
    %v2037 = vpop.f32.mrb[0].mxu0
    %2038 = vmatprep.mubr.f32.mxu0 0.0
    %v2039 = vand.u32 %v1931, 4294901760
    %v2040 = vsub.f32 %v1931, %v2039
    %v2041 = vand.u32 %v2040, 4294901760
    %v2042 = vsub.f32 %v2040, %v2041
    %v2043 = vand.u32 %v2042, 4294901760
    %2044 = vmatmul.mubr.f32.gmra.mrb[0].mxu0 %v2043
    %v2045 = vpop.f32.mrb[0].mxu0
    %v2046 = vadd.f32 0.0, %v2045
    %v2047 = vpop.f32.mrb[0].mxu0
    %2048 = vdwg.mxu0
    %2049 = vmatprep.subr.mxu0 0.0
    %v2050 = vand.u32 %v1932, 4294901760
    %v2051 = vsub.f32 %v1932, %v2050
    %v2052 = vand.u32 %v2051, 4294901760
    %v2053 = vsub.f32 %v2051, %v2052
    %v2054 = vand.u32 %v2053, 4294901760
    %2055 = vmatpush1.msra.mxu0 %v2054
    %2056 = vmatprep.subr.mxu0 0.0
    %v2057 = vand.u32 %v1933, 4294901760
    %v2058 = vsub.f32 %v1933, %v2057
    %v2059 = vand.u32 %v2058, 4294901760
    %v2060 = vsub.f32 %v2058, %v2059
    %v2061 = vand.u32 %v2060, 4294901760
    %2062 = vmatpush1.msra.mxu0 %v2061
    %2063 = vmatprep.subr.mxu0 0.0
    %v2064 = vand.u32 %v1934, 4294901760
    %v2065 = vsub.f32 %v1934, %v2064
    %v2066 = vand.u32 %v2065, 4294901760
    %v2067 = vsub.f32 %v2065, %v2066
    %v2068 = vand.u32 %v2067, 4294901760
    %2069 = vmatpush1.msra.mxu0 %v2068
    %2070 = vmatprep.subr.mxu0 0.0
    %v2071 = vand.u32 %v1935, 4294901760
    %v2072 = vsub.f32 %v1935, %v2071
    %v2073 = vand.u32 %v2072, 4294901760
    %v2074 = vsub.f32 %v2072, %v2073
    %v2075 = vand.u32 %v2074, 4294901760
    %2076 = vmatpush1.msra.mxu0 %v2075
    %2077 = vmatprep.subr.mxu0 0.0
    %v2078 = vand.u32 %v1936, 4294901760
    %v2079 = vsub.f32 %v1936, %v2078
    %v2080 = vand.u32 %v2079, 4294901760
    %v2081 = vsub.f32 %v2079, %v2080
    %v2082 = vand.u32 %v2081, 4294901760
    %2083 = vmatpush1.msra.mxu0 %v2082
    %2084 = vmatprep.subr.mxu0 0.0
    %v2085 = vand.u32 %v1937, 4294901760
    %v2086 = vsub.f32 %v1937, %v2085
    %v2087 = vand.u32 %v2086, 4294901760
    %v2088 = vsub.f32 %v2086, %v2087
    %v2089 = vand.u32 %v2088, 4294901760
    %2090 = vmatpush1.msra.mxu0 %v2089
    %2091 = vmatprep.subr.mxu0 0.0
    %v2092 = vand.u32 %v1938, 4294901760
    %v2093 = vsub.f32 %v1938, %v2092
    %v2094 = vand.u32 %v2093, 4294901760
    %v2095 = vsub.f32 %v2093, %v2094
    %v2096 = vand.u32 %v2095, 4294901760
    %2097 = vmatpush1.msra.mxu0 %v2096
    %2098 = vmatprep.subr.mxu0 0.0
    %v2099 = vand.u32 %v1939, 4294901760
    %v2100 = vsub.f32 %v1939, %v2099
    %v2101 = vand.u32 %v2100, 4294901760
    %v2102 = vsub.f32 %v2100, %v2101
    %v2103 = vand.u32 %v2102, 4294901760
    %2104 = vmatpush1.msra.mxu0 %v2103
    %2105 = vmatprep.subr.mxu0 0.0
    %v2106 = vand.u32 %v1940, 4294901760
    %v2107 = vsub.f32 %v1940, %v2106
    %v2108 = vand.u32 %v2107, 4294901760
    %v2109 = vsub.f32 %v2107, %v2108
    %v2110 = vand.u32 %v2109, 4294901760
    %2111 = vmatpush1.msra.mxu0 %v2110
    %2112 = vmatprep.subr.mxu0 0.0
    %v2113 = vand.u32 %v1941, 4294901760
    %v2114 = vsub.f32 %v1941, %v2113
    %v2115 = vand.u32 %v2114, 4294901760
    %v2116 = vsub.f32 %v2114, %v2115
    %v2117 = vand.u32 %v2116, 4294901760
    %2118 = vmatpush1.msra.mxu0 %v2117
    %2119 = vmatprep.subr.mxu0 0.0
    %v2120 = vand.u32 %v1942, 4294901760
    %v2121 = vsub.f32 %v1942, %v2120
    %v2122 = vand.u32 %v2121, 4294901760
    %v2123 = vsub.f32 %v2121, %v2122
    %v2124 = vand.u32 %v2123, 4294901760
    %2125 = vmatpush1.msra.mxu0 %v2124
    %2126 = vmatprep.subr.mxu0 0.0
    %v2127 = vand.u32 %v1943, 4294901760
    %v2128 = vsub.f32 %v1943, %v2127
    %v2129 = vand.u32 %v2128, 4294901760
    %v2130 = vsub.f32 %v2128, %v2129
    %v2131 = vand.u32 %v2130, 4294901760
    %2132 = vmatpush1.msra.mxu0 %v2131
    %2133 = vmatprep.subr.mxu0 0.0
    %v2134 = vand.u32 %v1944, 4294901760
    %v2135 = vsub.f32 %v1944, %v2134
    %v2136 = vand.u32 %v2135, 4294901760
    %v2137 = vsub.f32 %v2135, %v2136
    %v2138 = vand.u32 %v2137, 4294901760
    %2139 = vmatpush1.msra.mxu0 %v2138
    %2140 = vmatprep.subr.mxu0 0.0
    %v2141 = vand.u32 %v1945, 4294901760
    %v2142 = vsub.f32 %v1945, %v2141
    %v2143 = vand.u32 %v2142, 4294901760
    %v2144 = vsub.f32 %v2142, %v2143
    %v2145 = vand.u32 %v2144, 4294901760
    %2146 = vmatpush1.msra.mxu0 %v2145
    %2147 = vmatprep.subr.mxu0 0.0
    %v2148 = vand.u32 %v1946, 4294901760
    %v2149 = vsub.f32 %v1946, %v2148
    %v2150 = vand.u32 %v2149, 4294901760
    %v2151 = vsub.f32 %v2149, %v2150
    %v2152 = vand.u32 %v2151, 4294901760
    %2153 = vmatpush1.msra.mxu0 %v2152
    %2154 = vmatprep.subr.mxu0 0.0
    %v2155 = vand.u32 %v1947, 4294901760
    %v2156 = vsub.f32 %v1947, %v2155
    %v2157 = vand.u32 %v2156, 4294901760
    %v2158 = vsub.f32 %v2156, %v2157
    %v2159 = vand.u32 %v2158, 4294901760
    %2160 = vmatpush1.msra.mxu0 %v2159
    %2161 = vmatprep.subr.mxu0 0.0
    %2162 = vmatpush1.msra.mxu0 0.0
    %2163 = vmatprep.subr.mxu0 0.0
    %2164 = vmatpush1.msra.mxu0 0.0
    %2165 = vmatprep.subr.mxu0 0.0
    %2166 = vmatpush1.msra.mxu0 0.0
    %2167 = vmatprep.subr.mxu0 0.0
    %2168 = vmatpush1.msra.mxu0 0.0
    %2169 = vmatprep.subr.mxu0 0.0
    %2170 = vmatpush1.msra.mxu0 0.0
    %2171 = vmatprep.subr.mxu0 0.0
    %2172 = vmatpush1.msra.mxu0 0.0
    %2173 = vmatprep.subr.mxu0 0.0
    %2174 = vmatpush1.msra.mxu0 0.0
    %2175 = vmatprep.subr.mxu0 0.0
    %2176 = vmatpush1.msra.mxu0 0.0
    %2177 = vmatprep.subr.mxu0 0.0
    %2178 = vmatpush1.msra.mxu0 0.0
    %2179 = vmatprep.subr.mxu0 0.0
    %2180 = vmatpush1.msra.mxu0 0.0
    %2181 = vmatprep.subr.mxu0 0.0
    %2182 = vmatpush1.msra.mxu0 0.0
    %2183 = vmatprep.subr.mxu0 0.0
    %2184 = vmatpush1.msra.mxu0 0.0
    %2185 = vmatprep.subr.mxu0 0.0
    %2186 = vmatpush1.msra.mxu0 0.0
    %2187 = vmatprep.subr.mxu0 0.0
    %2188 = vmatpush1.msra.mxu0 0.0
    %2189 = vmatprep.subr.mxu0 0.0
    %2190 = vmatpush1.msra.mxu0 0.0
    %2191 = vmatprep.subr.mxu0 0.0
    %2192 = vmatpush1.msra.mxu0 0.0
    %2193 = vmatprep.mubr.f32.mxu0 0.0
    %v2194 = vand.u32 %v1930, 4294901760
    %2195 = vmatmul.mubr.f32.gmra.mrb[0].mxu0 %v2194
    %v2196 = vpop.f32.mrb[0].mxu0
    %v2197 = vadd.f32 %v2036, %v2196
    %v2198 = vpop.f32.mrb[0].mxu0
    %2199 = vmatprep.mubr.f32.mxu0 0.0
    %v2200 = vand.u32 %v1931, 4294901760
    %2201 = vmatmul.mubr.f32.gmra.mrb[0].mxu0 %v2200
    %v2202 = vpop.f32.mrb[0].mxu0
    %v2203 = vadd.f32 %v2046, %v2202
    %v2204 = vpop.f32.mrb[0].mxu0
    %2205 = vdwg.mxu0
    %2206 = vmatprep.subr.mxu0 0.0
    %v2207 = vand.u32 %v1932, 4294901760
    %v2208 = vsub.f32 %v1932, %v2207
    %2209 = vmatpush1.msra.mxu0 %v2208
    %2210 = vmatprep.subr.mxu0 0.0
    %v2211 = vand.u32 %v1933, 4294901760
    %v2212 = vsub.f32 %v1933, %v2211
    %2213 = vmatpush1.msra.mxu0 %v2212
    %2214 = vmatprep.subr.mxu0 0.0
    %v2215 = vand.u32 %v1934, 4294901760
    %v2216 = vsub.f32 %v1934, %v2215
    %2217 = vmatpush1.msra.mxu0 %v2216
    %2218 = vmatprep.subr.mxu0 0.0
    %v2219 = vand.u32 %v1935, 4294901760
    %v2220 = vsub.f32 %v1935, %v2219
    %2221 = vmatpush1.msra.mxu0 %v2220
    %2222 = vmatprep.subr.mxu0 0.0
    %v2223 = vand.u32 %v1936, 4294901760
    %v2224 = vsub.f32 %v1936, %v2223
    %2225 = vmatpush1.msra.mxu0 %v2224
    %2226 = vmatprep.subr.mxu0 0.0
    %v2227 = vand.u32 %v1937, 4294901760
    %v2228 = vsub.f32 %v1937, %v2227
    %2229 = vmatpush1.msra.mxu0 %v2228
    %2230 = vmatprep.subr.mxu0 0.0
    %v2231 = vand.u32 %v1938, 4294901760
    %v2232 = vsub.f32 %v1938, %v2231
    %2233 = vmatpush1.msra.mxu0 %v2232
    %2234 = vmatprep.subr.mxu0 0.0
    %v2235 = vand.u32 %v1939, 4294901760
    %v2236 = vsub.f32 %v1939, %v2235
    %2237 = vmatpush1.msra.mxu0 %v2236
    %2238 = vmatprep.subr.mxu0 0.0
    %v2239 = vand.u32 %v1940, 4294901760
    %v2240 = vsub.f32 %v1940, %v2239
    %2241 = vmatpush1.msra.mxu0 %v2240
    %2242 = vmatprep.subr.mxu0 0.0
    %v2243 = vand.u32 %v1941, 4294901760
    %v2244 = vsub.f32 %v1941, %v2243
    %2245 = vmatpush1.msra.mxu0 %v2244
    %2246 = vmatprep.subr.mxu0 0.0
    %v2247 = vand.u32 %v1942, 4294901760
    %v2248 = vsub.f32 %v1942, %v2247
    %2249 = vmatpush1.msra.mxu0 %v2248
    %2250 = vmatprep.subr.mxu0 0.0
    %v2251 = vand.u32 %v1943, 4294901760
    %v2252 = vsub.f32 %v1943, %v2251
    %2253 = vmatpush1.msra.mxu0 %v2252
    %2254 = vmatprep.subr.mxu0 0.0
    %v2255 = vand.u32 %v1944, 4294901760
    %v2256 = vsub.f32 %v1944, %v2255
    %2257 = vmatpush1.msra.mxu0 %v2256
    %2258 = vmatprep.subr.mxu0 0.0
    %v2259 = vand.u32 %v1945, 4294901760
    %v2260 = vsub.f32 %v1945, %v2259
    %2261 = vmatpush1.msra.mxu0 %v2260
    %2262 = vmatprep.subr.mxu0 0.0
    %v2263 = vand.u32 %v1946, 4294901760
    %v2264 = vsub.f32 %v1946, %v2263
    %2265 = vmatpush1.msra.mxu0 %v2264
    %2266 = vmatprep.subr.mxu0 0.0
    %v2267 = vand.u32 %v1947, 4294901760
    %v2268 = vsub.f32 %v1947, %v2267
    %2269 = vmatpush1.msra.mxu0 %v2268
    %2270 = vmatprep.subr.mxu0 0.0
    %2271 = vmatpush1.msra.mxu0 0.0
    %2272 = vmatprep.subr.mxu0 0.0
    %2273 = vmatpush1.msra.mxu0 0.0
    %2274 = vmatprep.subr.mxu0 0.0
    %2275 = vmatpush1.msra.mxu0 0.0
    %2276 = vmatprep.subr.mxu0 0.0
    %2277 = vmatpush1.msra.mxu0 0.0
    %2278 = vmatprep.subr.mxu0 0.0
    %2279 = vmatpush1.msra.mxu0 0.0
    %2280 = vmatprep.subr.mxu0 0.0
    %2281 = vmatpush1.msra.mxu0 0.0
    %2282 = vmatprep.subr.mxu0 0.0
    %2283 = vmatpush1.msra.mxu0 0.0
    %2284 = vmatprep.subr.mxu0 0.0
    %2285 = vmatpush1.msra.mxu0 0.0
    %2286 = vmatprep.subr.mxu0 0.0
    %2287 = vmatpush1.msra.mxu0 0.0
    %2288 = vmatprep.subr.mxu0 0.0
    %2289 = vmatpush1.msra.mxu0 0.0
    %2290 = vmatprep.subr.mxu0 0.0
    %2291 = vmatpush1.msra.mxu0 0.0
    %2292 = vmatprep.subr.mxu0 0.0
    %2293 = vmatpush1.msra.mxu0 0.0
    %2294 = vmatprep.subr.mxu0 0.0
    %2295 = vmatpush1.msra.mxu0 0.0
    %2296 = vmatprep.subr.mxu0 0.0
    %2297 = vmatpush1.msra.mxu0 0.0
    %2298 = vmatprep.subr.mxu0 0.0
    %2299 = vmatpush1.msra.mxu0 0.0
    %2300 = vmatprep.subr.mxu0 0.0
    %2301 = vmatpush1.msra.mxu0 0.0
    %2302 = vmatprep.mubr.f32.mxu0 0.0
    %v2303 = vand.u32 %v1930, 4294901760
    %v2304 = vsub.f32 %v1930, %v2303
    %2305 = vmatmul.mubr.f32.gmra.mrb[0].mxu0 %v2304
    %v2306 = vpop.f32.mrb[0].mxu0
    %v2307 = vadd.f32 %v2197, %v2306
    %v2308 = vpop.f32.mrb[0].mxu0
    %2309 = vmatprep.mubr.f32.mxu0 0.0
    %v2310 = vand.u32 %v1931, 4294901760
    %v2311 = vsub.f32 %v1931, %v2310
    %2312 = vmatmul.mubr.f32.gmra.mrb[0].mxu0 %v2311
    %v2313 = vpop.f32.mrb[0].mxu0
    %v2314 = vadd.f32 %v2203, %v2313
    %v2315 = vpop.f32.mrb[0].mxu0
    %2316 = vdwg.mxu0
    %2317 = vmatprep.subr.mxu0 0.0
    %v2318 = vand.u32 %v1932, 4294901760
    %2319 = vmatpush1.msra.mxu0 %v2318
    %2320 = vmatprep.subr.mxu0 0.0
    %v2321 = vand.u32 %v1933, 4294901760
    %2322 = vmatpush1.msra.mxu0 %v2321
    %2323 = vmatprep.subr.mxu0 0.0
    %v2324 = vand.u32 %v1934, 4294901760
    %2325 = vmatpush1.msra.mxu0 %v2324
    %2326 = vmatprep.subr.mxu0 0.0
    %v2327 = vand.u32 %v1935, 4294901760
    %2328 = vmatpush1.msra.mxu0 %v2327
    %2329 = vmatprep.subr.mxu0 0.0
    %v2330 = vand.u32 %v1936, 4294901760
    %2331 = vmatpush1.msra.mxu0 %v2330
    %2332 = vmatprep.subr.mxu0 0.0
    %v2333 = vand.u32 %v1937, 4294901760
    %2334 = vmatpush1.msra.mxu0 %v2333
    %2335 = vmatprep.subr.mxu0 0.0
    %v2336 = vand.u32 %v1938, 4294901760
    %2337 = vmatpush1.msra.mxu0 %v2336
    %2338 = vmatprep.subr.mxu0 0.0
    %v2339 = vand.u32 %v1939, 4294901760
    %2340 = vmatpush1.msra.mxu0 %v2339
    %2341 = vmatprep.subr.mxu0 0.0
    %v2342 = vand.u32 %v1940, 4294901760
    %2343 = vmatpush1.msra.mxu0 %v2342
    %2344 = vmatprep.subr.mxu0 0.0
    %v2345 = vand.u32 %v1941, 4294901760
    %2346 = vmatpush1.msra.mxu0 %v2345
    %2347 = vmatprep.subr.mxu0 0.0
    %v2348 = vand.u32 %v1942, 4294901760
    %2349 = vmatpush1.msra.mxu0 %v2348
    %2350 = vmatprep.subr.mxu0 0.0
    %v2351 = vand.u32 %v1943, 4294901760
    %2352 = vmatpush1.msra.mxu0 %v2351
    %2353 = vmatprep.subr.mxu0 0.0
    %v2354 = vand.u32 %v1944, 4294901760
    %2355 = vmatpush1.msra.mxu0 %v2354
    %2356 = vmatprep.subr.mxu0 0.0
    %v2357 = vand.u32 %v1945, 4294901760
    %2358 = vmatpush1.msra.mxu0 %v2357
    %2359 = vmatprep.subr.mxu0 0.0
    %v2360 = vand.u32 %v1946, 4294901760
    %2361 = vmatpush1.msra.mxu0 %v2360
    %2362 = vmatprep.subr.mxu0 0.0
    %v2363 = vand.u32 %v1947, 4294901760
    %2364 = vmatpush1.msra.mxu0 %v2363
    %2365 = vmatprep.subr.mxu0 0.0
    %2366 = vmatpush1.msra.mxu0 0.0
    %2367 = vmatprep.subr.mxu0 0.0
    %2368 = vmatpush1.msra.mxu0 0.0
    %2369 = vmatprep.subr.mxu0 0.0
    %2370 = vmatpush1.msra.mxu0 0.0
    %2371 = vmatprep.subr.mxu0 0.0
    %2372 = vmatpush1.msra.mxu0 0.0
    %2373 = vmatprep.subr.mxu0 0.0
    %2374 = vmatpush1.msra.mxu0 0.0
    %2375 = vmatprep.subr.mxu0 0.0
    %2376 = vmatpush1.msra.mxu0 0.0
    %2377 = vmatprep.subr.mxu0 0.0
    %2378 = vmatpush1.msra.mxu0 0.0
    %2379 = vmatprep.subr.mxu0 0.0
    %2380 = vmatpush1.msra.mxu0 0.0
    %2381 = vmatprep.subr.mxu0 0.0
    %2382 = vmatpush1.msra.mxu0 0.0
    %2383 = vmatprep.subr.mxu0 0.0
    %2384 = vmatpush1.msra.mxu0 0.0
    %2385 = vmatprep.subr.mxu0 0.0
    %2386 = vmatpush1.msra.mxu0 0.0
    %2387 = vmatprep.subr.mxu0 0.0
    %2388 = vmatpush1.msra.mxu0 0.0
    %2389 = vmatprep.subr.mxu0 0.0
    %2390 = vmatpush1.msra.mxu0 0.0
    %2391 = vmatprep.subr.mxu0 0.0
    %2392 = vmatpush1.msra.mxu0 0.0
    %2393 = vmatprep.subr.mxu0 0.0
    %2394 = vmatpush1.msra.mxu0 0.0
    %2395 = vmatprep.subr.mxu0 0.0
    %2396 = vmatpush1.msra.mxu0 0.0
    %2397 = vmatprep.mubr.f32.mxu0 0.0
    %v2398 = vand.u32 %v1930, 4294901760
    %v2399 = vsub.f32 %v1930, %v2398
    %v2400 = vand.u32 %v2399, 4294901760
    %2401 = vmatmul.mubr.f32.gmra.mrb[0].mxu0 %v2400
    %v2402 = vpop.f32.mrb[0].mxu0
    %v2403 = vadd.f32 %v2307, %v2402
    %v2404 = vpop.f32.mrb[0].mxu0
    %2405 = vmatprep.mubr.f32.mxu0 0.0
    %v2406 = vand.u32 %v1931, 4294901760
    %v2407 = vsub.f32 %v1931, %v2406
    %v2408 = vand.u32 %v2407, 4294901760
    %2409 = vmatmul.mubr.f32.gmra.mrb[0].mxu0 %v2408
    %v2410 = vpop.f32.mrb[0].mxu0
    %v2411 = vadd.f32 %v2314, %v2410
    %v2412 = vpop.f32.mrb[0].mxu0
    %2413 = vdwg.mxu0
    %2414 = vmatprep.subr.mxu0 0.0
    %v2415 = vand.u32 %v1932, 4294901760
    %v2416 = vsub.f32 %v1932, %v2415
    %v2417 = vand.u32 %v2416, 4294901760
    %2418 = vmatpush1.msra.mxu0 %v2417
    %2419 = vmatprep.subr.mxu0 0.0
    %v2420 = vand.u32 %v1933, 4294901760
    %v2421 = vsub.f32 %v1933, %v2420
    %v2422 = vand.u32 %v2421, 4294901760
    %2423 = vmatpush1.msra.mxu0 %v2422
    %2424 = vmatprep.subr.mxu0 0.0
    %v2425 = vand.u32 %v1934, 4294901760
    %v2426 = vsub.f32 %v1934, %v2425
    %v2427 = vand.u32 %v2426, 4294901760
    %2428 = vmatpush1.msra.mxu0 %v2427
    %2429 = vmatprep.subr.mxu0 0.0
    %v2430 = vand.u32 %v1935, 4294901760
    %v2431 = vsub.f32 %v1935, %v2430
    %v2432 = vand.u32 %v2431, 4294901760
    %2433 = vmatpush1.msra.mxu0 %v2432
    %2434 = vmatprep.subr.mxu0 0.0
    %v2435 = vand.u32 %v1936, 4294901760
    %v2436 = vsub.f32 %v1936, %v2435
    %v2437 = vand.u32 %v2436, 4294901760
    %2438 = vmatpush1.msra.mxu0 %v2437
    %2439 = vmatprep.subr.mxu0 0.0
    %v2440 = vand.u32 %v1937, 4294901760
    %v2441 = vsub.f32 %v1937, %v2440
    %v2442 = vand.u32 %v2441, 4294901760
    %2443 = vmatpush1.msra.mxu0 %v2442
    %2444 = vmatprep.subr.mxu0 0.0
    %v2445 = vand.u32 %v1938, 4294901760
    %v2446 = vsub.f32 %v1938, %v2445
    %v2447 = vand.u32 %v2446, 4294901760
    %2448 = vmatpush1.msra.mxu0 %v2447
    %2449 = vmatprep.subr.mxu0 0.0
    %v2450 = vand.u32 %v1939, 4294901760
    %v2451 = vsub.f32 %v1939, %v2450
    %v2452 = vand.u32 %v2451, 4294901760
    %2453 = vmatpush1.msra.mxu0 %v2452
    %2454 = vmatprep.subr.mxu0 0.0
    %v2455 = vand.u32 %v1940, 4294901760
    %v2456 = vsub.f32 %v1940, %v2455
    %v2457 = vand.u32 %v2456, 4294901760
    %2458 = vmatpush1.msra.mxu0 %v2457
    %2459 = vmatprep.subr.mxu0 0.0
    %v2460 = vand.u32 %v1941, 4294901760
    %v2461 = vsub.f32 %v1941, %v2460
    %v2462 = vand.u32 %v2461, 4294901760
    %2463 = vmatpush1.msra.mxu0 %v2462
    %2464 = vmatprep.subr.mxu0 0.0
    %v2465 = vand.u32 %v1942, 4294901760
    %v2466 = vsub.f32 %v1942, %v2465
    %v2467 = vand.u32 %v2466, 4294901760
    %2468 = vmatpush1.msra.mxu0 %v2467
    %2469 = vmatprep.subr.mxu0 0.0
    %v2470 = vand.u32 %v1943, 4294901760
    %v2471 = vsub.f32 %v1943, %v2470
    %v2472 = vand.u32 %v2471, 4294901760
    %2473 = vmatpush1.msra.mxu0 %v2472
    %2474 = vmatprep.subr.mxu0 0.0
    %v2475 = vand.u32 %v1944, 4294901760
    %v2476 = vsub.f32 %v1944, %v2475
    %v2477 = vand.u32 %v2476, 4294901760
    %2478 = vmatpush1.msra.mxu0 %v2477
    %2479 = vmatprep.subr.mxu0 0.0
    %v2480 = vand.u32 %v1945, 4294901760
    %v2481 = vsub.f32 %v1945, %v2480
    %v2482 = vand.u32 %v2481, 4294901760
    %2483 = vmatpush1.msra.mxu0 %v2482
    %2484 = vmatprep.subr.mxu0 0.0
    %v2485 = vand.u32 %v1946, 4294901760
    %v2486 = vsub.f32 %v1946, %v2485
    %v2487 = vand.u32 %v2486, 4294901760
    %2488 = vmatpush1.msra.mxu0 %v2487
    %2489 = vmatprep.subr.mxu0 0.0
    %v2490 = vand.u32 %v1947, 4294901760
    %v2491 = vsub.f32 %v1947, %v2490
    %v2492 = vand.u32 %v2491, 4294901760
    %2493 = vmatpush1.msra.mxu0 %v2492
    %2494 = vmatprep.subr.mxu0 0.0
    %2495 = vmatpush1.msra.mxu0 0.0
    %2496 = vmatprep.subr.mxu0 0.0
    %2497 = vmatpush1.msra.mxu0 0.0
    %2498 = vmatprep.subr.mxu0 0.0
    %2499 = vmatpush1.msra.mxu0 0.0
    %2500 = vmatprep.subr.mxu0 0.0
    %2501 = vmatpush1.msra.mxu0 0.0
    %2502 = vmatprep.subr.mxu0 0.0
    %2503 = vmatpush1.msra.mxu0 0.0
    %2504 = vmatprep.subr.mxu0 0.0
    %2505 = vmatpush1.msra.mxu0 0.0
    %2506 = vmatprep.subr.mxu0 0.0
    %2507 = vmatpush1.msra.mxu0 0.0
    %2508 = vmatprep.subr.mxu0 0.0
    %2509 = vmatpush1.msra.mxu0 0.0
    %2510 = vmatprep.subr.mxu0 0.0
    %2511 = vmatpush1.msra.mxu0 0.0
    %2512 = vmatprep.subr.mxu0 0.0
    %2513 = vmatpush1.msra.mxu0 0.0
    %2514 = vmatprep.subr.mxu0 0.0
    %2515 = vmatpush1.msra.mxu0 0.0
    %2516 = vmatprep.subr.mxu0 0.0
    %2517 = vmatpush1.msra.mxu0 0.0
    %2518 = vmatprep.subr.mxu0 0.0
    %2519 = vmatpush1.msra.mxu0 0.0
    %2520 = vmatprep.subr.mxu0 0.0
    %2521 = vmatpush1.msra.mxu0 0.0
    %2522 = vmatprep.subr.mxu0 0.0
    %2523 = vmatpush1.msra.mxu0 0.0
    %2524 = vmatprep.subr.mxu0 0.0
    %2525 = vmatpush1.msra.mxu0 0.0
    %2526 = vmatprep.mubr.f32.mxu0 0.0
    %v2527 = vand.u32 %v1930, 4294901760
    %2528 = vmatmul.mubr.f32.gmra.mrb[0].mxu0 %v2527
    %v2529 = vpop.f32.mrb[0].mxu0
    %v2530 = vadd.f32 %v2403, %v2529
    %v2531 = vpop.f32.mrb[0].mxu0
    %2532 = vmatprep.mubr.f32.mxu0 0.0
    %v2533 = vand.u32 %v1931, 4294901760
    %2534 = vmatmul.mubr.f32.gmra.mrb[0].mxu0 %v2533
    %v2535 = vpop.f32.mrb[0].mxu0
    %v2536 = vadd.f32 %v2411, %v2535
    %v2537 = vpop.f32.mrb[0].mxu0
    %2538 = vdwg.mxu0
    %2539 = vmatprep.subr.mxu0 0.0
    %v2540 = vand.u32 %v1932, 4294901760
    %2541 = vmatpush1.msra.mxu0 %v2540
    %2542 = vmatprep.subr.mxu0 0.0
    %v2543 = vand.u32 %v1933, 4294901760
    %2544 = vmatpush1.msra.mxu0 %v2543
    %2545 = vmatprep.subr.mxu0 0.0
    %v2546 = vand.u32 %v1934, 4294901760
    %2547 = vmatpush1.msra.mxu0 %v2546
    %2548 = vmatprep.subr.mxu0 0.0
    %v2549 = vand.u32 %v1935, 4294901760
    %2550 = vmatpush1.msra.mxu0 %v2549
    %2551 = vmatprep.subr.mxu0 0.0
    %v2552 = vand.u32 %v1936, 4294901760
    %2553 = vmatpush1.msra.mxu0 %v2552
    %2554 = vmatprep.subr.mxu0 0.0
    %v2555 = vand.u32 %v1937, 4294901760
    %2556 = vmatpush1.msra.mxu0 %v2555
    %2557 = vmatprep.subr.mxu0 0.0
    %v2558 = vand.u32 %v1938, 4294901760
    %2559 = vmatpush1.msra.mxu0 %v2558
    %2560 = vmatprep.subr.mxu0 0.0
    %v2561 = vand.u32 %v1939, 4294901760
    %2562 = vmatpush1.msra.mxu0 %v2561
    %2563 = vmatprep.subr.mxu0 0.0
    %v2564 = vand.u32 %v1940, 4294901760
    %2565 = vmatpush1.msra.mxu0 %v2564
    %2566 = vmatprep.subr.mxu0 0.0
    %v2567 = vand.u32 %v1941, 4294901760
    %2568 = vmatpush1.msra.mxu0 %v2567
    %2569 = vmatprep.subr.mxu0 0.0
    %v2570 = vand.u32 %v1942, 4294901760
    %2571 = vmatpush1.msra.mxu0 %v2570
    %2572 = vmatprep.subr.mxu0 0.0
    %v2573 = vand.u32 %v1943, 4294901760
    %2574 = vmatpush1.msra.mxu0 %v2573
    %2575 = vmatprep.subr.mxu0 0.0
    %v2576 = vand.u32 %v1944, 4294901760
    %2577 = vmatpush1.msra.mxu0 %v2576
    %2578 = vmatprep.subr.mxu0 0.0
    %v2579 = vand.u32 %v1945, 4294901760
    %2580 = vmatpush1.msra.mxu0 %v2579
    %2581 = vmatprep.subr.mxu0 0.0
    %v2582 = vand.u32 %v1946, 4294901760
    %2583 = vmatpush1.msra.mxu0 %v2582
    %2584 = vmatprep.subr.mxu0 0.0
    %v2585 = vand.u32 %v1947, 4294901760
    %2586 = vmatpush1.msra.mxu0 %v2585
    %2587 = vmatprep.subr.mxu0 0.0
    %2588 = vmatpush1.msra.mxu0 0.0
    %2589 = vmatprep.subr.mxu0 0.0
    %2590 = vmatpush1.msra.mxu0 0.0
    %2591 = vmatprep.subr.mxu0 0.0
    %2592 = vmatpush1.msra.mxu0 0.0
    %2593 = vmatprep.subr.mxu0 0.0
    %2594 = vmatpush1.msra.mxu0 0.0
    %2595 = vmatprep.subr.mxu0 0.0
    %2596 = vmatpush1.msra.mxu0 0.0
    %2597 = vmatprep.subr.mxu0 0.0
    %2598 = vmatpush1.msra.mxu0 0.0
    %2599 = vmatprep.subr.mxu0 0.0
    %2600 = vmatpush1.msra.mxu0 0.0
    %2601 = vmatprep.subr.mxu0 0.0
    %2602 = vmatpush1.msra.mxu0 0.0
    %2603 = vmatprep.subr.mxu0 0.0
    %2604 = vmatpush1.msra.mxu0 0.0
    %2605 = vmatprep.subr.mxu0 0.0
    %2606 = vmatpush1.msra.mxu0 0.0
    %2607 = vmatprep.subr.mxu0 0.0
    %2608 = vmatpush1.msra.mxu0 0.0
    %2609 = vmatprep.subr.mxu0 0.0
    %2610 = vmatpush1.msra.mxu0 0.0
    %2611 = vmatprep.subr.mxu0 0.0
    %2612 = vmatpush1.msra.mxu0 0.0
    %2613 = vmatprep.subr.mxu0 0.0
    %2614 = vmatpush1.msra.mxu0 0.0
    %2615 = vmatprep.subr.mxu0 0.0
    %2616 = vmatpush1.msra.mxu0 0.0
    %2617 = vmatprep.subr.mxu0 0.0
    %2618 = vmatpush1.msra.mxu0 0.0
    %2619 = vmatprep.mubr.f32.mxu0 0.0
    %v2620 = vand.u32 %v1930, 4294901760
    %2621 = vmatmul.mubr.f32.gmra.mrb[0].mxu0 %v2620
    %v2622 = vpop.f32.mrb[0].mxu0
    %v2623 = vadd.f32 %v2530, %v2622
    %v2624 = vpop.f32.mrb[0].mxu0
    %2625 = vmatprep.mubr.f32.mxu0 0.0
    %v2626 = vand.u32 %v1931, 4294901760
    %2627 = vmatmul.mubr.f32.gmra.mrb[0].mxu0 %v2626
    %v2628 = vpop.f32.mrb[0].mxu0
    %v2629 = vadd.f32 %v2536, %v2628
    %v2630 = vpop.f32.mrb[0].mxu0
    %2631 = vdwg.mxu0
    %v2632 = vadd.f32 %v1017, %v2623
    %v2633 = vadd.f32 %v1024, %v2629
    %v2634 = vmax.f32 %v2632, 0.0
    %v2635 = vmax.f32 %v2633, 0.0
    %s2636 = scalar_lea.vmem [#allocation7], 128
    %v2637 = vld [vmem:[%s2636] sm:$0xff]
    %v2638 = vld [vmem:[%s2636 + $0x8] sm:$0xff]
    %v2639 = vld [vmem:[%s2636 + $0x10] sm:$0xff]
    %v2640 = vld [vmem:[%s2636 + $0x18] sm:$0xff]
    %v2641 = vld [vmem:[%s2636 + $0x20] sm:$0xff]
    %v2642 = vld [vmem:[%s2636 + $0x28] sm:$0xff]
    %v2643 = vld [vmem:[%s2636 + $0x30] sm:$0xff]
    %v2644 = vld [vmem:[%s2636 + $0x38] sm:$0xff]
    %v2645 = vld [vmem:[%s2636 + $0x40] sm:$0xff]
    %v2646 = vld [vmem:[%s2636 + $0x48] sm:$0xff]
    %v2647 = vld [vmem:[%s2636 + $0x50] sm:$0xff]
    %v2648 = vld [vmem:[%s2636 + $0x58] sm:$0xff]
    %v2649 = vld [vmem:[%s2636 + $0x60] sm:$0xff]
    %v2650 = vld [vmem:[%s2636 + $0x68] sm:$0xff]
    %v2651 = vld [vmem:[%s2636 + $0x70] sm:$0xff]
    %v2652 = vld [vmem:[%s2636 + $0x78] sm:$0xff]
    %2653 = vmatprep.subr.mxu0 0.0
    %v2654 = vand.u32 %v2637, 4294901760
    %2655 = vmatpush1.msra.mxu0 %v2654
    %2656 = vmatprep.subr.mxu0 0.0
    %v2657 = vand.u32 %v2638, 4294901760
    %2658 = vmatpush1.msra.mxu0 %v2657
    %2659 = vmatprep.subr.mxu0 0.0
    %v2660 = vand.u32 %v2639, 4294901760
    %2661 = vmatpush1.msra.mxu0 %v2660
    %2662 = vmatprep.subr.mxu0 0.0
    %v2663 = vand.u32 %v2640, 4294901760
    %2664 = vmatpush1.msra.mxu0 %v2663
    %2665 = vmatprep.subr.mxu0 0.0
    %v2666 = vand.u32 %v2641, 4294901760
    %2667 = vmatpush1.msra.mxu0 %v2666
    %2668 = vmatprep.subr.mxu0 0.0
    %v2669 = vand.u32 %v2642, 4294901760
    %2670 = vmatpush1.msra.mxu0 %v2669
    %2671 = vmatprep.subr.mxu0 0.0
    %v2672 = vand.u32 %v2643, 4294901760
    %2673 = vmatpush1.msra.mxu0 %v2672
    %2674 = vmatprep.subr.mxu0 0.0
    %v2675 = vand.u32 %v2644, 4294901760
    %2676 = vmatpush1.msra.mxu0 %v2675
    %2677 = vmatprep.subr.mxu0 0.0
    %v2678 = vand.u32 %v2645, 4294901760
    %2679 = vmatpush1.msra.mxu0 %v2678
    %2680 = vmatprep.subr.mxu0 0.0
    %v2681 = vand.u32 %v2646, 4294901760
    %2682 = vmatpush1.msra.mxu0 %v2681
    %2683 = vmatprep.subr.mxu0 0.0
    %v2684 = vand.u32 %v2647, 4294901760
    %2685 = vmatpush1.msra.mxu0 %v2684
    %2686 = vmatprep.subr.mxu0 0.0
    %v2687 = vand.u32 %v2648, 4294901760
    %2688 = vmatpush1.msra.mxu0 %v2687
    %2689 = vmatprep.subr.mxu0 0.0
    %v2690 = vand.u32 %v2649, 4294901760
    %2691 = vmatpush1.msra.mxu0 %v2690
    %2692 = vmatprep.subr.mxu0 0.0
    %v2693 = vand.u32 %v2650, 4294901760
    %2694 = vmatpush1.msra.mxu0 %v2693
    %2695 = vmatprep.subr.mxu0 0.0
    %v2696 = vand.u32 %v2651, 4294901760
    %2697 = vmatpush1.msra.mxu0 %v2696
    %2698 = vmatprep.subr.mxu0 0.0
    %v2699 = vand.u32 %v2652, 4294901760
    %2700 = vmatpush1.msra.mxu0 %v2699
    %2701 = vmatprep.subr.mxu0 0.0
    %2702 = vmatpush1.msra.mxu0 0.0
    %2703 = vmatprep.subr.mxu0 0.0
    %2704 = vmatpush1.msra.mxu0 0.0
    %2705 = vmatprep.subr.mxu0 0.0
    %2706 = vmatpush1.msra.mxu0 0.0
    %2707 = vmatprep.subr.mxu0 0.0
    %2708 = vmatpush1.msra.mxu0 0.0
    %2709 = vmatprep.subr.mxu0 0.0
    %2710 = vmatpush1.msra.mxu0 0.0
    %2711 = vmatprep.subr.mxu0 0.0
    %2712 = vmatpush1.msra.mxu0 0.0
    %2713 = vmatprep.subr.mxu0 0.0
    %2714 = vmatpush1.msra.mxu0 0.0
    %2715 = vmatprep.subr.mxu0 0.0
    %2716 = vmatpush1.msra.mxu0 0.0
    %2717 = vmatprep.subr.mxu0 0.0
    %2718 = vmatpush1.msra.mxu0 0.0
    %2719 = vmatprep.subr.mxu0 0.0
    %2720 = vmatpush1.msra.mxu0 0.0
    %2721 = vmatprep.subr.mxu0 0.0
    %2722 = vmatpush1.msra.mxu0 0.0
    %2723 = vmatprep.subr.mxu0 0.0
    %2724 = vmatpush1.msra.mxu0 0.0
    %2725 = vmatprep.subr.mxu0 0.0
    %2726 = vmatpush1.msra.mxu0 0.0
    %2727 = vmatprep.subr.mxu0 0.0
    %2728 = vmatpush1.msra.mxu0 0.0
    %2729 = vmatprep.subr.mxu0 0.0
    %2730 = vmatpush1.msra.mxu0 0.0
    %2731 = vmatprep.subr.mxu0 0.0
    %2732 = vmatpush1.msra.mxu0 0.0
    %2733 = vmatprep.mubr.f32.mxu0 0.0
    %v2734 = vand.u32 %v2634, 4294901760
    %v2735 = vsub.f32 %v2634, %v2734
    %v2736 = vand.u32 %v2735, 4294901760
    %v2737 = vsub.f32 %v2735, %v2736
    %v2738 = vand.u32 %v2737, 4294901760
    %2739 = vmatmul.mubr.f32.gmra.mrb[0].mxu0 %v2738
    %v2740 = vpop.f32.mrb[0].mxu0
    %v2741 = vadd.f32 0.0, %v2740
    %v2742 = vpop.f32.mrb[0].mxu0
    %2743 = vmatprep.mubr.f32.mxu0 0.0
    %v2744 = vand.u32 %v2635, 4294901760
    %v2745 = vsub.f32 %v2635, %v2744
    %v2746 = vand.u32 %v2745, 4294901760
    %v2747 = vsub.f32 %v2745, %v2746
    %v2748 = vand.u32 %v2747, 4294901760
    %2749 = vmatmul.mubr.f32.gmra.mrb[0].mxu0 %v2748
    %v2750 = vpop.f32.mrb[0].mxu0
    %v2751 = vadd.f32 0.0, %v2750
    %v2752 = vpop.f32.mrb[0].mxu0
    %2753 = vdwg.mxu0
    %2754 = vmatprep.subr.mxu0 0.0
    %v2755 = vand.u32 %v2637, 4294901760
    %v2756 = vsub.f32 %v2637, %v2755
    %v2757 = vand.u32 %v2756, 4294901760
    %v2758 = vsub.f32 %v2756, %v2757
    %v2759 = vand.u32 %v2758, 4294901760
    %2760 = vmatpush1.msra.mxu0 %v2759
    %2761 = vmatprep.subr.mxu0 0.0
    %v2762 = vand.u32 %v2638, 4294901760
    %v2763 = vsub.f32 %v2638, %v2762
    %v2764 = vand.u32 %v2763, 4294901760
    %v2765 = vsub.f32 %v2763, %v2764
    %v2766 = vand.u32 %v2765, 4294901760
    %2767 = vmatpush1.msra.mxu0 %v2766
    %2768 = vmatprep.subr.mxu0 0.0
    %v2769 = vand.u32 %v2639, 4294901760
    %v2770 = vsub.f32 %v2639, %v2769
    %v2771 = vand.u32 %v2770, 4294901760
    %v2772 = vsub.f32 %v2770, %v2771
    %v2773 = vand.u32 %v2772, 4294901760
    %2774 = vmatpush1.msra.mxu0 %v2773
    %2775 = vmatprep.subr.mxu0 0.0
    %v2776 = vand.u32 %v2640, 4294901760
    %v2777 = vsub.f32 %v2640, %v2776
    %v2778 = vand.u32 %v2777, 4294901760
    %v2779 = vsub.f32 %v2777, %v2778
    %v2780 = vand.u32 %v2779, 4294901760
    %2781 = vmatpush1.msra.mxu0 %v2780
    %2782 = vmatprep.subr.mxu0 0.0
    %v2783 = vand.u32 %v2641, 4294901760
    %v2784 = vsub.f32 %v2641, %v2783
    %v2785 = vand.u32 %v2784, 4294901760
    %v2786 = vsub.f32 %v2784, %v2785
    %v2787 = vand.u32 %v2786, 4294901760
    %2788 = vmatpush1.msra.mxu0 %v2787
    %2789 = vmatprep.subr.mxu0 0.0
    %v2790 = vand.u32 %v2642, 4294901760
    %v2791 = vsub.f32 %v2642, %v2790
    %v2792 = vand.u32 %v2791, 4294901760
    %v2793 = vsub.f32 %v2791, %v2792
    %v2794 = vand.u32 %v2793, 4294901760
    %2795 = vmatpush1.msra.mxu0 %v2794
    %2796 = vmatprep.subr.mxu0 0.0
    %v2797 = vand.u32 %v2643, 4294901760
    %v2798 = vsub.f32 %v2643, %v2797
    %v2799 = vand.u32 %v2798, 4294901760
    %v2800 = vsub.f32 %v2798, %v2799
    %v2801 = vand.u32 %v2800, 4294901760
    %2802 = vmatpush1.msra.mxu0 %v2801
    %2803 = vmatprep.subr.mxu0 0.0
    %v2804 = vand.u32 %v2644, 4294901760
    %v2805 = vsub.f32 %v2644, %v2804
    %v2806 = vand.u32 %v2805, 4294901760
    %v2807 = vsub.f32 %v2805, %v2806
    %v2808 = vand.u32 %v2807, 4294901760
    %2809 = vmatpush1.msra.mxu0 %v2808
    %2810 = vmatprep.subr.mxu0 0.0
    %v2811 = vand.u32 %v2645, 4294901760
    %v2812 = vsub.f32 %v2645, %v2811
    %v2813 = vand.u32 %v2812, 4294901760
    %v2814 = vsub.f32 %v2812, %v2813
    %v2815 = vand.u32 %v2814, 4294901760
    %2816 = vmatpush1.msra.mxu0 %v2815
    %2817 = vmatprep.subr.mxu0 0.0
    %v2818 = vand.u32 %v2646, 4294901760
    %v2819 = vsub.f32 %v2646, %v2818
    %v2820 = vand.u32 %v2819, 4294901760
    %v2821 = vsub.f32 %v2819, %v2820
    %v2822 = vand.u32 %v2821, 4294901760
    %2823 = vmatpush1.msra.mxu0 %v2822
    %2824 = vmatprep.subr.mxu0 0.0
    %v2825 = vand.u32 %v2647, 4294901760
    %v2826 = vsub.f32 %v2647, %v2825
    %v2827 = vand.u32 %v2826, 4294901760
    %v2828 = vsub.f32 %v2826, %v2827
    %v2829 = vand.u32 %v2828, 4294901760
    %2830 = vmatpush1.msra.mxu0 %v2829
    %2831 = vmatprep.subr.mxu0 0.0
    %v2832 = vand.u32 %v2648, 4294901760
    %v2833 = vsub.f32 %v2648, %v2832
    %v2834 = vand.u32 %v2833, 4294901760
    %v2835 = vsub.f32 %v2833, %v2834
    %v2836 = vand.u32 %v2835, 4294901760
    %2837 = vmatpush1.msra.mxu0 %v2836
    %2838 = vmatprep.subr.mxu0 0.0
    %v2839 = vand.u32 %v2649, 4294901760
    %v2840 = vsub.f32 %v2649, %v2839
    %v2841 = vand.u32 %v2840, 4294901760
    %v2842 = vsub.f32 %v2840, %v2841
    %v2843 = vand.u32 %v2842, 4294901760
    %2844 = vmatpush1.msra.mxu0 %v2843
    %2845 = vmatprep.subr.mxu0 0.0
    %v2846 = vand.u32 %v2650, 4294901760
    %v2847 = vsub.f32 %v2650, %v2846
    %v2848 = vand.u32 %v2847, 4294901760
    %v2849 = vsub.f32 %v2847, %v2848
    %v2850 = vand.u32 %v2849, 4294901760
    %2851 = vmatpush1.msra.mxu0 %v2850
    %2852 = vmatprep.subr.mxu0 0.0
    %v2853 = vand.u32 %v2651, 4294901760
    %v2854 = vsub.f32 %v2651, %v2853
    %v2855 = vand.u32 %v2854, 4294901760
    %v2856 = vsub.f32 %v2854, %v2855
    %v2857 = vand.u32 %v2856, 4294901760
    %2858 = vmatpush1.msra.mxu0 %v2857
    %2859 = vmatprep.subr.mxu0 0.0
    %v2860 = vand.u32 %v2652, 4294901760
    %v2861 = vsub.f32 %v2652, %v2860
    %v2862 = vand.u32 %v2861, 4294901760
    %v2863 = vsub.f32 %v2861, %v2862
    %v2864 = vand.u32 %v2863, 4294901760
    %2865 = vmatpush1.msra.mxu0 %v2864
    %2866 = vmatprep.subr.mxu0 0.0
    %2867 = vmatpush1.msra.mxu0 0.0
    %2868 = vmatprep.subr.mxu0 0.0
    %2869 = vmatpush1.msra.mxu0 0.0
    %2870 = vmatprep.subr.mxu0 0.0
    %2871 = vmatpush1.msra.mxu0 0.0
    %2872 = vmatprep.subr.mxu0 0.0
    %2873 = vmatpush1.msra.mxu0 0.0
    %2874 = vmatprep.subr.mxu0 0.0
    %2875 = vmatpush1.msra.mxu0 0.0
    %2876 = vmatprep.subr.mxu0 0.0
    %2877 = vmatpush1.msra.mxu0 0.0
    %2878 = vmatprep.subr.mxu0 0.0
    %2879 = vmatpush1.msra.mxu0 0.0
    %2880 = vmatprep.subr.mxu0 0.0
    %2881 = vmatpush1.msra.mxu0 0.0
    %2882 = vmatprep.subr.mxu0 0.0
    %2883 = vmatpush1.msra.mxu0 0.0
    %2884 = vmatprep.subr.mxu0 0.0
    %2885 = vmatpush1.msra.mxu0 0.0
    %2886 = vmatprep.subr.mxu0 0.0
    %2887 = vmatpush1.msra.mxu0 0.0
    %2888 = vmatprep.subr.mxu0 0.0
    %2889 = vmatpush1.msra.mxu0 0.0
    %2890 = vmatprep.subr.mxu0 0.0
    %2891 = vmatpush1.msra.mxu0 0.0
    %2892 = vmatprep.subr.mxu0 0.0
    %2893 = vmatpush1.msra.mxu0 0.0
    %2894 = vmatprep.subr.mxu0 0.0
    %2895 = vmatpush1.msra.mxu0 0.0
    %2896 = vmatprep.subr.mxu0 0.0
    %2897 = vmatpush1.msra.mxu0 0.0
    %2898 = vmatprep.mubr.f32.mxu0 0.0
    %v2899 = vand.u32 %v2634, 4294901760
    %2900 = vmatmul.mubr.f32.gmra.mrb[0].mxu0 %v2899
    %v2901 = vpop.f32.mrb[0].mxu0
    %v2902 = vadd.f32 %v2741, %v2901
    %v2903 = vpop.f32.mrb[0].mxu0
    %2904 = vmatprep.mubr.f32.mxu0 0.0
    %v2905 = vand.u32 %v2635, 4294901760
    %2906 = vmatmul.mubr.f32.gmra.mrb[0].mxu0 %v2905
    %v2907 = vpop.f32.mrb[0].mxu0
    %v2908 = vadd.f32 %v2751, %v2907
    %v2909 = vpop.f32.mrb[0].mxu0
    %2910 = vdwg.mxu0
    %2911 = vmatprep.subr.mxu0 0.0
    %v2912 = vand.u32 %v2637, 4294901760
    %v2913 = vsub.f32 %v2637, %v2912
    %2914 = vmatpush1.msra.mxu0 %v2913
    %2915 = vmatprep.subr.mxu0 0.0
    %v2916 = vand.u32 %v2638, 4294901760
    %v2917 = vsub.f32 %v2638, %v2916
    %2918 = vmatpush1.msra.mxu0 %v2917
    %2919 = vmatprep.subr.mxu0 0.0
    %v2920 = vand.u32 %v2639, 4294901760
    %v2921 = vsub.f32 %v2639, %v2920
    %2922 = vmatpush1.msra.mxu0 %v2921
    %2923 = vmatprep.subr.mxu0 0.0
    %v2924 = vand.u32 %v2640, 4294901760
    %v2925 = vsub.f32 %v2640, %v2924
    %2926 = vmatpush1.msra.mxu0 %v2925
    %2927 = vmatprep.subr.mxu0 0.0
    %v2928 = vand.u32 %v2641, 4294901760
    %v2929 = vsub.f32 %v2641, %v2928
    %2930 = vmatpush1.msra.mxu0 %v2929
    %2931 = vmatprep.subr.mxu0 0.0
    %v2932 = vand.u32 %v2642, 4294901760
    %v2933 = vsub.f32 %v2642, %v2932
    %2934 = vmatpush1.msra.mxu0 %v2933
    %2935 = vmatprep.subr.mxu0 0.0
    %v2936 = vand.u32 %v2643, 4294901760
    %v2937 = vsub.f32 %v2643, %v2936
    %2938 = vmatpush1.msra.mxu0 %v2937
    %2939 = vmatprep.subr.mxu0 0.0
    %v2940 = vand.u32 %v2644, 4294901760
    %v2941 = vsub.f32 %v2644, %v2940
    %2942 = vmatpush1.msra.mxu0 %v2941
    %2943 = vmatprep.subr.mxu0 0.0
    %v2944 = vand.u32 %v2645, 4294901760
    %v2945 = vsub.f32 %v2645, %v2944
    %2946 = vmatpush1.msra.mxu0 %v2945
    %2947 = vmatprep.subr.mxu0 0.0
    %v2948 = vand.u32 %v2646, 4294901760
    %v2949 = vsub.f32 %v2646, %v2948
    %2950 = vmatpush1.msra.mxu0 %v2949
    %2951 = vmatprep.subr.mxu0 0.0
    %v2952 = vand.u32 %v2647, 4294901760
    %v2953 = vsub.f32 %v2647, %v2952
    %2954 = vmatpush1.msra.mxu0 %v2953
    %2955 = vmatprep.subr.mxu0 0.0
    %v2956 = vand.u32 %v2648, 4294901760
    %v2957 = vsub.f32 %v2648, %v2956
    %2958 = vmatpush1.msra.mxu0 %v2957
    %2959 = vmatprep.subr.mxu0 0.0
    %v2960 = vand.u32 %v2649, 4294901760
    %v2961 = vsub.f32 %v2649, %v2960
    %2962 = vmatpush1.msra.mxu0 %v2961
    %2963 = vmatprep.subr.mxu0 0.0
    %v2964 = vand.u32 %v2650, 4294901760
    %v2965 = vsub.f32 %v2650, %v2964
    %2966 = vmatpush1.msra.mxu0 %v2965
    %2967 = vmatprep.subr.mxu0 0.0
    %v2968 = vand.u32 %v2651, 4294901760
    %v2969 = vsub.f32 %v2651, %v2968
    %2970 = vmatpush1.msra.mxu0 %v2969
    %2971 = vmatprep.subr.mxu0 0.0
    %v2972 = vand.u32 %v2652, 4294901760
    %v2973 = vsub.f32 %v2652, %v2972
    %2974 = vmatpush1.msra.mxu0 %v2973
    %2975 = vmatprep.subr.mxu0 0.0
    %2976 = vmatpush1.msra.mxu0 0.0
    %2977 = vmatprep.subr.mxu0 0.0
    %2978 = vmatpush1.msra.mxu0 0.0
    %2979 = vmatprep.subr.mxu0 0.0
    %2980 = vmatpush1.msra.mxu0 0.0
    %2981 = vmatprep.subr.mxu0 0.0
    %2982 = vmatpush1.msra.mxu0 0.0
    %2983 = vmatprep.subr.mxu0 0.0
    %2984 = vmatpush1.msra.mxu0 0.0
    %2985 = vmatprep.subr.mxu0 0.0
    %2986 = vmatpush1.msra.mxu0 0.0
    %2987 = vmatprep.subr.mxu0 0.0
    %2988 = vmatpush1.msra.mxu0 0.0
    %2989 = vmatprep.subr.mxu0 0.0
    %2990 = vmatpush1.msra.mxu0 0.0
    %2991 = vmatprep.subr.mxu0 0.0
    %2992 = vmatpush1.msra.mxu0 0.0
    %2993 = vmatprep.subr.mxu0 0.0
    %2994 = vmatpush1.msra.mxu0 0.0
    %2995 = vmatprep.subr.mxu0 0.0
    %2996 = vmatpush1.msra.mxu0 0.0
    %2997 = vmatprep.subr.mxu0 0.0
    %2998 = vmatpush1.msra.mxu0 0.0
    %2999 = vmatprep.subr.mxu0 0.0
    %3000 = vmatpush1.msra.mxu0 0.0
    %3001 = vmatprep.subr.mxu0 0.0
    %3002 = vmatpush1.msra.mxu0 0.0
    %3003 = vmatprep.subr.mxu0 0.0
    %3004 = vmatpush1.msra.mxu0 0.0
    %3005 = vmatprep.subr.mxu0 0.0
    %3006 = vmatpush1.msra.mxu0 0.0
    %3007 = vmatprep.mubr.f32.mxu0 0.0
    %v3008 = vand.u32 %v2634, 4294901760
    %v3009 = vsub.f32 %v2634, %v3008
    %3010 = vmatmul.mubr.f32.gmra.mrb[0].mxu0 %v3009
    %v3011 = vpop.f32.mrb[0].mxu0
    %v3012 = vadd.f32 %v2902, %v3011
    %v3013 = vpop.f32.mrb[0].mxu0
    %3014 = vmatprep.mubr.f32.mxu0 0.0
    %v3015 = vand.u32 %v2635, 4294901760
    %v3016 = vsub.f32 %v2635, %v3015
    %3017 = vmatmul.mubr.f32.gmra.mrb[0].mxu0 %v3016
    %v3018 = vpop.f32.mrb[0].mxu0
    %v3019 = vadd.f32 %v2908, %v3018
    %v3020 = vpop.f32.mrb[0].mxu0
    %3021 = vdwg.mxu0
    %3022 = vmatprep.subr.mxu0 0.0
    %v3023 = vand.u32 %v2637, 4294901760
    %3024 = vmatpush1.msra.mxu0 %v3023
    %3025 = vmatprep.subr.mxu0 0.0
    %v3026 = vand.u32 %v2638, 4294901760
    %3027 = vmatpush1.msra.mxu0 %v3026
    %3028 = vmatprep.subr.mxu0 0.0
    %v3029 = vand.u32 %v2639, 4294901760
    %3030 = vmatpush1.msra.mxu0 %v3029
    %3031 = vmatprep.subr.mxu0 0.0
    %v3032 = vand.u32 %v2640, 4294901760
    %3033 = vmatpush1.msra.mxu0 %v3032
    %3034 = vmatprep.subr.mxu0 0.0
    %v3035 = vand.u32 %v2641, 4294901760
    %3036 = vmatpush1.msra.mxu0 %v3035
    %3037 = vmatprep.subr.mxu0 0.0
    %v3038 = vand.u32 %v2642, 4294901760
    %3039 = vmatpush1.msra.mxu0 %v3038
    %3040 = vmatprep.subr.mxu0 0.0
    %v3041 = vand.u32 %v2643, 4294901760
    %3042 = vmatpush1.msra.mxu0 %v3041
    %3043 = vmatprep.subr.mxu0 0.0
    %v3044 = vand.u32 %v2644, 4294901760
    %3045 = vmatpush1.msra.mxu0 %v3044
    %3046 = vmatprep.subr.mxu0 0.0
    %v3047 = vand.u32 %v2645, 4294901760
    %3048 = vmatpush1.msra.mxu0 %v3047
    %3049 = vmatprep.subr.mxu0 0.0
    %v3050 = vand.u32 %v2646, 4294901760
    %3051 = vmatpush1.msra.mxu0 %v3050
    %3052 = vmatprep.subr.mxu0 0.0
    %v3053 = vand.u32 %v2647, 4294901760
    %3054 = vmatpush1.msra.mxu0 %v3053
    %3055 = vmatprep.subr.mxu0 0.0
    %v3056 = vand.u32 %v2648, 4294901760
    %3057 = vmatpush1.msra.mxu0 %v3056
    %3058 = vmatprep.subr.mxu0 0.0
    %v3059 = vand.u32 %v2649, 4294901760
    %3060 = vmatpush1.msra.mxu0 %v3059
    %3061 = vmatprep.subr.mxu0 0.0
    %v3062 = vand.u32 %v2650, 4294901760
    %3063 = vmatpush1.msra.mxu0 %v3062
    %3064 = vmatprep.subr.mxu0 0.0
    %v3065 = vand.u32 %v2651, 4294901760
    %3066 = vmatpush1.msra.mxu0 %v3065
    %3067 = vmatprep.subr.mxu0 0.0
    %v3068 = vand.u32 %v2652, 4294901760
    %3069 = vmatpush1.msra.mxu0 %v3068
    %3070 = vmatprep.subr.mxu0 0.0
    %3071 = vmatpush1.msra.mxu0 0.0
    %3072 = vmatprep.subr.mxu0 0.0
    %3073 = vmatpush1.msra.mxu0 0.0
    %3074 = vmatprep.subr.mxu0 0.0
    %3075 = vmatpush1.msra.mxu0 0.0
    %3076 = vmatprep.subr.mxu0 0.0
    %3077 = vmatpush1.msra.mxu0 0.0
    %3078 = vmatprep.subr.mxu0 0.0
    %3079 = vmatpush1.msra.mxu0 0.0
    %3080 = vmatprep.subr.mxu0 0.0
    %3081 = vmatpush1.msra.mxu0 0.0
    %3082 = vmatprep.subr.mxu0 0.0
    %3083 = vmatpush1.msra.mxu0 0.0
    %3084 = vmatprep.subr.mxu0 0.0
    %3085 = vmatpush1.msra.mxu0 0.0
    %3086 = vmatprep.subr.mxu0 0.0
    %3087 = vmatpush1.msra.mxu0 0.0
    %3088 = vmatprep.subr.mxu0 0.0
    %3089 = vmatpush1.msra.mxu0 0.0
    %3090 = vmatprep.subr.mxu0 0.0
    %3091 = vmatpush1.msra.mxu0 0.0
    %3092 = vmatprep.subr.mxu0 0.0
    %3093 = vmatpush1.msra.mxu0 0.0
    %3094 = vmatprep.subr.mxu0 0.0
    %3095 = vmatpush1.msra.mxu0 0.0
    %3096 = vmatprep.subr.mxu0 0.0
    %3097 = vmatpush1.msra.mxu0 0.0
    %3098 = vmatprep.subr.mxu0 0.0
    %3099 = vmatpush1.msra.mxu0 0.0
    %3100 = vmatprep.subr.mxu0 0.0
    %3101 = vmatpush1.msra.mxu0 0.0
    %3102 = vmatprep.mubr.f32.mxu0 0.0
    %v3103 = vand.u32 %v2634, 4294901760
    %v3104 = vsub.f32 %v2634, %v3103
    %v3105 = vand.u32 %v3104, 4294901760
    %3106 = vmatmul.mubr.f32.gmra.mrb[0].mxu0 %v3105
    %v3107 = vpop.f32.mrb[0].mxu0
    %v3108 = vadd.f32 %v3012, %v3107
    %v3109 = vpop.f32.mrb[0].mxu0
    %3110 = vmatprep.mubr.f32.mxu0 0.0
    %v3111 = vand.u32 %v2635, 4294901760
    %v3112 = vsub.f32 %v2635, %v3111
    %v3113 = vand.u32 %v3112, 4294901760
    %3114 = vmatmul.mubr.f32.gmra.mrb[0].mxu0 %v3113
    %v3115 = vpop.f32.mrb[0].mxu0
    %v3116 = vadd.f32 %v3019, %v3115
    %v3117 = vpop.f32.mrb[0].mxu0
    %3118 = vdwg.mxu0
    %3119 = vmatprep.subr.mxu0 0.0
    %v3120 = vand.u32 %v2637, 4294901760
    %v3121 = vsub.f32 %v2637, %v3120
    %v3122 = vand.u32 %v3121, 4294901760
    %3123 = vmatpush1.msra.mxu0 %v3122
    %3124 = vmatprep.subr.mxu0 0.0
    %v3125 = vand.u32 %v2638, 4294901760
    %v3126 = vsub.f32 %v2638, %v3125
    %v3127 = vand.u32 %v3126, 4294901760
    %3128 = vmatpush1.msra.mxu0 %v3127
    %3129 = vmatprep.subr.mxu0 0.0
    %v3130 = vand.u32 %v2639, 4294901760
    %v3131 = vsub.f32 %v2639, %v3130
    %v3132 = vand.u32 %v3131, 4294901760
    %3133 = vmatpush1.msra.mxu0 %v3132
    %3134 = vmatprep.subr.mxu0 0.0
    %v3135 = vand.u32 %v2640, 4294901760
    %v3136 = vsub.f32 %v2640, %v3135
    %v3137 = vand.u32 %v3136, 4294901760
    %3138 = vmatpush1.msra.mxu0 %v3137
    %3139 = vmatprep.subr.mxu0 0.0
    %v3140 = vand.u32 %v2641, 4294901760
    %v3141 = vsub.f32 %v2641, %v3140
    %v3142 = vand.u32 %v3141, 4294901760
    %3143 = vmatpush1.msra.mxu0 %v3142
    %3144 = vmatprep.subr.mxu0 0.0
    %v3145 = vand.u32 %v2642, 4294901760
    %v3146 = vsub.f32 %v2642, %v3145
    %v3147 = vand.u32 %v3146, 4294901760
    %3148 = vmatpush1.msra.mxu0 %v3147
    %3149 = vmatprep.subr.mxu0 0.0
    %v3150 = vand.u32 %v2643, 4294901760
    %v3151 = vsub.f32 %v2643, %v3150
    %v3152 = vand.u32 %v3151, 4294901760
    %3153 = vmatpush1.msra.mxu0 %v3152
    %3154 = vmatprep.subr.mxu0 0.0
    %v3155 = vand.u32 %v2644, 4294901760
    %v3156 = vsub.f32 %v2644, %v3155
    %v3157 = vand.u32 %v3156, 4294901760
    %3158 = vmatpush1.msra.mxu0 %v3157
    %3159 = vmatprep.subr.mxu0 0.0
    %v3160 = vand.u32 %v2645, 4294901760
    %v3161 = vsub.f32 %v2645, %v3160
    %v3162 = vand.u32 %v3161, 4294901760
    %3163 = vmatpush1.msra.mxu0 %v3162
    %3164 = vmatprep.subr.mxu0 0.0
    %v3165 = vand.u32 %v2646, 4294901760
    %v3166 = vsub.f32 %v2646, %v3165
    %v3167 = vand.u32 %v3166, 4294901760
    %3168 = vmatpush1.msra.mxu0 %v3167
    %3169 = vmatprep.subr.mxu0 0.0
    %v3170 = vand.u32 %v2647, 4294901760
    %v3171 = vsub.f32 %v2647, %v3170
    %v3172 = vand.u32 %v3171, 4294901760
    %3173 = vmatpush1.msra.mxu0 %v3172
    %3174 = vmatprep.subr.mxu0 0.0
    %v3175 = vand.u32 %v2648, 4294901760
    %v3176 = vsub.f32 %v2648, %v3175
    %v3177 = vand.u32 %v3176, 4294901760
    %3178 = vmatpush1.msra.mxu0 %v3177
    %3179 = vmatprep.subr.mxu0 0.0
    %v3180 = vand.u32 %v2649, 4294901760
    %v3181 = vsub.f32 %v2649, %v3180
    %v3182 = vand.u32 %v3181, 4294901760
    %3183 = vmatpush1.msra.mxu0 %v3182
    %3184 = vmatprep.subr.mxu0 0.0
    %v3185 = vand.u32 %v2650, 4294901760
    %v3186 = vsub.f32 %v2650, %v3185
    %v3187 = vand.u32 %v3186, 4294901760
    %3188 = vmatpush1.msra.mxu0 %v3187
    %3189 = vmatprep.subr.mxu0 0.0
    %v3190 = vand.u32 %v2651, 4294901760
    %v3191 = vsub.f32 %v2651, %v3190
    %v3192 = vand.u32 %v3191, 4294901760
    %3193 = vmatpush1.msra.mxu0 %v3192
    %3194 = vmatprep.subr.mxu0 0.0
    %v3195 = vand.u32 %v2652, 4294901760
    %v3196 = vsub.f32 %v2652, %v3195
    %v3197 = vand.u32 %v3196, 4294901760
    %3198 = vmatpush1.msra.mxu0 %v3197
    %3199 = vmatprep.subr.mxu0 0.0
    %3200 = vmatpush1.msra.mxu0 0.0
    %3201 = vmatprep.subr.mxu0 0.0
    %3202 = vmatpush1.msra.mxu0 0.0
    %3203 = vmatprep.subr.mxu0 0.0
    %3204 = vmatpush1.msra.mxu0 0.0
    %3205 = vmatprep.subr.mxu0 0.0
    %3206 = vmatpush1.msra.mxu0 0.0
    %3207 = vmatprep.subr.mxu0 0.0
    %3208 = vmatpush1.msra.mxu0 0.0
    %3209 = vmatprep.subr.mxu0 0.0
    %3210 = vmatpush1.msra.mxu0 0.0
    %3211 = vmatprep.subr.mxu0 0.0
    %3212 = vmatpush1.msra.mxu0 0.0
    %3213 = vmatprep.subr.mxu0 0.0
    %3214 = vmatpush1.msra.mxu0 0.0
    %3215 = vmatprep.subr.mxu0 0.0
    %3216 = vmatpush1.msra.mxu0 0.0
    %3217 = vmatprep.subr.mxu0 0.0
    %3218 = vmatpush1.msra.mxu0 0.0
    %3219 = vmatprep.subr.mxu0 0.0
    %3220 = vmatpush1.msra.mxu0 0.0
    %3221 = vmatprep.subr.mxu0 0.0
    %3222 = vmatpush1.msra.mxu0 0.0
    %3223 = vmatprep.subr.mxu0 0.0
    %3224 = vmatpush1.msra.mxu0 0.0
    %3225 = vmatprep.subr.mxu0 0.0
    %3226 = vmatpush1.msra.mxu0 0.0
    %3227 = vmatprep.subr.mxu0 0.0
    %3228 = vmatpush1.msra.mxu0 0.0
    %3229 = vmatprep.subr.mxu0 0.0
    %3230 = vmatpush1.msra.mxu0 0.0
    %3231 = vmatprep.mubr.f32.mxu0 0.0
    %v3232 = vand.u32 %v2634, 4294901760
    %3233 = vmatmul.mubr.f32.gmra.mrb[0].mxu0 %v3232
    %v3234 = vpop.f32.mrb[0].mxu0
    %v3235 = vadd.f32 %v3108, %v3234
    %v3236 = vpop.f32.mrb[0].mxu0
    %3237 = vmatprep.mubr.f32.mxu0 0.0
    %v3238 = vand.u32 %v2635, 4294901760
    %3239 = vmatmul.mubr.f32.gmra.mrb[0].mxu0 %v3238
    %v3240 = vpop.f32.mrb[0].mxu0
    %v3241 = vadd.f32 %v3116, %v3240
    %v3242 = vpop.f32.mrb[0].mxu0
    %3243 = vdwg.mxu0
    %3244 = vmatprep.subr.mxu0 0.0
    %v3245 = vand.u32 %v2637, 4294901760
    %3246 = vmatpush1.msra.mxu0 %v3245
    %3247 = vmatprep.subr.mxu0 0.0
    %v3248 = vand.u32 %v2638, 4294901760
    %3249 = vmatpush1.msra.mxu0 %v3248
    %3250 = vmatprep.subr.mxu0 0.0
    %v3251 = vand.u32 %v2639, 4294901760
    %3252 = vmatpush1.msra.mxu0 %v3251
    %3253 = vmatprep.subr.mxu0 0.0
    %v3254 = vand.u32 %v2640, 4294901760
    %3255 = vmatpush1.msra.mxu0 %v3254
    %3256 = vmatprep.subr.mxu0 0.0
    %v3257 = vand.u32 %v2641, 4294901760
    %3258 = vmatpush1.msra.mxu0 %v3257
    %3259 = vmatprep.subr.mxu0 0.0
    %v3260 = vand.u32 %v2642, 4294901760
    %3261 = vmatpush1.msra.mxu0 %v3260
    %3262 = vmatprep.subr.mxu0 0.0
    %v3263 = vand.u32 %v2643, 4294901760
    %3264 = vmatpush1.msra.mxu0 %v3263
    %3265 = vmatprep.subr.mxu0 0.0
    %v3266 = vand.u32 %v2644, 4294901760
    %3267 = vmatpush1.msra.mxu0 %v3266
    %3268 = vmatprep.subr.mxu0 0.0
    %v3269 = vand.u32 %v2645, 4294901760
    %3270 = vmatpush1.msra.mxu0 %v3269
    %3271 = vmatprep.subr.mxu0 0.0
    %v3272 = vand.u32 %v2646, 4294901760
    %3273 = vmatpush1.msra.mxu0 %v3272
    %3274 = vmatprep.subr.mxu0 0.0
    %v3275 = vand.u32 %v2647, 4294901760
    %3276 = vmatpush1.msra.mxu0 %v3275
    %3277 = vmatprep.subr.mxu0 0.0
    %v3278 = vand.u32 %v2648, 4294901760
    %3279 = vmatpush1.msra.mxu0 %v3278
    %3280 = vmatprep.subr.mxu0 0.0
    %v3281 = vand.u32 %v2649, 4294901760
    %3282 = vmatpush1.msra.mxu0 %v3281
    %3283 = vmatprep.subr.mxu0 0.0
    %v3284 = vand.u32 %v2650, 4294901760
    %3285 = vmatpush1.msra.mxu0 %v3284
    %3286 = vmatprep.subr.mxu0 0.0
    %v3287 = vand.u32 %v2651, 4294901760
    %3288 = vmatpush1.msra.mxu0 %v3287
    %3289 = vmatprep.subr.mxu0 0.0
    %v3290 = vand.u32 %v2652, 4294901760
    %3291 = vmatpush1.msra.mxu0 %v3290
    %3292 = vmatprep.subr.mxu0 0.0
    %3293 = vmatpush1.msra.mxu0 0.0
    %3294 = vmatprep.subr.mxu0 0.0
    %3295 = vmatpush1.msra.mxu0 0.0
    %3296 = vmatprep.subr.mxu0 0.0
    %3297 = vmatpush1.msra.mxu0 0.0
    %3298 = vmatprep.subr.mxu0 0.0
    %3299 = vmatpush1.msra.mxu0 0.0
    %3300 = vmatprep.subr.mxu0 0.0
    %3301 = vmatpush1.msra.mxu0 0.0
    %3302 = vmatprep.subr.mxu0 0.0
    %3303 = vmatpush1.msra.mxu0 0.0
    %3304 = vmatprep.subr.mxu0 0.0
    %3305 = vmatpush1.msra.mxu0 0.0
    %3306 = vmatprep.subr.mxu0 0.0
    %3307 = vmatpush1.msra.mxu0 0.0
    %3308 = vmatprep.subr.mxu0 0.0
    %3309 = vmatpush1.msra.mxu0 0.0
    %3310 = vmatprep.subr.mxu0 0.0
    %3311 = vmatpush1.msra.mxu0 0.0
    %3312 = vmatprep.subr.mxu0 0.0
    %3313 = vmatpush1.msra.mxu0 0.0
    %3314 = vmatprep.subr.mxu0 0.0
    %3315 = vmatpush1.msra.mxu0 0.0
    %3316 = vmatprep.subr.mxu0 0.0
    %3317 = vmatpush1.msra.mxu0 0.0
    %3318 = vmatprep.subr.mxu0 0.0
    %3319 = vmatpush1.msra.mxu0 0.0
    %3320 = vmatprep.subr.mxu0 0.0
    %3321 = vmatpush1.msra.mxu0 0.0
    %3322 = vmatprep.subr.mxu0 0.0
    %3323 = vmatpush1.msra.mxu0 0.0
    %3324 = vmatprep.mubr.f32.mxu0 0.0
    %v3325 = vand.u32 %v2634, 4294901760
    %3326 = vmatmul.mubr.f32.gmra.mrb[0].mxu0 %v3325
    %v3327 = vpop.f32.mrb[0].mxu0
    %v3328 = vadd.f32 %v3235, %v3327
    %v3329 = vpop.f32.mrb[0].mxu0
    %3330 = vmatprep.mubr.f32.mxu0 0.0
    %v3331 = vand.u32 %v2635, 4294901760
    %3332 = vmatmul.mubr.f32.gmra.mrb[0].mxu0 %v3331
    %v3333 = vpop.f32.mrb[0].mxu0
    %v3334 = vadd.f32 %v3241, %v3333
    %v3335 = vpop.f32.mrb[0].mxu0
    %3336 = vdwg.mxu0
    %v3337 = vadd.f32 %v1919, %v3328
    %v3338 = vadd.f32 %v1926, %v3334
    %v3339 = vmax.f32 %v3337, 0.0
    %v3340 = vmax.f32 %v3338, 0.0
    %s3341 = scalar_lea.vmem [#allocation7], 256
    %v3342 = vld [vmem:[%s3341] sm:$0xff]
    %v3343 = vld [vmem:[%s3341 + $0x8] sm:$0xff]
    %v3344 = vld [vmem:[%s3341 + $0x10] sm:$0xff]
    %v3345 = vld [vmem:[%s3341 + $0x18] sm:$0xff]
    %v3346 = vld [vmem:[%s3341 + $0x20] sm:$0xff]
    %v3347 = vld [vmem:[%s3341 + $0x28] sm:$0xff]
    %v3348 = vld [vmem:[%s3341 + $0x30] sm:$0xff]
    %v3349 = vld [vmem:[%s3341 + $0x38] sm:$0xff]
    %v3350 = vld [vmem:[%s3341 + $0x40] sm:$0xff]
    %v3351 = vld [vmem:[%s3341 + $0x48] sm:$0xff]
    %v3352 = vld [vmem:[%s3341 + $0x50] sm:$0xff]
    %v3353 = vld [vmem:[%s3341 + $0x58] sm:$0xff]
    %v3354 = vld [vmem:[%s3341 + $0x60] sm:$0xff]
    %v3355 = vld [vmem:[%s3341 + $0x68] sm:$0xff]
    %v3356 = vld [vmem:[%s3341 + $0x70] sm:$0xff]
    %v3357 = vld [vmem:[%s3341 + $0x78] sm:$0xff]
    %3358 = vmatprep.subr.mxu0 0.0
    %v3359 = vand.u32 %v3342, 4294901760
    %3360 = vmatpush1.msra.mxu0 %v3359
    %3361 = vmatprep.subr.mxu0 0.0
    %v3362 = vand.u32 %v3343, 4294901760
    %3363 = vmatpush1.msra.mxu0 %v3362
    %3364 = vmatprep.subr.mxu0 0.0
    %v3365 = vand.u32 %v3344, 4294901760
    %3366 = vmatpush1.msra.mxu0 %v3365
    %3367 = vmatprep.subr.mxu0 0.0
    %v3368 = vand.u32 %v3345, 4294901760
    %3369 = vmatpush1.msra.mxu0 %v3368
    %3370 = vmatprep.subr.mxu0 0.0
    %v3371 = vand.u32 %v3346, 4294901760
    %3372 = vmatpush1.msra.mxu0 %v3371
    %3373 = vmatprep.subr.mxu0 0.0
    %v3374 = vand.u32 %v3347, 4294901760
    %3375 = vmatpush1.msra.mxu0 %v3374
    %3376 = vmatprep.subr.mxu0 0.0
    %v3377 = vand.u32 %v3348, 4294901760
    %3378 = vmatpush1.msra.mxu0 %v3377
    %3379 = vmatprep.subr.mxu0 0.0
    %v3380 = vand.u32 %v3349, 4294901760
    %3381 = vmatpush1.msra.mxu0 %v3380
    %3382 = vmatprep.subr.mxu0 0.0
    %v3383 = vand.u32 %v3350, 4294901760
    %3384 = vmatpush1.msra.mxu0 %v3383
    %3385 = vmatprep.subr.mxu0 0.0
    %v3386 = vand.u32 %v3351, 4294901760
    %3387 = vmatpush1.msra.mxu0 %v3386
    %3388 = vmatprep.subr.mxu0 0.0
    %v3389 = vand.u32 %v3352, 4294901760
    %3390 = vmatpush1.msra.mxu0 %v3389
    %3391 = vmatprep.subr.mxu0 0.0
    %v3392 = vand.u32 %v3353, 4294901760
    %3393 = vmatpush1.msra.mxu0 %v3392
    %3394 = vmatprep.subr.mxu0 0.0
    %v3395 = vand.u32 %v3354, 4294901760
    %3396 = vmatpush1.msra.mxu0 %v3395
    %3397 = vmatprep.subr.mxu0 0.0
    %v3398 = vand.u32 %v3355, 4294901760
    %3399 = vmatpush1.msra.mxu0 %v3398
    %3400 = vmatprep.subr.mxu0 0.0
    %v3401 = vand.u32 %v3356, 4294901760
    %3402 = vmatpush1.msra.mxu0 %v3401
    %3403 = vmatprep.subr.mxu0 0.0
    %v3404 = vand.u32 %v3357, 4294901760
    %3405 = vmatpush1.msra.mxu0 %v3404
    %3406 = vmatprep.subr.mxu0 0.0
    %3407 = vmatpush1.msra.mxu0 0.0
    %3408 = vmatprep.subr.mxu0 0.0
    %3409 = vmatpush1.msra.mxu0 0.0
    %3410 = vmatprep.subr.mxu0 0.0
    %3411 = vmatpush1.msra.mxu0 0.0
    %3412 = vmatprep.subr.mxu0 0.0
    %3413 = vmatpush1.msra.mxu0 0.0
    %3414 = vmatprep.subr.mxu0 0.0
    %3415 = vmatpush1.msra.mxu0 0.0
    %3416 = vmatprep.subr.mxu0 0.0
    %3417 = vmatpush1.msra.mxu0 0.0
    %3418 = vmatprep.subr.mxu0 0.0
    %3419 = vmatpush1.msra.mxu0 0.0
    %3420 = vmatprep.subr.mxu0 0.0
    %3421 = vmatpush1.msra.mxu0 0.0
    %3422 = vmatprep.subr.mxu0 0.0
    %3423 = vmatpush1.msra.mxu0 0.0
    %3424 = vmatprep.subr.mxu0 0.0
    %3425 = vmatpush1.msra.mxu0 0.0
    %3426 = vmatprep.subr.mxu0 0.0
    %3427 = vmatpush1.msra.mxu0 0.0
    %3428 = vmatprep.subr.mxu0 0.0
    %3429 = vmatpush1.msra.mxu0 0.0
    %3430 = vmatprep.subr.mxu0 0.0
    %3431 = vmatpush1.msra.mxu0 0.0
    %3432 = vmatprep.subr.mxu0 0.0
    %3433 = vmatpush1.msra.mxu0 0.0
    %3434 = vmatprep.subr.mxu0 0.0
    %3435 = vmatpush1.msra.mxu0 0.0
    %3436 = vmatprep.subr.mxu0 0.0
    %3437 = vmatpush1.msra.mxu0 0.0
    %3438 = vmatprep.mubr.f32.mxu0 0.0
    %v3439 = vand.u32 %v3339, 4294901760
    %v3440 = vsub.f32 %v3339, %v3439
    %v3441 = vand.u32 %v3440, 4294901760
    %v3442 = vsub.f32 %v3440, %v3441
    %v3443 = vand.u32 %v3442, 4294901760
    %3444 = vmatmul.mubr.f32.gmra.mrb[0].mxu0 %v3443
    %v3445 = vpop.f32.mrb[0].mxu0
    %v3446 = vadd.f32 0.0, %v3445
    %v3447 = vpop.f32.mrb[0].mxu0
    %3448 = vmatprep.mubr.f32.mxu0 0.0
    %v3449 = vand.u32 %v3340, 4294901760
    %v3450 = vsub.f32 %v3340, %v3449
    %v3451 = vand.u32 %v3450, 4294901760
    %v3452 = vsub.f32 %v3450, %v3451
    %v3453 = vand.u32 %v3452, 4294901760
    %3454 = vmatmul.mubr.f32.gmra.mrb[0].mxu0 %v3453
    %v3455 = vpop.f32.mrb[0].mxu0
    %v3456 = vadd.f32 0.0, %v3455
    %v3457 = vpop.f32.mrb[0].mxu0
    %3458 = vdwg.mxu0
    %3459 = vmatprep.subr.mxu0 0.0
    %v3460 = vand.u32 %v3342, 4294901760
    %v3461 = vsub.f32 %v3342, %v3460
    %v3462 = vand.u32 %v3461, 4294901760
    %v3463 = vsub.f32 %v3461, %v3462
    %v3464 = vand.u32 %v3463, 4294901760
    %3465 = vmatpush1.msra.mxu0 %v3464
    %3466 = vmatprep.subr.mxu0 0.0
    %v3467 = vand.u32 %v3343, 4294901760
    %v3468 = vsub.f32 %v3343, %v3467
    %v3469 = vand.u32 %v3468, 4294901760
    %v3470 = vsub.f32 %v3468, %v3469
    %v3471 = vand.u32 %v3470, 4294901760
    %3472 = vmatpush1.msra.mxu0 %v3471
    %3473 = vmatprep.subr.mxu0 0.0
    %v3474 = vand.u32 %v3344, 4294901760
    %v3475 = vsub.f32 %v3344, %v3474
    %v3476 = vand.u32 %v3475, 4294901760
    %v3477 = vsub.f32 %v3475, %v3476
    %v3478 = vand.u32 %v3477, 4294901760
    %3479 = vmatpush1.msra.mxu0 %v3478
    %3480 = vmatprep.subr.mxu0 0.0
    %v3481 = vand.u32 %v3345, 4294901760
    %v3482 = vsub.f32 %v3345, %v3481
    %v3483 = vand.u32 %v3482, 4294901760
    %v3484 = vsub.f32 %v3482, %v3483
    %v3485 = vand.u32 %v3484, 4294901760
    %3486 = vmatpush1.msra.mxu0 %v3485
    %3487 = vmatprep.subr.mxu0 0.0
    %v3488 = vand.u32 %v3346, 4294901760
    %v3489 = vsub.f32 %v3346, %v3488
    %v3490 = vand.u32 %v3489, 4294901760
    %v3491 = vsub.f32 %v3489, %v3490
    %v3492 = vand.u32 %v3491, 4294901760
    %3493 = vmatpush1.msra.mxu0 %v3492
    %3494 = vmatprep.subr.mxu0 0.0
    %v3495 = vand.u32 %v3347, 4294901760
    %v3496 = vsub.f32 %v3347, %v3495
    %v3497 = vand.u32 %v3496, 4294901760
    %v3498 = vsub.f32 %v3496, %v3497
    %v3499 = vand.u32 %v3498, 4294901760
    %3500 = vmatpush1.msra.mxu0 %v3499
    %3501 = vmatprep.subr.mxu0 0.0
    %v3502 = vand.u32 %v3348, 4294901760
    %v3503 = vsub.f32 %v3348, %v3502
    %v3504 = vand.u32 %v3503, 4294901760
    %v3505 = vsub.f32 %v3503, %v3504
    %v3506 = vand.u32 %v3505, 4294901760
    %3507 = vmatpush1.msra.mxu0 %v3506
    %3508 = vmatprep.subr.mxu0 0.0
    %v3509 = vand.u32 %v3349, 4294901760
    %v3510 = vsub.f32 %v3349, %v3509
    %v3511 = vand.u32 %v3510, 4294901760
    %v3512 = vsub.f32 %v3510, %v3511
    %v3513 = vand.u32 %v3512, 4294901760
    %3514 = vmatpush1.msra.mxu0 %v3513
    %3515 = vmatprep.subr.mxu0 0.0
    %v3516 = vand.u32 %v3350, 4294901760
    %v3517 = vsub.f32 %v3350, %v3516
    %v3518 = vand.u32 %v3517, 4294901760
    %v3519 = vsub.f32 %v3517, %v3518
    %v3520 = vand.u32 %v3519, 4294901760
    %3521 = vmatpush1.msra.mxu0 %v3520
    %3522 = vmatprep.subr.mxu0 0.0
    %v3523 = vand.u32 %v3351, 4294901760
    %v3524 = vsub.f32 %v3351, %v3523
    %v3525 = vand.u32 %v3524, 4294901760
    %v3526 = vsub.f32 %v3524, %v3525
    %v3527 = vand.u32 %v3526, 4294901760
    %3528 = vmatpush1.msra.mxu0 %v3527
    %3529 = vmatprep.subr.mxu0 0.0
    %v3530 = vand.u32 %v3352, 4294901760
    %v3531 = vsub.f32 %v3352, %v3530
    %v3532 = vand.u32 %v3531, 4294901760
    %v3533 = vsub.f32 %v3531, %v3532
    %v3534 = vand.u32 %v3533, 4294901760
    %3535 = vmatpush1.msra.mxu0 %v3534
    %3536 = vmatprep.subr.mxu0 0.0
    %v3537 = vand.u32 %v3353, 4294901760
    %v3538 = vsub.f32 %v3353, %v3537
    %v3539 = vand.u32 %v3538, 4294901760
    %v3540 = vsub.f32 %v3538, %v3539
    %v3541 = vand.u32 %v3540, 4294901760
    %3542 = vmatpush1.msra.mxu0 %v3541
    %3543 = vmatprep.subr.mxu0 0.0
    %v3544 = vand.u32 %v3354, 4294901760
    %v3545 = vsub.f32 %v3354, %v3544
    %v3546 = vand.u32 %v3545, 4294901760
    %v3547 = vsub.f32 %v3545, %v3546
    %v3548 = vand.u32 %v3547, 4294901760
    %3549 = vmatpush1.msra.mxu0 %v3548
    %3550 = vmatprep.subr.mxu0 0.0
    %v3551 = vand.u32 %v3355, 4294901760
    %v3552 = vsub.f32 %v3355, %v3551
    %v3553 = vand.u32 %v3552, 4294901760
    %v3554 = vsub.f32 %v3552, %v3553
    %v3555 = vand.u32 %v3554, 4294901760
    %3556 = vmatpush1.msra.mxu0 %v3555
    %3557 = vmatprep.subr.mxu0 0.0
    %v3558 = vand.u32 %v3356, 4294901760
    %v3559 = vsub.f32 %v3356, %v3558
    %v3560 = vand.u32 %v3559, 4294901760
    %v3561 = vsub.f32 %v3559, %v3560
    %v3562 = vand.u32 %v3561, 4294901760
    %3563 = vmatpush1.msra.mxu0 %v3562
    %3564 = vmatprep.subr.mxu0 0.0
    %v3565 = vand.u32 %v3357, 4294901760
    %v3566 = vsub.f32 %v3357, %v3565
    %v3567 = vand.u32 %v3566, 4294901760
    %v3568 = vsub.f32 %v3566, %v3567
    %v3569 = vand.u32 %v3568, 4294901760
    %3570 = vmatpush1.msra.mxu0 %v3569
    %3571 = vmatprep.subr.mxu0 0.0
    %3572 = vmatpush1.msra.mxu0 0.0
    %3573 = vmatprep.subr.mxu0 0.0
    %3574 = vmatpush1.msra.mxu0 0.0
    %3575 = vmatprep.subr.mxu0 0.0
    %3576 = vmatpush1.msra.mxu0 0.0
    %3577 = vmatprep.subr.mxu0 0.0
    %3578 = vmatpush1.msra.mxu0 0.0
    %3579 = vmatprep.subr.mxu0 0.0
    %3580 = vmatpush1.msra.mxu0 0.0
    %3581 = vmatprep.subr.mxu0 0.0
    %3582 = vmatpush1.msra.mxu0 0.0
    %3583 = vmatprep.subr.mxu0 0.0
    %3584 = vmatpush1.msra.mxu0 0.0
    %3585 = vmatprep.subr.mxu0 0.0
    %3586 = vmatpush1.msra.mxu0 0.0
    %3587 = vmatprep.subr.mxu0 0.0
    %3588 = vmatpush1.msra.mxu0 0.0
    %3589 = vmatprep.subr.mxu0 0.0
    %3590 = vmatpush1.msra.mxu0 0.0
    %3591 = vmatprep.subr.mxu0 0.0
    %3592 = vmatpush1.msra.mxu0 0.0
    %3593 = vmatprep.subr.mxu0 0.0
    %3594 = vmatpush1.msra.mxu0 0.0
    %3595 = vmatprep.subr.mxu0 0.0
    %3596 = vmatpush1.msra.mxu0 0.0
    %3597 = vmatprep.subr.mxu0 0.0
    %3598 = vmatpush1.msra.mxu0 0.0
    %3599 = vmatprep.subr.mxu0 0.0
    %3600 = vmatpush1.msra.mxu0 0.0
    %3601 = vmatprep.subr.mxu0 0.0
    %3602 = vmatpush1.msra.mxu0 0.0
    %3603 = vmatprep.mubr.f32.mxu0 0.0
    %v3604 = vand.u32 %v3339, 4294901760
    %3605 = vmatmul.mubr.f32.gmra.mrb[0].mxu0 %v3604
    %v3606 = vpop.f32.mrb[0].mxu0
    %v3607 = vadd.f32 %v3446, %v3606
    %v3608 = vpop.f32.mrb[0].mxu0
    %3609 = vmatprep.mubr.f32.mxu0 0.0
    %v3610 = vand.u32 %v3340, 4294901760
    %3611 = vmatmul.mubr.f32.gmra.mrb[0].mxu0 %v3610
    %v3612 = vpop.f32.mrb[0].mxu0
    %v3613 = vadd.f32 %v3456, %v3612
    %v3614 = vpop.f32.mrb[0].mxu0
    %3615 = vdwg.mxu0
    %3616 = vmatprep.subr.mxu0 0.0
    %v3617 = vand.u32 %v3342, 4294901760
    %v3618 = vsub.f32 %v3342, %v3617
    %3619 = vmatpush1.msra.mxu0 %v3618
    %3620 = vmatprep.subr.mxu0 0.0
    %v3621 = vand.u32 %v3343, 4294901760
    %v3622 = vsub.f32 %v3343, %v3621
    %3623 = vmatpush1.msra.mxu0 %v3622
    %3624 = vmatprep.subr.mxu0 0.0
    %v3625 = vand.u32 %v3344, 4294901760
    %v3626 = vsub.f32 %v3344, %v3625
    %3627 = vmatpush1.msra.mxu0 %v3626
    %3628 = vmatprep.subr.mxu0 0.0
    %v3629 = vand.u32 %v3345, 4294901760
    %v3630 = vsub.f32 %v3345, %v3629
    %3631 = vmatpush1.msra.mxu0 %v3630
    %3632 = vmatprep.subr.mxu0 0.0
    %v3633 = vand.u32 %v3346, 4294901760
    %v3634 = vsub.f32 %v3346, %v3633
    %3635 = vmatpush1.msra.mxu0 %v3634
    %3636 = vmatprep.subr.mxu0 0.0
    %v3637 = vand.u32 %v3347, 4294901760
    %v3638 = vsub.f32 %v3347, %v3637
    %3639 = vmatpush1.msra.mxu0 %v3638
    %3640 = vmatprep.subr.mxu0 0.0
    %v3641 = vand.u32 %v3348, 4294901760
    %v3642 = vsub.f32 %v3348, %v3641
    %3643 = vmatpush1.msra.mxu0 %v3642
    %3644 = vmatprep.subr.mxu0 0.0
    %v3645 = vand.u32 %v3349, 4294901760
    %v3646 = vsub.f32 %v3349, %v3645
    %3647 = vmatpush1.msra.mxu0 %v3646
    %3648 = vmatprep.subr.mxu0 0.0
    %v3649 = vand.u32 %v3350, 4294901760
    %v3650 = vsub.f32 %v3350, %v3649
    %3651 = vmatpush1.msra.mxu0 %v3650
    %3652 = vmatprep.subr.mxu0 0.0
    %v3653 = vand.u32 %v3351, 4294901760
    %v3654 = vsub.f32 %v3351, %v3653
    %3655 = vmatpush1.msra.mxu0 %v3654
    %3656 = vmatprep.subr.mxu0 0.0
    %v3657 = vand.u32 %v3352, 4294901760
    %v3658 = vsub.f32 %v3352, %v3657
    %3659 = vmatpush1.msra.mxu0 %v3658
    %3660 = vmatprep.subr.mxu0 0.0
    %v3661 = vand.u32 %v3353, 4294901760
    %v3662 = vsub.f32 %v3353, %v3661
    %3663 = vmatpush1.msra.mxu0 %v3662
    %3664 = vmatprep.subr.mxu0 0.0
    %v3665 = vand.u32 %v3354, 4294901760
    %v3666 = vsub.f32 %v3354, %v3665
    %3667 = vmatpush1.msra.mxu0 %v3666
    %3668 = vmatprep.subr.mxu0 0.0
    %v3669 = vand.u32 %v3355, 4294901760
    %v3670 = vsub.f32 %v3355, %v3669
    %3671 = vmatpush1.msra.mxu0 %v3670
    %3672 = vmatprep.subr.mxu0 0.0
    %v3673 = vand.u32 %v3356, 4294901760
    %v3674 = vsub.f32 %v3356, %v3673
    %3675 = vmatpush1.msra.mxu0 %v3674
    %3676 = vmatprep.subr.mxu0 0.0
    %v3677 = vand.u32 %v3357, 4294901760
    %v3678 = vsub.f32 %v3357, %v3677
    %3679 = vmatpush1.msra.mxu0 %v3678
    %3680 = vmatprep.subr.mxu0 0.0
    %3681 = vmatpush1.msra.mxu0 0.0
    %3682 = vmatprep.subr.mxu0 0.0
    %3683 = vmatpush1.msra.mxu0 0.0
    %3684 = vmatprep.subr.mxu0 0.0
    %3685 = vmatpush1.msra.mxu0 0.0
    %3686 = vmatprep.subr.mxu0 0.0
    %3687 = vmatpush1.msra.mxu0 0.0
    %3688 = vmatprep.subr.mxu0 0.0
    %3689 = vmatpush1.msra.mxu0 0.0
    %3690 = vmatprep.subr.mxu0 0.0
    %3691 = vmatpush1.msra.mxu0 0.0
    %3692 = vmatprep.subr.mxu0 0.0
    %3693 = vmatpush1.msra.mxu0 0.0
    %3694 = vmatprep.subr.mxu0 0.0
    %3695 = vmatpush1.msra.mxu0 0.0
    %3696 = vmatprep.subr.mxu0 0.0
    %3697 = vmatpush1.msra.mxu0 0.0
    %3698 = vmatprep.subr.mxu0 0.0
    %3699 = vmatpush1.msra.mxu0 0.0
    %3700 = vmatprep.subr.mxu0 0.0
    %3701 = vmatpush1.msra.mxu0 0.0
    %3702 = vmatprep.subr.mxu0 0.0
    %3703 = vmatpush1.msra.mxu0 0.0
    %3704 = vmatprep.subr.mxu0 0.0
    %3705 = vmatpush1.msra.mxu0 0.0
    %3706 = vmatprep.subr.mxu0 0.0
    %3707 = vmatpush1.msra.mxu0 0.0
    %3708 = vmatprep.subr.mxu0 0.0
    %3709 = vmatpush1.msra.mxu0 0.0
    %3710 = vmatprep.subr.mxu0 0.0
    %3711 = vmatpush1.msra.mxu0 0.0
    %3712 = vmatprep.mubr.f32.mxu0 0.0
    %v3713 = vand.u32 %v3339, 4294901760
    %v3714 = vsub.f32 %v3339, %v3713
    %3715 = vmatmul.mubr.f32.gmra.mrb[0].mxu0 %v3714
    %v3716 = vpop.f32.mrb[0].mxu0
    %v3717 = vadd.f32 %v3607, %v3716
    %v3718 = vpop.f32.mrb[0].mxu0
    %3719 = vmatprep.mubr.f32.mxu0 0.0
    %v3720 = vand.u32 %v3340, 4294901760
    %v3721 = vsub.f32 %v3340, %v3720
    %3722 = vmatmul.mubr.f32.gmra.mrb[0].mxu0 %v3721
    %v3723 = vpop.f32.mrb[0].mxu0
    %v3724 = vadd.f32 %v3613, %v3723
    %v3725 = vpop.f32.mrb[0].mxu0
    %3726 = vdwg.mxu0
    %3727 = vmatprep.subr.mxu0 0.0
    %v3728 = vand.u32 %v3342, 4294901760
    %3729 = vmatpush1.msra.mxu0 %v3728
    %3730 = vmatprep.subr.mxu0 0.0
    %v3731 = vand.u32 %v3343, 4294901760
    %3732 = vmatpush1.msra.mxu0 %v3731
    %3733 = vmatprep.subr.mxu0 0.0
    %v3734 = vand.u32 %v3344, 4294901760
    %3735 = vmatpush1.msra.mxu0 %v3734
    %3736 = vmatprep.subr.mxu0 0.0
    %v3737 = vand.u32 %v3345, 4294901760
    %3738 = vmatpush1.msra.mxu0 %v3737
    %3739 = vmatprep.subr.mxu0 0.0
    %v3740 = vand.u32 %v3346, 4294901760
    %3741 = vmatpush1.msra.mxu0 %v3740
    %3742 = vmatprep.subr.mxu0 0.0
    %v3743 = vand.u32 %v3347, 4294901760
    %3744 = vmatpush1.msra.mxu0 %v3743
    %3745 = vmatprep.subr.mxu0 0.0
    %v3746 = vand.u32 %v3348, 4294901760
    %3747 = vmatpush1.msra.mxu0 %v3746
    %3748 = vmatprep.subr.mxu0 0.0
    %v3749 = vand.u32 %v3349, 4294901760
    %3750 = vmatpush1.msra.mxu0 %v3749
    %3751 = vmatprep.subr.mxu0 0.0
    %v3752 = vand.u32 %v3350, 4294901760
    %3753 = vmatpush1.msra.mxu0 %v3752
    %3754 = vmatprep.subr.mxu0 0.0
    %v3755 = vand.u32 %v3351, 4294901760
    %3756 = vmatpush1.msra.mxu0 %v3755
    %3757 = vmatprep.subr.mxu0 0.0
    %v3758 = vand.u32 %v3352, 4294901760
    %3759 = vmatpush1.msra.mxu0 %v3758
    %3760 = vmatprep.subr.mxu0 0.0
    %v3761 = vand.u32 %v3353, 4294901760
    %3762 = vmatpush1.msra.mxu0 %v3761
    %3763 = vmatprep.subr.mxu0 0.0
    %v3764 = vand.u32 %v3354, 4294901760
    %3765 = vmatpush1.msra.mxu0 %v3764
    %3766 = vmatprep.subr.mxu0 0.0
    %v3767 = vand.u32 %v3355, 4294901760
    %3768 = vmatpush1.msra.mxu0 %v3767
    %3769 = vmatprep.subr.mxu0 0.0
    %v3770 = vand.u32 %v3356, 4294901760
    %3771 = vmatpush1.msra.mxu0 %v3770
    %3772 = vmatprep.subr.mxu0 0.0
    %v3773 = vand.u32 %v3357, 4294901760
    %3774 = vmatpush1.msra.mxu0 %v3773
    %3775 = vmatprep.subr.mxu0 0.0
    %3776 = vmatpush1.msra.mxu0 0.0
    %3777 = vmatprep.subr.mxu0 0.0
    %3778 = vmatpush1.msra.mxu0 0.0
    %3779 = vmatprep.subr.mxu0 0.0
    %3780 = vmatpush1.msra.mxu0 0.0
    %3781 = vmatprep.subr.mxu0 0.0
    %3782 = vmatpush1.msra.mxu0 0.0
    %3783 = vmatprep.subr.mxu0 0.0
    %3784 = vmatpush1.msra.mxu0 0.0
    %3785 = vmatprep.subr.mxu0 0.0
    %3786 = vmatpush1.msra.mxu0 0.0
    %3787 = vmatprep.subr.mxu0 0.0
    %3788 = vmatpush1.msra.mxu0 0.0
    %3789 = vmatprep.subr.mxu0 0.0
    %3790 = vmatpush1.msra.mxu0 0.0
    %3791 = vmatprep.subr.mxu0 0.0
    %3792 = vmatpush1.msra.mxu0 0.0
    %3793 = vmatprep.subr.mxu0 0.0
    %3794 = vmatpush1.msra.mxu0 0.0
    %3795 = vmatprep.subr.mxu0 0.0
    %3796 = vmatpush1.msra.mxu0 0.0
    %3797 = vmatprep.subr.mxu0 0.0
    %3798 = vmatpush1.msra.mxu0 0.0
    %3799 = vmatprep.subr.mxu0 0.0
    %3800 = vmatpush1.msra.mxu0 0.0
    %3801 = vmatprep.subr.mxu0 0.0
    %3802 = vmatpush1.msra.mxu0 0.0
    %3803 = vmatprep.subr.mxu0 0.0
    %3804 = vmatpush1.msra.mxu0 0.0
    %3805 = vmatprep.subr.mxu0 0.0
    %3806 = vmatpush1.msra.mxu0 0.0
    %3807 = vmatprep.mubr.f32.mxu0 0.0
    %v3808 = vand.u32 %v3339, 4294901760
    %v3809 = vsub.f32 %v3339, %v3808
    %v3810 = vand.u32 %v3809, 4294901760
    %3811 = vmatmul.mubr.f32.gmra.mrb[0].mxu0 %v3810
    %v3812 = vpop.f32.mrb[0].mxu0
    %v3813 = vadd.f32 %v3717, %v3812
    %v3814 = vpop.f32.mrb[0].mxu0
    %3815 = vmatprep.mubr.f32.mxu0 0.0
    %v3816 = vand.u32 %v3340, 4294901760
    %v3817 = vsub.f32 %v3340, %v3816
    %v3818 = vand.u32 %v3817, 4294901760
    %3819 = vmatmul.mubr.f32.gmra.mrb[0].mxu0 %v3818
    %v3820 = vpop.f32.mrb[0].mxu0
    %v3821 = vadd.f32 %v3724, %v3820
    %v3822 = vpop.f32.mrb[0].mxu0
    %3823 = vdwg.mxu0
    %3824 = vmatprep.subr.mxu0 0.0
    %v3825 = vand.u32 %v3342, 4294901760
    %v3826 = vsub.f32 %v3342, %v3825
    %v3827 = vand.u32 %v3826, 4294901760
    %3828 = vmatpush1.msra.mxu0 %v3827
    %3829 = vmatprep.subr.mxu0 0.0
    %v3830 = vand.u32 %v3343, 4294901760
    %v3831 = vsub.f32 %v3343, %v3830
    %v3832 = vand.u32 %v3831, 4294901760
    %3833 = vmatpush1.msra.mxu0 %v3832
    %3834 = vmatprep.subr.mxu0 0.0
    %v3835 = vand.u32 %v3344, 4294901760
    %v3836 = vsub.f32 %v3344, %v3835
    %v3837 = vand.u32 %v3836, 4294901760
    %3838 = vmatpush1.msra.mxu0 %v3837
    %3839 = vmatprep.subr.mxu0 0.0
    %v3840 = vand.u32 %v3345, 4294901760
    %v3841 = vsub.f32 %v3345, %v3840
    %v3842 = vand.u32 %v3841, 4294901760
    %3843 = vmatpush1.msra.mxu0 %v3842
    %3844 = vmatprep.subr.mxu0 0.0
    %v3845 = vand.u32 %v3346, 4294901760
    %v3846 = vsub.f32 %v3346, %v3845
    %v3847 = vand.u32 %v3846, 4294901760
    %3848 = vmatpush1.msra.mxu0 %v3847
    %3849 = vmatprep.subr.mxu0 0.0
    %v3850 = vand.u32 %v3347, 4294901760
    %v3851 = vsub.f32 %v3347, %v3850
    %v3852 = vand.u32 %v3851, 4294901760
    %3853 = vmatpush1.msra.mxu0 %v3852
    %3854 = vmatprep.subr.mxu0 0.0
    %v3855 = vand.u32 %v3348, 4294901760
    %v3856 = vsub.f32 %v3348, %v3855
    %v3857 = vand.u32 %v3856, 4294901760
    %3858 = vmatpush1.msra.mxu0 %v3857
    %3859 = vmatprep.subr.mxu0 0.0
    %v3860 = vand.u32 %v3349, 4294901760
    %v3861 = vsub.f32 %v3349, %v3860
    %v3862 = vand.u32 %v3861, 4294901760
    %3863 = vmatpush1.msra.mxu0 %v3862
    %3864 = vmatprep.subr.mxu0 0.0
    %v3865 = vand.u32 %v3350, 4294901760
    %v3866 = vsub.f32 %v3350, %v3865
    %v3867 = vand.u32 %v3866, 4294901760
    %3868 = vmatpush1.msra.mxu0 %v3867
    %3869 = vmatprep.subr.mxu0 0.0
    %v3870 = vand.u32 %v3351, 4294901760
    %v3871 = vsub.f32 %v3351, %v3870
    %v3872 = vand.u32 %v3871, 4294901760
    %3873 = vmatpush1.msra.mxu0 %v3872
    %3874 = vmatprep.subr.mxu0 0.0
    %v3875 = vand.u32 %v3352, 4294901760
    %v3876 = vsub.f32 %v3352, %v3875
    %v3877 = vand.u32 %v3876, 4294901760
    %3878 = vmatpush1.msra.mxu0 %v3877
    %3879 = vmatprep.subr.mxu0 0.0
    %v3880 = vand.u32 %v3353, 4294901760
    %v3881 = vsub.f32 %v3353, %v3880
    %v3882 = vand.u32 %v3881, 4294901760
    %3883 = vmatpush1.msra.mxu0 %v3882
    %3884 = vmatprep.subr.mxu0 0.0
    %v3885 = vand.u32 %v3354, 4294901760
    %v3886 = vsub.f32 %v3354, %v3885
    %v3887 = vand.u32 %v3886, 4294901760
    %3888 = vmatpush1.msra.mxu0 %v3887
    %3889 = vmatprep.subr.mxu0 0.0
    %v3890 = vand.u32 %v3355, 4294901760
    %v3891 = vsub.f32 %v3355, %v3890
    %v3892 = vand.u32 %v3891, 4294901760
    %3893 = vmatpush1.msra.mxu0 %v3892
    %3894 = vmatprep.subr.mxu0 0.0
    %v3895 = vand.u32 %v3356, 4294901760
    %v3896 = vsub.f32 %v3356, %v3895
    %v3897 = vand.u32 %v3896, 4294901760
    %3898 = vmatpush1.msra.mxu0 %v3897
    %3899 = vmatprep.subr.mxu0 0.0
    %v3900 = vand.u32 %v3357, 4294901760
    %v3901 = vsub.f32 %v3357, %v3900
    %v3902 = vand.u32 %v3901, 4294901760
    %3903 = vmatpush1.msra.mxu0 %v3902
    %3904 = vmatprep.subr.mxu0 0.0
    %3905 = vmatpush1.msra.mxu0 0.0
    %3906 = vmatprep.subr.mxu0 0.0
    %3907 = vmatpush1.msra.mxu0 0.0
    %3908 = vmatprep.subr.mxu0 0.0
    %3909 = vmatpush1.msra.mxu0 0.0
    %3910 = vmatprep.subr.mxu0 0.0
    %3911 = vmatpush1.msra.mxu0 0.0
    %3912 = vmatprep.subr.mxu0 0.0
    %3913 = vmatpush1.msra.mxu0 0.0
    %3914 = vmatprep.subr.mxu0 0.0
    %3915 = vmatpush1.msra.mxu0 0.0
    %3916 = vmatprep.subr.mxu0 0.0
    %3917 = vmatpush1.msra.mxu0 0.0
    %3918 = vmatprep.subr.mxu0 0.0
    %3919 = vmatpush1.msra.mxu0 0.0
    %3920 = vmatprep.subr.mxu0 0.0
    %3921 = vmatpush1.msra.mxu0 0.0
    %3922 = vmatprep.subr.mxu0 0.0
    %3923 = vmatpush1.msra.mxu0 0.0
    %3924 = vmatprep.subr.mxu0 0.0
    %3925 = vmatpush1.msra.mxu0 0.0
    %3926 = vmatprep.subr.mxu0 0.0
    %3927 = vmatpush1.msra.mxu0 0.0
    %3928 = vmatprep.subr.mxu0 0.0
    %3929 = vmatpush1.msra.mxu0 0.0
    %3930 = vmatprep.subr.mxu0 0.0
    %3931 = vmatpush1.msra.mxu0 0.0
    %3932 = vmatprep.subr.mxu0 0.0
    %3933 = vmatpush1.msra.mxu0 0.0
    %3934 = vmatprep.subr.mxu0 0.0
    %3935 = vmatpush1.msra.mxu0 0.0
    %3936 = vmatprep.mubr.f32.mxu0 0.0
    %v3937 = vand.u32 %v3339, 4294901760
    %3938 = vmatmul.mubr.f32.gmra.mrb[0].mxu0 %v3937
    %v3939 = vpop.f32.mrb[0].mxu0
    %v3940 = vadd.f32 %v3813, %v3939
    %v3941 = vpop.f32.mrb[0].mxu0
    %3942 = vmatprep.mubr.f32.mxu0 0.0
    %v3943 = vand.u32 %v3340, 4294901760
    %3944 = vmatmul.mubr.f32.gmra.mrb[0].mxu0 %v3943
    %v3945 = vpop.f32.mrb[0].mxu0
    %v3946 = vadd.f32 %v3821, %v3945
    %v3947 = vpop.f32.mrb[0].mxu0
    %3948 = vdwg.mxu0
    %3949 = vmatprep.subr.mxu0 0.0
    %v3950 = vand.u32 %v3342, 4294901760
    %3951 = vmatpush1.msra.mxu0 %v3950
    %3952 = vmatprep.subr.mxu0 0.0
    %v3953 = vand.u32 %v3343, 4294901760
    %3954 = vmatpush1.msra.mxu0 %v3953
    %3955 = vmatprep.subr.mxu0 0.0
    %v3956 = vand.u32 %v3344, 4294901760
    %3957 = vmatpush1.msra.mxu0 %v3956
    %3958 = vmatprep.subr.mxu0 0.0
    %v3959 = vand.u32 %v3345, 4294901760
    %3960 = vmatpush1.msra.mxu0 %v3959
    %3961 = vmatprep.subr.mxu0 0.0
    %v3962 = vand.u32 %v3346, 4294901760
    %3963 = vmatpush1.msra.mxu0 %v3962
    %3964 = vmatprep.subr.mxu0 0.0
    %v3965 = vand.u32 %v3347, 4294901760
    %3966 = vmatpush1.msra.mxu0 %v3965
    %3967 = vmatprep.subr.mxu0 0.0
    %v3968 = vand.u32 %v3348, 4294901760
    %3969 = vmatpush1.msra.mxu0 %v3968
    %3970 = vmatprep.subr.mxu0 0.0
    %v3971 = vand.u32 %v3349, 4294901760
    %3972 = vmatpush1.msra.mxu0 %v3971
    %3973 = vmatprep.subr.mxu0 0.0
    %v3974 = vand.u32 %v3350, 4294901760
    %3975 = vmatpush1.msra.mxu0 %v3974
    %3976 = vmatprep.subr.mxu0 0.0
    %v3977 = vand.u32 %v3351, 4294901760
    %3978 = vmatpush1.msra.mxu0 %v3977
    %3979 = vmatprep.subr.mxu0 0.0
    %v3980 = vand.u32 %v3352, 4294901760
    %3981 = vmatpush1.msra.mxu0 %v3980
    %3982 = vmatprep.subr.mxu0 0.0
    %v3983 = vand.u32 %v3353, 4294901760
    %3984 = vmatpush1.msra.mxu0 %v3983
    %3985 = vmatprep.subr.mxu0 0.0
    %v3986 = vand.u32 %v3354, 4294901760
    %3987 = vmatpush1.msra.mxu0 %v3986
    %3988 = vmatprep.subr.mxu0 0.0
    %v3989 = vand.u32 %v3355, 4294901760
    %3990 = vmatpush1.msra.mxu0 %v3989
    %3991 = vmatprep.subr.mxu0 0.0
    %v3992 = vand.u32 %v3356, 4294901760
    %3993 = vmatpush1.msra.mxu0 %v3992
    %3994 = vmatprep.subr.mxu0 0.0
    %v3995 = vand.u32 %v3357, 4294901760
    %3996 = vmatpush1.msra.mxu0 %v3995
    %3997 = vmatprep.subr.mxu0 0.0
    %3998 = vmatpush1.msra.mxu0 0.0
    %3999 = vmatprep.subr.mxu0 0.0
    %4000 = vmatpush1.msra.mxu0 0.0
    %4001 = vmatprep.subr.mxu0 0.0
    %4002 = vmatpush1.msra.mxu0 0.0
    %4003 = vmatprep.subr.mxu0 0.0
    %4004 = vmatpush1.msra.mxu0 0.0
    %4005 = vmatprep.subr.mxu0 0.0
    %4006 = vmatpush1.msra.mxu0 0.0
    %4007 = vmatprep.subr.mxu0 0.0
    %4008 = vmatpush1.msra.mxu0 0.0
    %4009 = vmatprep.subr.mxu0 0.0
    %4010 = vmatpush1.msra.mxu0 0.0
    %4011 = vmatprep.subr.mxu0 0.0
    %4012 = vmatpush1.msra.mxu0 0.0
    %4013 = vmatprep.subr.mxu0 0.0
    %4014 = vmatpush1.msra.mxu0 0.0
    %4015 = vmatprep.subr.mxu0 0.0
    %4016 = vmatpush1.msra.mxu0 0.0
    %4017 = vmatprep.subr.mxu0 0.0
    %4018 = vmatpush1.msra.mxu0 0.0
    %4019 = vmatprep.subr.mxu0 0.0
    %4020 = vmatpush1.msra.mxu0 0.0
    %4021 = vmatprep.subr.mxu0 0.0
    %4022 = vmatpush1.msra.mxu0 0.0
    %4023 = vmatprep.subr.mxu0 0.0
    %4024 = vmatpush1.msra.mxu0 0.0
    %4025 = vmatprep.subr.mxu0 0.0
    %4026 = vmatpush1.msra.mxu0 0.0
    %4027 = vmatprep.subr.mxu0 0.0
    %4028 = vmatpush1.msra.mxu0 0.0
    %4029 = vmatprep.mubr.f32.mxu0 0.0
    %v4030 = vand.u32 %v3339, 4294901760
    %4031 = vmatmul.mubr.f32.gmra.mrb[0].mxu0 %v4030
    %v4032 = vpop.f32.mrb[0].mxu0
    %v4033 = vadd.f32 %v3940, %v4032
    %v4034 = vpop.f32.mrb[0].mxu0
    %4035 = vmatprep.mubr.f32.mxu0 0.0
    %v4036 = vand.u32 %v3340, 4294901760
    %4037 = vmatmul.mubr.f32.gmra.mrb[0].mxu0 %v4036
    %v4038 = vpop.f32.mrb[0].mxu0
    %v4039 = vadd.f32 %v3946, %v4038
    %v4040 = vpop.f32.mrb[0].mxu0
    %4041 = vdwg.mxu0
    %v4042 = vadd.f32 %v1921, %v4033
    %v4043 = vadd.f32 %v1928, %v4039
    %v4044 = vmul.f32 %v56, 0.3
    %v4045 = vmul.f32 %v57, 0.3
    %v4046 = vadd.f32 %v4042, %v4044
    %v4047 = vadd.f32 %v4043, %v4045
    %4048 = vst [vmem:[#allocation8] sm:$0xff] %v4046
    %4049 = vst [vmem:[#allocation8 + $0x10] sm:$0xff] %v4047
    %4050 = vst [vmem:[#allocation8 + $0x8] sm:$0xff] %v4042
    %4051 = vst [vmem:[#allocation8 + $0x18] sm:$0xff] %v4043
    // Predicated region
    $region26: #{tpu_custom_call.1} parent=1 // pred_check
      _
    $region27: #{tpu_custom_call.1} parent=1 // pred_check_branch
      %4053 = sbr.rel (0) target = $region29
    $region28: #{tpu_custom_call.1} parent=1 // pred_region
      %s4055 = ssub.s32 512, 512
      %4056 = vsyncadd [#allocation4], %s4055
      %s4057 = sshll.u32 [#allocation8], 4
      %s4058 = int_to_ptr.vmem [resolvable:$true] %s4057
      %4063 = dma.vmem_to_hbm [thread:$0]  %s4058, 512, %s3, [#allocation4], 256, 256, 16
    $region29: #{tpu_custom_call.1} parent=1 // pred_fallthru
      _
    // Predicated region
    $region30: #{tpu_custom_call.1} parent=1 // pred_check
      _
    $region31: #{tpu_custom_call.1} parent=1 // pred_check_branch
      %4065 = sbr.rel (0) target = $region33
    $region32: #{tpu_custom_call.1} parent=1 // pred_region
      %4066 = dma.done [#allocation4], 512
    $region33: #{tpu_custom_call.1} parent=1 // pred_fallthru
      _
    %4067 = vsyncpa [#allocation3], 1
    %4068 = vsyncpa [#allocation6], 1
    %4069 = vsyncpa [#allocation4], 1

</llo_original>
